<compile_context>
chip_gen: v7x
topology: tpu7x:2x2x1
jax: 0.10.0
libtpu: 0.0.40
codegen_flags: <defaults>
</compile_context>

<pallas_src>
import jax
import jax.numpy as jnp
from jax.experimental import pallas as pl
from jax.experimental.pallas import tpu as pltpu

GRID_SIZE = 5
SPLINE_ORDER = 3
NUM_COEF = GRID_SIZE + SPLINE_ORDER          # 8 B-spline basis fns per input feature
NUM_BLOCKS = NUM_COEF + 1                    # + the SiLU base path
GRID_MIN, GRID_MAX = -1.0, 1.0
H = (GRID_MAX - GRID_MIN) / GRID_SIZE        # uniform knot spacing (0.4)
# 12 knots, compile-time Python floats (become vector immediates in the kernel).
KNOTS = tuple(GRID_MIN + (j - SPLINE_ORDER) * H
              for j in range(GRID_SIZE + 2 * SPLINE_ORDER + 1))


# --------------------------------------------------------------------------
# In-kernel KANLinear math (batch-on-lanes layout: tensors are (F, TB))
# --------------------------------------------------------------------------
def _bspline_bases(x):
    """Optimized Cox-de-Boor with constant uniform knots.

    Degree-0 bases come from monotone compares (c_j - c_{j+1}); each recursion
    term is a_j*b_j + (1-a_{j+1})*b_{j+1} with a_j = (x - t_j)/(k*H) computed
    once per knot (valid because t_{j+k+1} - t_{j+1} = k*H on a uniform grid).
    """
    c = [(x >= k).astype(jnp.float32) for k in KNOTS]           # 12 compares
    bases = [c[j] - c[j + 1] for j in range(len(c) - 1)]        # 11 degree-0 bases
    for k in range(1, SPLINE_ORDER + 1):
        inv = 1.0 / (k * H)                                     # constant reciprocal
        a = [(x - KNOTS[j]) * inv for j in range(len(bases))]
        bases = [a[j] * bases[j] + (1.0 - a[j + 1]) * bases[j + 1]
                 for j in range(len(bases) - 1)]
    return bases                                                # NUM_COEF tensors (F, TB)


def _kan_layer(x, w_ref, slab_ref):
    """One KANLinear layer in feature-major layout.

    x: (IN, TB); w_ref: (OUT, NUM_BLOCKS*IN) packed [base | spline_0..7] along K;
    slab_ref: VMEM scratch (MAX_K, TB).  Returns (OUT, TB).
    """
    f = x.shape[0]
    # Store each finished block straight to VMEM scratch (bounds live vregs).
    slab_ref[0:f, :] = x * jax.nn.sigmoid(x)                    # SiLU base path
    bases = _bspline_bases(x)
    for c in range(NUM_COEF):
        slab_ref[(c + 1) * f:(c + 2) * f, :] = bases[c]
    # Single MXU dot with K = 9*IN (internal accumulation, no per-basis pops).
    return jnp.dot(w_ref[...], slab_ref[0:NUM_BLOCKS * f, :],
                   preferred_element_type=jnp.float32)


# --------------------------------------------------------------------------
# Fused kernel: whole actor-critic forward, everything stays in VMEM / vregs
# --------------------------------------------------------------------------
def _kan_ac_kernel(obs_ref, w1_ref, w2_ref, w3_ref, w4_ref, out_ref, slab_ref):
    x = obs_ref[...]                            # (input_dims, TB), batch on lanes
    x = _kan_layer(x, w1_ref, slab_ref)         # (16, TB)   fc1 layer 0
    x = _kan_layer(x, w2_ref, slab_ref)         # (32, TB)   fc1 layer 1
    x = _kan_layer(x, w3_ref, slab_ref)         # (32, TB) = [pi_hidden | v_hidden]
    out_ref[...] = _kan_layer(x, w4_ref, slab_ref)   # (n_actions + 1, TB) = [pi | v]


def kan_actor_critic_forward(packed_weights, observation, *, batch_tile=256):
    """Returns (pi_logits (B, n_actions), v (B, 1))."""
    w1, w2, w3, w4 = packed_weights
    n_out = w4.shape[0]                          # n_actions + 1
    n_actions = n_out - 1
    in_dims = w1.shape[1] // NUM_BLOCKS
    b = observation.shape[0]

    # Pad batch (the lane dim after transpose) to a multiple of 128 only.
    bp = max(128, ((b + 127) // 128) * 128)
    # Tile chosen for vreg pressure; cap at bp//2 when bp >= 256 so the
    # "parallel" grid has >= 2 steps (v7x second TensorCore).
    tb = min(batch_tile, bp)
    if bp >= 256:
        tb = min(tb, bp // 2)
    tb = max(128, (tb // 128) * 128)
    while bp % tb:
        tb -= 128

    obs = observation.astype(jnp.float32)
    if bp != b:
        obs = jnp.pad(obs, ((0, bp - b), (0, 0)))
    obs_t = obs.T                                # (in_dims, bp): batch on lanes

    max_k = max(w.shape[1] for w in packed_weights)          # NUM_BLOCKS * max(IN)
    kn_sum = sum(w.shape[0] * w.shape[1] for w in packed_weights)
    feat_sum = sum(w.shape[1] // NUM_BLOCKS for w in packed_weights)
    cost = pl.CostEstimate(
        flops=2 * bp * kn_sum + 120 * bp * feat_sum,          # matmuls + basis math
        transcendentals=bp * feat_sum,                        # one sigmoid per element
        bytes_accessed=4 * (obs_t.size + bp * n_out
                            + sum(w.size for w in packed_weights)),
    )

    out = pl.pallas_call(
        _kan_ac_kernel,
        out_shape=jax.ShapeDtypeStruct((n_out, bp), jnp.float32),
        grid=(bp // tb,),
        in_specs=[
            pl.BlockSpec((in_dims, tb), lambda i: (0, i)),
            pl.BlockSpec(w1.shape, lambda i: (0, 0)),         # full-array, resident
            pl.BlockSpec(w2.shape, lambda i: (0, 0)),
            pl.BlockSpec(w3.shape, lambda i: (0, 0)),
            pl.BlockSpec(w4.shape, lambda i: (0, 0)),
        ],
        out_specs=pl.BlockSpec((n_out, tb), lambda i: (0, i)),
        scratch_shapes=[pltpu.VMEM((max_k, tb), jnp.float32)],
        compiler_params=pltpu.CompilerParams(dimension_semantics=("parallel",)),
        cost_estimate=cost,
    )(obs_t, w1, w2, w3, w4)

    out = out[:, :b].T                           # (b, n_actions + 1)
    return out[:, :n_actions], out[:, n_actions:]


# --------------------------------------------------------------------------
# Parameter construction (deterministic, synthetic — shapes match efficient-kan)
# --------------------------------------------------------------------------
def _init_kan_linear(key, in_features, out_features):
    """One KANLinear as per-block weights (NUM_BLOCKS, IN, OUT): [base, spline_0..7]."""
    k_base, k_spline, k_scaler = jax.random.split(key, 3)
    scale = 1.0 / float(in_features) ** 0.5
    base_w = jax.random.uniform(k_base, (in_features, out_features),
                                minval=-scale, maxval=scale, dtype=jnp.float32)
    spline_w = jax.random.uniform(k_spline, (out_features, in_features, NUM_COEF),
                                  minval=-0.1 * scale, maxval=0.1 * scale,
                                  dtype=jnp.float32)
    spline_scaler = jax.random.uniform(k_scaler, (out_features, in_features),
                                       minval=-scale, maxval=scale, dtype=jnp.float32)
    scaled = spline_w * spline_scaler[..., None]            # (OUT, IN, COEF)
    spline_blocks = jnp.transpose(scaled, (2, 1, 0))        # (COEF, IN, OUT)
    return jnp.concatenate([base_w[None], spline_blocks], axis=0)   # (9, IN, OUT)


def _pack(wb):
    """(NUM_BLOCKS, IN, OUT) -> (OUT, NUM_BLOCKS*IN), matching the kernel slab rows
    (row g*IN + f of the slab is block g evaluated at input feature f)."""
    nb, fin, fout = wb.shape
    return jnp.transpose(wb, (2, 0, 1)).reshape(fout, nb * fin)


def init_network(key, input_dims=4, n_actions=2):
    ks = jax.random.split(key, 6)
    layers = {
        "fc1_0": _init_kan_linear(ks[0], input_dims, 16),
        "fc1_1": _init_kan_linear(ks[1], 16, 32),
        "pi_0":  _init_kan_linear(ks[2], 32, 16),
        "pi_1":  _init_kan_linear(ks[3], 16, n_actions),
        "v_0":   _init_kan_linear(ks[4], 32, 16),
        "v_1":   _init_kan_linear(ks[5], 16, 1),
    }
    # Head fusion: pi_0 / v_0 share the same input -> concat on OUT;
    # pi_1 / v_1 act on disjoint halves of the packed hidden -> block weight.
    w3 = jnp.concatenate([layers["pi_0"], layers["v_0"]], axis=2)          # (9,32,32)
    top = jnp.concatenate(
        [layers["pi_1"], jnp.zeros((NUM_BLOCKS, 16, 1), jnp.float32)], axis=2)
    bot = jnp.concatenate(
        [jnp.zeros((NUM_BLOCKS, 16, n_actions), jnp.float32), layers["v_1"]], axis=2)
    w4 = jnp.concatenate([top, bot], axis=1)                               # (9,32,nA+1)
    packed = tuple(_pack(w) for w in (layers["fc1_0"], layers["fc1_1"], w3, w4))
    return packed, layers


# --------------------------------------------------------------------------
# Pure-JAX reference (unfused, batch-major, classic Cox-de-Boor) for checking
# --------------------------------------------------------------------------
def _bspline_bases_ref(x):
    bases = [((x >= KNOTS[j]) & (x < KNOTS[j + 1])).astype(jnp.float32)
             for j in range(len(KNOTS) - 1)]
    for k in range(1, SPLINE_ORDER + 1):
        bases = [(x - KNOTS[j]) / (KNOTS[j + k] - KNOTS[j]) * bases[j]
                 + (KNOTS[j + k + 1] - x) / (KNOTS[j + k + 1] - KNOTS[j + 1]) * bases[j + 1]
                 for j in range(len(bases) - 1)]
    return bases


def _kan_linear_ref(x, wb):
    blocks = [x * jax.nn.sigmoid(x)] + _bspline_bases_ref(x)
    out = jnp.zeros((x.shape[0], wb.shape[2]), jnp.float32)
    for g in range(NUM_BLOCKS):
        out = out + jnp.dot(blocks[g], wb[g])
    return out


def reference_forward(layers, observation):
    x = observation.astype(jnp.float32)
    x = _kan_linear_ref(x, layers["fc1_0"])
    x = _kan_linear_ref(x, layers["fc1_1"])
    pi = _kan_linear_ref(_kan_linear_ref(x, layers["pi_0"]), layers["pi_1"])
    v = _kan_linear_ref(_kan_linear_ref(x, layers["v_0"]), layers["v_1"])
    return pi, v


if __name__ == "__main__":
    key = jax.random.PRNGKey(0)
    k_params, k_obs = jax.random.split(key)

    input_dims, n_actions, batch = 4, 2, 8
    packed, layers = init_network(k_params, input_dims=input_dims, n_actions=n_actions)
    observation = jax.random.normal(k_obs, (batch, input_dims), dtype=jnp.float32)

    fwd = jax.jit(kan_actor_critic_forward)
    pi, v = fwd(packed, observation)
    jax.block_until_ready((pi, v))

    assert pi.shape == (batch, n_actions), pi.shape
    assert v.shape == (batch, 1), v.shape
    assert pi.dtype == jnp.float32 and v.dtype == jnp.float32
    assert bool(jnp.all(jnp.isfinite(pi))) and bool(jnp.all(jnp.isfinite(v)))

    pi_ref, v_ref = jax.jit(reference_forward)(layers, observation)
    assert jnp.allclose(pi, pi_ref, atol=1e-4, rtol=1e-4), \
        float(jnp.max(jnp.abs(pi - pi_ref)))
    assert jnp.allclose(v, v_ref, atol=1e-4, rtol=1e-4), \
        float(jnp.max(jnp.abs(v - v_ref)))

    print("KERNEL_OK")
</pallas_src>

<mosaic_0001>
module attributes {stable_mosaic.version = 11 : i64} {
  func.func @_kan_ac_kernel(%arg0: i32, %arg1: memref<4x128xf32, #tpu.memory_space<vmem>>, %arg2: memref<16x36xf32, #tpu.memory_space<vmem>>, %arg3: memref<32x144xf32, #tpu.memory_space<vmem>>, %arg4: memref<32x288xf32, #tpu.memory_space<vmem>>, %arg5: memref<3x288xf32, #tpu.memory_space<vmem>>, %arg6: memref<3x128xf32, #tpu.memory_space<vmem>>, %arg7: memref<288x128xf32, #tpu.memory_space<vmem>>) attributes {dimension_semantics = [#tpu.dimension_semantics<parallel>], iteration_bounds = array<i64: 1>, scalar_prefetch = 0 : i64, scratch_operands = 1 : i64, tpu.core_type = #tpu.core_type<tc>, window_params = [{transform_indices = @transform_0, window_bounds = array<i64: 4, 128>}, {pipeline_mode = #tpu.pipeline_mode<synchronous>, transform_indices = @transform_1, window_bounds = array<i64: 16, 36>}, {pipeline_mode = #tpu.pipeline_mode<synchronous>, transform_indices = @transform_2, window_bounds = array<i64: 32, 144>}, {pipeline_mode = #tpu.pipeline_mode<synchronous>, transform_indices = @transform_3, window_bounds = array<i64: 32, 288>}, {pipeline_mode = #tpu.pipeline_mode<synchronous>, transform_indices = @transform_4, window_bounds = array<i64: 3, 288>}, {transform_indices = @transform_5, window_bounds = array<i64: 3, 128>}]} {
    %c0 = arith.constant 0 : index
    %c0_0 = arith.constant 0 : index
    %0 = vector.load %arg1[%c0, %c0_0] : memref<4x128xf32, #tpu.memory_space<vmem>>, vector<4x128xf32>
    %1 = arith.negf %0 : vector<4x128xf32>
    %2 = math.exp %1 : vector<4x128xf32>
    %cst = arith.constant 1.000000e+00 : f32
    %3 = vector.broadcast %cst : f32 to vector<4x128xf32>
    %4 = arith.addf %3, %2 : vector<4x128xf32>
    %5 = arith.divf %3, %4 : vector<4x128xf32>
    %6 = arith.mulf %0, %5 : vector<4x128xf32>
    %c0_1 = arith.constant 0 : index
    %c0_2 = arith.constant 0 : index
    %7 = vector.load %arg7[%c0_1, %c0_2] : memref<288x128xf32, #tpu.memory_space<vmem>>, vector<4x128xf32>
    tpu.vector_store %arg7[%c0_1, %c0_2], %6 {strides = array<i32>} : memref<288x128xf32, #tpu.memory_space<vmem>>, vector<4x128xf32>,
    %cst_3 = arith.constant -2.200000e+00 : f32
    %8 = vector.broadcast %cst_3 : f32 to vector<4x128xf32>
    %9 = arith.cmpf oge, %0, %8 : vector<4x128xf32>
    %10 = arith.extui %9 : vector<4x128xi1> to vector<4x128xi32>
    %11 = arith.sitofp %10 : vector<4x128xi32> to vector<4x128xf32>
    %cst_4 = arith.constant -1.800000e+00 : f32
    %12 = vector.broadcast %cst_4 : f32 to vector<4x128xf32>
    %13 = arith.cmpf oge, %0, %12 : vector<4x128xf32>
    %14 = arith.extui %13 : vector<4x128xi1> to vector<4x128xi32>
    %15 = arith.sitofp %14 : vector<4x128xi32> to vector<4x128xf32>
    %cst_5 = arith.constant -1.400000e+00 : f32
    %16 = vector.broadcast %cst_5 : f32 to vector<4x128xf32>
    %17 = arith.cmpf oge, %0, %16 : vector<4x128xf32>
    %18 = arith.extui %17 : vector<4x128xi1> to vector<4x128xi32>
    %19 = arith.sitofp %18 : vector<4x128xi32> to vector<4x128xf32>
    %cst_6 = arith.constant -1.000000e+00 : f32
    %20 = vector.broadcast %cst_6 : f32 to vector<4x128xf32>
    %21 = arith.cmpf oge, %0, %20 : vector<4x128xf32>
    %22 = arith.extui %21 : vector<4x128xi1> to vector<4x128xi32>
    %23 = arith.sitofp %22 : vector<4x128xi32> to vector<4x128xf32>
    %cst_7 = arith.constant -6.000000e-01 : f32
    %24 = vector.broadcast %cst_7 : f32 to vector<4x128xf32>
    %25 = arith.cmpf oge, %0, %24 : vector<4x128xf32>
    %26 = arith.extui %25 : vector<4x128xi1> to vector<4x128xi32>
    %27 = arith.sitofp %26 : vector<4x128xi32> to vector<4x128xf32>
    %cst_8 = arith.constant -2.000000e-01 : f32
    %28 = vector.broadcast %cst_8 : f32 to vector<4x128xf32>
    %29 = arith.cmpf oge, %0, %28 : vector<4x128xf32>
    %30 = arith.extui %29 : vector<4x128xi1> to vector<4x128xi32>
    %31 = arith.sitofp %30 : vector<4x128xi32> to vector<4x128xf32>
    %cst_9 = arith.constant 2.000000e-01 : f32
    %32 = vector.broadcast %cst_9 : f32 to vector<4x128xf32>
    %33 = arith.cmpf oge, %0, %32 : vector<4x128xf32>
    %34 = arith.extui %33 : vector<4x128xi1> to vector<4x128xi32>
    %35 = arith.sitofp %34 : vector<4x128xi32> to vector<4x128xf32>
    %cst_10 = arith.constant 6.000000e-01 : f32
    %36 = vector.broadcast %cst_10 : f32 to vector<4x128xf32>
    %37 = arith.cmpf oge, %0, %36 : vector<4x128xf32>
    %38 = arith.extui %37 : vector<4x128xi1> to vector<4x128xi32>
    %39 = arith.sitofp %38 : vector<4x128xi32> to vector<4x128xf32>
    %cst_11 = arith.constant 1.000000e+00 : f32
    %40 = vector.broadcast %cst_11 : f32 to vector<4x128xf32>
    %41 = arith.cmpf oge, %0, %40 : vector<4x128xf32>
    %42 = arith.extui %41 : vector<4x128xi1> to vector<4x128xi32>
    %43 = arith.sitofp %42 : vector<4x128xi32> to vector<4x128xf32>
    %cst_12 = arith.constant 1.400000e+00 : f32
    %44 = vector.broadcast %cst_12 : f32 to vector<4x128xf32>
    %45 = arith.cmpf oge, %0, %44 : vector<4x128xf32>
    %46 = arith.extui %45 : vector<4x128xi1> to vector<4x128xi32>
    %47 = arith.sitofp %46 : vector<4x128xi32> to vector<4x128xf32>
    %cst_13 = arith.constant 1.800000e+00 : f32
    %48 = vector.broadcast %cst_13 : f32 to vector<4x128xf32>
    %49 = arith.cmpf oge, %0, %48 : vector<4x128xf32>
    %50 = arith.extui %49 : vector<4x128xi1> to vector<4x128xi32>
    %51 = arith.sitofp %50 : vector<4x128xi32> to vector<4x128xf32>
    %cst_14 = arith.constant 2.200000e+00 : f32
    %52 = vector.broadcast %cst_14 : f32 to vector<4x128xf32>
    %53 = arith.cmpf oge, %0, %52 : vector<4x128xf32>
    %54 = arith.extui %53 : vector<4x128xi1> to vector<4x128xi32>
    %55 = arith.sitofp %54 : vector<4x128xi32> to vector<4x128xf32>
    %56 = arith.subf %11, %15 : vector<4x128xf32>
    %57 = arith.subf %15, %19 : vector<4x128xf32>
    %58 = arith.subf %19, %23 : vector<4x128xf32>
    %59 = arith.subf %23, %27 : vector<4x128xf32>
    %60 = arith.subf %27, %31 : vector<4x128xf32>
    %61 = arith.subf %31, %35 : vector<4x128xf32>
    %62 = arith.subf %35, %39 : vector<4x128xf32>
    %63 = arith.subf %39, %43 : vector<4x128xf32>
    %64 = arith.subf %43, %47 : vector<4x128xf32>
    %65 = arith.subf %47, %51 : vector<4x128xf32>
    %66 = arith.subf %51, %55 : vector<4x128xf32>
    %cst_15 = arith.constant -2.200000e+00 : f32
    %67 = vector.broadcast %cst_15 : f32 to vector<4x128xf32>
    %68 = arith.subf %0, %67 : vector<4x128xf32>
    %cst_16 = arith.constant 2.500000e+00 : f32
    %69 = vector.broadcast %cst_16 : f32 to vector<4x128xf32>
    %70 = arith.mulf %68, %69 : vector<4x128xf32>
    %cst_17 = arith.constant -1.800000e+00 : f32
    %71 = vector.broadcast %cst_17 : f32 to vector<4x128xf32>
    %72 = arith.subf %0, %71 : vector<4x128xf32>
    %cst_18 = arith.constant 2.500000e+00 : f32
    %73 = vector.broadcast %cst_18 : f32 to vector<4x128xf32>
    %74 = arith.mulf %72, %73 : vector<4x128xf32>
    %cst_19 = arith.constant -1.400000e+00 : f32
    %75 = vector.broadcast %cst_19 : f32 to vector<4x128xf32>
    %76 = arith.subf %0, %75 : vector<4x128xf32>
    %cst_20 = arith.constant 2.500000e+00 : f32
    %77 = vector.broadcast %cst_20 : f32 to vector<4x128xf32>
    %78 = arith.mulf %76, %77 : vector<4x128xf32>
    %cst_21 = arith.constant -1.000000e+00 : f32
    %79 = vector.broadcast %cst_21 : f32 to vector<4x128xf32>
    %80 = arith.subf %0, %79 : vector<4x128xf32>
    %cst_22 = arith.constant 2.500000e+00 : f32
    %81 = vector.broadcast %cst_22 : f32 to vector<4x128xf32>
    %82 = arith.mulf %80, %81 : vector<4x128xf32>
    %cst_23 = arith.constant -6.000000e-01 : f32
    %83 = vector.broadcast %cst_23 : f32 to vector<4x128xf32>
    %84 = arith.subf %0, %83 : vector<4x128xf32>
    %cst_24 = arith.constant 2.500000e+00 : f32
    %85 = vector.broadcast %cst_24 : f32 to vector<4x128xf32>
    %86 = arith.mulf %84, %85 : vector<4x128xf32>
    %cst_25 = arith.constant -2.000000e-01 : f32
    %87 = vector.broadcast %cst_25 : f32 to vector<4x128xf32>
    %88 = arith.subf %0, %87 : vector<4x128xf32>
    %cst_26 = arith.constant 2.500000e+00 : f32
    %89 = vector.broadcast %cst_26 : f32 to vector<4x128xf32>
    %90 = arith.mulf %88, %89 : vector<4x128xf32>
    %cst_27 = arith.constant 2.000000e-01 : f32
    %91 = vector.broadcast %cst_27 : f32 to vector<4x128xf32>
    %92 = arith.subf %0, %91 : vector<4x128xf32>
    %cst_28 = arith.constant 2.500000e+00 : f32
    %93 = vector.broadcast %cst_28 : f32 to vector<4x128xf32>
    %94 = arith.mulf %92, %93 : vector<4x128xf32>
    %cst_29 = arith.constant 6.000000e-01 : f32
    %95 = vector.broadcast %cst_29 : f32 to vector<4x128xf32>
    %96 = arith.subf %0, %95 : vector<4x128xf32>
    %cst_30 = arith.constant 2.500000e+00 : f32
    %97 = vector.broadcast %cst_30 : f32 to vector<4x128xf32>
    %98 = arith.mulf %96, %97 : vector<4x128xf32>
    %cst_31 = arith.constant 1.000000e+00 : f32
    %99 = vector.broadcast %cst_31 : f32 to vector<4x128xf32>
    %100 = arith.subf %0, %99 : vector<4x128xf32>
    %cst_32 = arith.constant 2.500000e+00 : f32
    %101 = vector.broadcast %cst_32 : f32 to vector<4x128xf32>
    %102 = arith.mulf %100, %101 : vector<4x128xf32>
    %cst_33 = arith.constant 1.400000e+00 : f32
    %103 = vector.broadcast %cst_33 : f32 to vector<4x128xf32>
    %104 = arith.subf %0, %103 : vector<4x128xf32>
    %cst_34 = arith.constant 2.500000e+00 : f32
    %105 = vector.broadcast %cst_34 : f32 to vector<4x128xf32>
    %106 = arith.mulf %104, %105 : vector<4x128xf32>
    %cst_35 = arith.constant 1.800000e+00 : f32
    %107 = vector.broadcast %cst_35 : f32 to vector<4x128xf32>
    %108 = arith.subf %0, %107 : vector<4x128xf32>
    %cst_36 = arith.constant 2.500000e+00 : f32
    %109 = vector.broadcast %cst_36 : f32 to vector<4x128xf32>
    %110 = arith.mulf %108, %109 : vector<4x128xf32>
    %111 = arith.mulf %70, %56 : vector<4x128xf32>
    %cst_37 = arith.constant 1.000000e+00 : f32
    %112 = vector.broadcast %cst_37 : f32 to vector<4x128xf32>
    %113 = arith.subf %112, %74 : vector<4x128xf32>
    %114 = arith.mulf %113, %57 : vector<4x128xf32>
    %115 = arith.addf %111, %114 : vector<4x128xf32>
    %116 = arith.mulf %74, %57 : vector<4x128xf32>
    %cst_38 = arith.constant 1.000000e+00 : f32
    %117 = vector.broadcast %cst_38 : f32 to vector<4x128xf32>
    %118 = arith.subf %117, %78 : vector<4x128xf32>
    %119 = arith.mulf %118, %58 : vector<4x128xf32>
    %120 = arith.addf %116, %119 : vector<4x128xf32>
    %121 = arith.mulf %78, %58 : vector<4x128xf32>
    %cst_39 = arith.constant 1.000000e+00 : f32
    %122 = vector.broadcast %cst_39 : f32 to vector<4x128xf32>
    %123 = arith.subf %122, %82 : vector<4x128xf32>
    %124 = arith.mulf %123, %59 : vector<4x128xf32>
    %125 = arith.addf %121, %124 : vector<4x128xf32>
    %126 = arith.mulf %82, %59 : vector<4x128xf32>
    %cst_40 = arith.constant 1.000000e+00 : f32
    %127 = vector.broadcast %cst_40 : f32 to vector<4x128xf32>
    %128 = arith.subf %127, %86 : vector<4x128xf32>
    %129 = arith.mulf %128, %60 : vector<4x128xf32>
    %130 = arith.addf %126, %129 : vector<4x128xf32>
    %131 = arith.mulf %86, %60 : vector<4x128xf32>
    %cst_41 = arith.constant 1.000000e+00 : f32
    %132 = vector.broadcast %cst_41 : f32 to vector<4x128xf32>
    %133 = arith.subf %132, %90 : vector<4x128xf32>
    %134 = arith.mulf %133, %61 : vector<4x128xf32>
    %135 = arith.addf %131, %134 : vector<4x128xf32>
    %136 = arith.mulf %90, %61 : vector<4x128xf32>
    %cst_42 = arith.constant 1.000000e+00 : f32
    %137 = vector.broadcast %cst_42 : f32 to vector<4x128xf32>
    %138 = arith.subf %137, %94 : vector<4x128xf32>
    %139 = arith.mulf %138, %62 : vector<4x128xf32>
    %140 = arith.addf %136, %139 : vector<4x128xf32>
    %141 = arith.mulf %94, %62 : vector<4x128xf32>
    %cst_43 = arith.constant 1.000000e+00 : f32
    %142 = vector.broadcast %cst_43 : f32 to vector<4x128xf32>
    %143 = arith.subf %142, %98 : vector<4x128xf32>
    %144 = arith.mulf %143, %63 : vector<4x128xf32>
    %145 = arith.addf %141, %144 : vector<4x128xf32>
    %146 = arith.mulf %98, %63 : vector<4x128xf32>
    %cst_44 = arith.constant 1.000000e+00 : f32
    %147 = vector.broadcast %cst_44 : f32 to vector<4x128xf32>
    %148 = arith.subf %147, %102 : vector<4x128xf32>
    %149 = arith.mulf %148, %64 : vector<4x128xf32>
    %150 = arith.addf %146, %149 : vector<4x128xf32>
    %151 = arith.mulf %102, %64 : vector<4x128xf32>
    %cst_45 = arith.constant 1.000000e+00 : f32
    %152 = vector.broadcast %cst_45 : f32 to vector<4x128xf32>
    %153 = arith.subf %152, %106 : vector<4x128xf32>
    %154 = arith.mulf %153, %65 : vector<4x128xf32>
    %155 = arith.addf %151, %154 : vector<4x128xf32>
    %156 = arith.mulf %106, %65 : vector<4x128xf32>
    %cst_46 = arith.constant 1.000000e+00 : f32
    %157 = vector.broadcast %cst_46 : f32 to vector<4x128xf32>
    %158 = arith.subf %157, %110 : vector<4x128xf32>
    %159 = arith.mulf %158, %66 : vector<4x128xf32>
    %160 = arith.addf %156, %159 : vector<4x128xf32>
    %cst_47 = arith.constant -2.200000e+00 : f32
    %161 = vector.broadcast %cst_47 : f32 to vector<4x128xf32>
    %162 = arith.subf %0, %161 : vector<4x128xf32>
    %cst_48 = arith.constant 1.250000e+00 : f32
    %163 = vector.broadcast %cst_48 : f32 to vector<4x128xf32>
    %164 = arith.mulf %162, %163 : vector<4x128xf32>
    %cst_49 = arith.constant -1.800000e+00 : f32
    %165 = vector.broadcast %cst_49 : f32 to vector<4x128xf32>
    %166 = arith.subf %0, %165 : vector<4x128xf32>
    %cst_50 = arith.constant 1.250000e+00 : f32
    %167 = vector.broadcast %cst_50 : f32 to vector<4x128xf32>
    %168 = arith.mulf %166, %167 : vector<4x128xf32>
    %cst_51 = arith.constant -1.400000e+00 : f32
    %169 = vector.broadcast %cst_51 : f32 to vector<4x128xf32>
    %170 = arith.subf %0, %169 : vector<4x128xf32>
    %cst_52 = arith.constant 1.250000e+00 : f32
    %171 = vector.broadcast %cst_52 : f32 to vector<4x128xf32>
    %172 = arith.mulf %170, %171 : vector<4x128xf32>
    %cst_53 = arith.constant -1.000000e+00 : f32
    %173 = vector.broadcast %cst_53 : f32 to vector<4x128xf32>
    %174 = arith.subf %0, %173 : vector<4x128xf32>
    %cst_54 = arith.constant 1.250000e+00 : f32
    %175 = vector.broadcast %cst_54 : f32 to vector<4x128xf32>
    %176 = arith.mulf %174, %175 : vector<4x128xf32>
    %cst_55 = arith.constant -6.000000e-01 : f32
    %177 = vector.broadcast %cst_55 : f32 to vector<4x128xf32>
    %178 = arith.subf %0, %177 : vector<4x128xf32>
    %cst_56 = arith.constant 1.250000e+00 : f32
    %179 = vector.broadcast %cst_56 : f32 to vector<4x128xf32>
    %180 = arith.mulf %178, %179 : vector<4x128xf32>
    %cst_57 = arith.constant -2.000000e-01 : f32
    %181 = vector.broadcast %cst_57 : f32 to vector<4x128xf32>
    %182 = arith.subf %0, %181 : vector<4x128xf32>
    %cst_58 = arith.constant 1.250000e+00 : f32
    %183 = vector.broadcast %cst_58 : f32 to vector<4x128xf32>
    %184 = arith.mulf %182, %183 : vector<4x128xf32>
    %cst_59 = arith.constant 2.000000e-01 : f32
    %185 = vector.broadcast %cst_59 : f32 to vector<4x128xf32>
    %186 = arith.subf %0, %185 : vector<4x128xf32>
    %cst_60 = arith.constant 1.250000e+00 : f32
    %187 = vector.broadcast %cst_60 : f32 to vector<4x128xf32>
    %188 = arith.mulf %186, %187 : vector<4x128xf32>
    %cst_61 = arith.constant 6.000000e-01 : f32
    %189 = vector.broadcast %cst_61 : f32 to vector<4x128xf32>
    %190 = arith.subf %0, %189 : vector<4x128xf32>
    %cst_62 = arith.constant 1.250000e+00 : f32
    %191 = vector.broadcast %cst_62 : f32 to vector<4x128xf32>
    %192 = arith.mulf %190, %191 : vector<4x128xf32>
    %cst_63 = arith.constant 1.000000e+00 : f32
    %193 = vector.broadcast %cst_63 : f32 to vector<4x128xf32>
    %194 = arith.subf %0, %193 : vector<4x128xf32>
    %cst_64 = arith.constant 1.250000e+00 : f32
    %195 = vector.broadcast %cst_64 : f32 to vector<4x128xf32>
    %196 = arith.mulf %194, %195 : vector<4x128xf32>
    %cst_65 = arith.constant 1.400000e+00 : f32
    %197 = vector.broadcast %cst_65 : f32 to vector<4x128xf32>
    %198 = arith.subf %0, %197 : vector<4x128xf32>
    %cst_66 = arith.constant 1.250000e+00 : f32
    %199 = vector.broadcast %cst_66 : f32 to vector<4x128xf32>
    %200 = arith.mulf %198, %199 : vector<4x128xf32>
    %201 = arith.mulf %164, %115 : vector<4x128xf32>
    %cst_67 = arith.constant 1.000000e+00 : f32
    %202 = vector.broadcast %cst_67 : f32 to vector<4x128xf32>
    %203 = arith.subf %202, %168 : vector<4x128xf32>
    %204 = arith.mulf %203, %120 : vector<4x128xf32>
    %205 = arith.addf %201, %204 : vector<4x128xf32>
    %206 = arith.mulf %168, %120 : vector<4x128xf32>
    %cst_68 = arith.constant 1.000000e+00 : f32
    %207 = vector.broadcast %cst_68 : f32 to vector<4x128xf32>
    %208 = arith.subf %207, %172 : vector<4x128xf32>
    %209 = arith.mulf %208, %125 : vector<4x128xf32>
    %210 = arith.addf %206, %209 : vector<4x128xf32>
    %211 = arith.mulf %172, %125 : vector<4x128xf32>
    %cst_69 = arith.constant 1.000000e+00 : f32
    %212 = vector.broadcast %cst_69 : f32 to vector<4x128xf32>
    %213 = arith.subf %212, %176 : vector<4x128xf32>
    %214 = arith.mulf %213, %130 : vector<4x128xf32>
    %215 = arith.addf %211, %214 : vector<4x128xf32>
    %216 = arith.mulf %176, %130 : vector<4x128xf32>
    %cst_70 = arith.constant 1.000000e+00 : f32
    %217 = vector.broadcast %cst_70 : f32 to vector<4x128xf32>
    %218 = arith.subf %217, %180 : vector<4x128xf32>
    %219 = arith.mulf %218, %135 : vector<4x128xf32>
    %220 = arith.addf %216, %219 : vector<4x128xf32>
    %221 = arith.mulf %180, %135 : vector<4x128xf32>
    %cst_71 = arith.constant 1.000000e+00 : f32
    %222 = vector.broadcast %cst_71 : f32 to vector<4x128xf32>
    %223 = arith.subf %222, %184 : vector<4x128xf32>
    %224 = arith.mulf %223, %140 : vector<4x128xf32>
    %225 = arith.addf %221, %224 : vector<4x128xf32>
    %226 = arith.mulf %184, %140 : vector<4x128xf32>
    %cst_72 = arith.constant 1.000000e+00 : f32
    %227 = vector.broadcast %cst_72 : f32 to vector<4x128xf32>
    %228 = arith.subf %227, %188 : vector<4x128xf32>
    %229 = arith.mulf %228, %145 : vector<4x128xf32>
    %230 = arith.addf %226, %229 : vector<4x128xf32>
    %231 = arith.mulf %188, %145 : vector<4x128xf32>
    %cst_73 = arith.constant 1.000000e+00 : f32
    %232 = vector.broadcast %cst_73 : f32 to vector<4x128xf32>
    %233 = arith.subf %232, %192 : vector<4x128xf32>
    %234 = arith.mulf %233, %150 : vector<4x128xf32>
    %235 = arith.addf %231, %234 : vector<4x128xf32>
    %236 = arith.mulf %192, %150 : vector<4x128xf32>
    %cst_74 = arith.constant 1.000000e+00 : f32
    %237 = vector.broadcast %cst_74 : f32 to vector<4x128xf32>
    %238 = arith.subf %237, %196 : vector<4x128xf32>
    %239 = arith.mulf %238, %155 : vector<4x128xf32>
    %240 = arith.addf %236, %239 : vector<4x128xf32>
    %241 = arith.mulf %196, %155 : vector<4x128xf32>
    %cst_75 = arith.constant 1.000000e+00 : f32
    %242 = vector.broadcast %cst_75 : f32 to vector<4x128xf32>
    %243 = arith.subf %242, %200 : vector<4x128xf32>
    %244 = arith.mulf %243, %160 : vector<4x128xf32>
    %245 = arith.addf %241, %244 : vector<4x128xf32>
    %cst_76 = arith.constant -2.200000e+00 : f32
    %246 = vector.broadcast %cst_76 : f32 to vector<4x128xf32>
    %247 = arith.subf %0, %246 : vector<4x128xf32>
    %cst_77 = arith.constant 0.833333313 : f32
    %248 = vector.broadcast %cst_77 : f32 to vector<4x128xf32>
    %249 = arith.mulf %247, %248 : vector<4x128xf32>
    %cst_78 = arith.constant -1.800000e+00 : f32
    %250 = vector.broadcast %cst_78 : f32 to vector<4x128xf32>
    %251 = arith.subf %0, %250 : vector<4x128xf32>
    %cst_79 = arith.constant 0.833333313 : f32
    %252 = vector.broadcast %cst_79 : f32 to vector<4x128xf32>
    %253 = arith.mulf %251, %252 : vector<4x128xf32>
    %cst_80 = arith.constant -1.400000e+00 : f32
    %254 = vector.broadcast %cst_80 : f32 to vector<4x128xf32>
    %255 = arith.subf %0, %254 : vector<4x128xf32>
    %cst_81 = arith.constant 0.833333313 : f32
    %256 = vector.broadcast %cst_81 : f32 to vector<4x128xf32>
    %257 = arith.mulf %255, %256 : vector<4x128xf32>
    %cst_82 = arith.constant -1.000000e+00 : f32
    %258 = vector.broadcast %cst_82 : f32 to vector<4x128xf32>
    %259 = arith.subf %0, %258 : vector<4x128xf32>
    %cst_83 = arith.constant 0.833333313 : f32
    %260 = vector.broadcast %cst_83 : f32 to vector<4x128xf32>
    %261 = arith.mulf %259, %260 : vector<4x128xf32>
    %cst_84 = arith.constant -6.000000e-01 : f32
    %262 = vector.broadcast %cst_84 : f32 to vector<4x128xf32>
    %263 = arith.subf %0, %262 : vector<4x128xf32>
    %cst_85 = arith.constant 0.833333313 : f32
    %264 = vector.broadcast %cst_85 : f32 to vector<4x128xf32>
    %265 = arith.mulf %263, %264 : vector<4x128xf32>
    %cst_86 = arith.constant -2.000000e-01 : f32
    %266 = vector.broadcast %cst_86 : f32 to vector<4x128xf32>
    %267 = arith.subf %0, %266 : vector<4x128xf32>
    %cst_87 = arith.constant 0.833333313 : f32
    %268 = vector.broadcast %cst_87 : f32 to vector<4x128xf32>
    %269 = arith.mulf %267, %268 : vector<4x128xf32>
    %cst_88 = arith.constant 2.000000e-01 : f32
    %270 = vector.broadcast %cst_88 : f32 to vector<4x128xf32>
    %271 = arith.subf %0, %270 : vector<4x128xf32>
    %cst_89 = arith.constant 0.833333313 : f32
    %272 = vector.broadcast %cst_89 : f32 to vector<4x128xf32>
    %273 = arith.mulf %271, %272 : vector<4x128xf32>
    %cst_90 = arith.constant 6.000000e-01 : f32
    %274 = vector.broadcast %cst_90 : f32 to vector<4x128xf32>
    %275 = arith.subf %0, %274 : vector<4x128xf32>
    %cst_91 = arith.constant 0.833333313 : f32
    %276 = vector.broadcast %cst_91 : f32 to vector<4x128xf32>
    %277 = arith.mulf %275, %276 : vector<4x128xf32>
    %cst_92 = arith.constant 1.000000e+00 : f32
    %278 = vector.broadcast %cst_92 : f32 to vector<4x128xf32>
    %279 = arith.subf %0, %278 : vector<4x128xf32>
    %cst_93 = arith.constant 0.833333313 : f32
    %280 = vector.broadcast %cst_93 : f32 to vector<4x128xf32>
    %281 = arith.mulf %279, %280 : vector<4x128xf32>
    %282 = arith.mulf %249, %205 : vector<4x128xf32>
    %cst_94 = arith.constant 1.000000e+00 : f32
    %283 = vector.broadcast %cst_94 : f32 to vector<4x128xf32>
    %284 = arith.subf %283, %253 : vector<4x128xf32>
    %285 = arith.mulf %284, %210 : vector<4x128xf32>
    %286 = arith.addf %282, %285 : vector<4x128xf32>
    %287 = arith.mulf %253, %210 : vector<4x128xf32>
    %cst_95 = arith.constant 1.000000e+00 : f32
    %288 = vector.broadcast %cst_95 : f32 to vector<4x128xf32>
    %289 = arith.subf %288, %257 : vector<4x128xf32>
    %290 = arith.mulf %289, %215 : vector<4x128xf32>
    %291 = arith.addf %287, %290 : vector<4x128xf32>
    %292 = arith.mulf %257, %215 : vector<4x128xf32>
    %cst_96 = arith.constant 1.000000e+00 : f32
    %293 = vector.broadcast %cst_96 : f32 to vector<4x128xf32>
    %294 = arith.subf %293, %261 : vector<4x128xf32>
    %295 = arith.mulf %294, %220 : vector<4x128xf32>
    %296 = arith.addf %292, %295 : vector<4x128xf32>
    %297 = arith.mulf %261, %220 : vector<4x128xf32>
    %cst_97 = arith.constant 1.000000e+00 : f32
    %298 = vector.broadcast %cst_97 : f32 to vector<4x128xf32>
    %299 = arith.subf %298, %265 : vector<4x128xf32>
    %300 = arith.mulf %299, %225 : vector<4x128xf32>
    %301 = arith.addf %297, %300 : vector<4x128xf32>
    %302 = arith.mulf %265, %225 : vector<4x128xf32>
    %cst_98 = arith.constant 1.000000e+00 : f32
    %303 = vector.broadcast %cst_98 : f32 to vector<4x128xf32>
    %304 = arith.subf %303, %269 : vector<4x128xf32>
    %305 = arith.mulf %304, %230 : vector<4x128xf32>
    %306 = arith.addf %302, %305 : vector<4x128xf32>
    %307 = arith.mulf %269, %230 : vector<4x128xf32>
    %cst_99 = arith.constant 1.000000e+00 : f32
    %308 = vector.broadcast %cst_99 : f32 to vector<4x128xf32>
    %309 = arith.subf %308, %273 : vector<4x128xf32>
    %310 = arith.mulf %309, %235 : vector<4x128xf32>
    %311 = arith.addf %307, %310 : vector<4x128xf32>
    %312 = arith.mulf %273, %235 : vector<4x128xf32>
    %cst_100 = arith.constant 1.000000e+00 : f32
    %313 = vector.broadcast %cst_100 : f32 to vector<4x128xf32>
    %314 = arith.subf %313, %277 : vector<4x128xf32>
    %315 = arith.mulf %314, %240 : vector<4x128xf32>
    %316 = arith.addf %312, %315 : vector<4x128xf32>
    %317 = arith.mulf %277, %240 : vector<4x128xf32>
    %cst_101 = arith.constant 1.000000e+00 : f32
    %318 = vector.broadcast %cst_101 : f32 to vector<4x128xf32>
    %319 = arith.subf %318, %281 : vector<4x128xf32>
    %320 = arith.mulf %319, %245 : vector<4x128xf32>
    %321 = arith.addf %317, %320 : vector<4x128xf32>
    %c4 = arith.constant 4 : index
    %c0_102 = arith.constant 0 : index
    %322 = vector.load %arg7[%c4, %c0_102] : memref<288x128xf32, #tpu.memory_space<vmem>>, vector<4x128xf32>
    tpu.vector_store %arg7[%c4, %c0_102], %286 {strides = array<i32>} : memref<288x128xf32, #tpu.memory_space<vmem>>, vector<4x128xf32>,
    %c8 = arith.constant 8 : index
    %c0_103 = arith.constant 0 : index
    %323 = vector.load %arg7[%c8, %c0_103] : memref<288x128xf32, #tpu.memory_space<vmem>>, vector<4x128xf32>
    tpu.vector_store %arg7[%c8, %c0_103], %291 {strides = array<i32>} : memref<288x128xf32, #tpu.memory_space<vmem>>, vector<4x128xf32>,
    %c12 = arith.constant 12 : index
    %c0_104 = arith.constant 0 : index
    %324 = vector.load %arg7[%c12, %c0_104] : memref<288x128xf32, #tpu.memory_space<vmem>>, vector<4x128xf32>
    tpu.vector_store %arg7[%c12, %c0_104], %296 {strides = array<i32>} : memref<288x128xf32, #tpu.memory_space<vmem>>, vector<4x128xf32>,
    %c16 = arith.constant 16 : index
    %c0_105 = arith.constant 0 : index
    %325 = vector.load %arg7[%c16, %c0_105] : memref<288x128xf32, #tpu.memory_space<vmem>>, vector<4x128xf32>
    tpu.vector_store %arg7[%c16, %c0_105], %301 {strides = array<i32>} : memref<288x128xf32, #tpu.memory_space<vmem>>, vector<4x128xf32>,
    %c20 = arith.constant 20 : index
    %c0_106 = arith.constant 0 : index
    %326 = vector.load %arg7[%c20, %c0_106] : memref<288x128xf32, #tpu.memory_space<vmem>>, vector<4x128xf32>
    tpu.vector_store %arg7[%c20, %c0_106], %306 {strides = array<i32>} : memref<288x128xf32, #tpu.memory_space<vmem>>, vector<4x128xf32>,
    %c24 = arith.constant 24 : index
    %c0_107 = arith.constant 0 : index
    %327 = vector.load %arg7[%c24, %c0_107] : memref<288x128xf32, #tpu.memory_space<vmem>>, vector<4x128xf32>
    tpu.vector_store %arg7[%c24, %c0_107], %311 {strides = array<i32>} : memref<288x128xf32, #tpu.memory_space<vmem>>, vector<4x128xf32>,
    %c28 = arith.constant 28 : index
    %c0_108 = arith.constant 0 : index
    %328 = vector.load %arg7[%c28, %c0_108] : memref<288x128xf32, #tpu.memory_space<vmem>>, vector<4x128xf32>
    tpu.vector_store %arg7[%c28, %c0_108], %316 {strides = array<i32>} : memref<288x128xf32, #tpu.memory_space<vmem>>, vector<4x128xf32>,
    %c32 = arith.constant 32 : index
    %c0_109 = arith.constant 0 : index
    %329 = vector.load %arg7[%c32, %c0_109] : memref<288x128xf32, #tpu.memory_space<vmem>>, vector<4x128xf32>
    tpu.vector_store %arg7[%c32, %c0_109], %321 {strides = array<i32>} : memref<288x128xf32, #tpu.memory_space<vmem>>, vector<4x128xf32>,
    %c0_110 = arith.constant 0 : index
    %c0_111 = arith.constant 0 : index
    %330 = vector.load %arg2[%c0_110, %c0_111] : memref<16x36xf32, #tpu.memory_space<vmem>>, vector<16x36xf32>
    %c0_112 = arith.constant 0 : index
    %c0_113 = arith.constant 0 : index
    %331 = vector.load %arg7[%c0_112, %c0_113] : memref<288x128xf32, #tpu.memory_space<vmem>>, vector<36x128xf32>
    %cst_114 = arith.constant dense<0.000000e+00> : vector<16x128xf32>
    %332 = tpu.matmul %330, %331, %cst_114 {dimension_numbers = #tpu.dot_dimension_numbers<[1], [0], [0], [1], [0, 0, 1, 1], [], []>} : vector<16x36xf32>, vector<36x128xf32>, vector<16x128xf32> -> vector<16x128xf32>
    %333 = arith.negf %332 : vector<16x128xf32>
    %334 = math.exp %333 : vector<16x128xf32>
    %cst_115 = arith.constant 1.000000e+00 : f32
    %335 = vector.broadcast %cst_115 : f32 to vector<16x128xf32>
    %336 = arith.addf %335, %334 : vector<16x128xf32>
    %337 = arith.divf %335, %336 : vector<16x128xf32>
    %338 = arith.mulf %332, %337 : vector<16x128xf32>
    %c0_116 = arith.constant 0 : index
    %c0_117 = arith.constant 0 : index
    %339 = vector.load %arg7[%c0_116, %c0_117] : memref<288x128xf32, #tpu.memory_space<vmem>>, vector<16x128xf32>
    tpu.vector_store %arg7[%c0_116, %c0_117], %338 {strides = array<i32>} : memref<288x128xf32, #tpu.memory_space<vmem>>, vector<16x128xf32>,
    %cst_118 = arith.constant -2.200000e+00 : f32
    %340 = vector.broadcast %cst_118 : f32 to vector<16x128xf32>
    %341 = arith.cmpf oge, %332, %340 : vector<16x128xf32>
    %342 = arith.extui %341 : vector<16x128xi1> to vector<16x128xi32>
    %343 = arith.sitofp %342 : vector<16x128xi32> to vector<16x128xf32>
    %cst_119 = arith.constant -1.800000e+00 : f32
    %344 = vector.broadcast %cst_119 : f32 to vector<16x128xf32>
    %345 = arith.cmpf oge, %332, %344 : vector<16x128xf32>
    %346 = arith.extui %345 : vector<16x128xi1> to vector<16x128xi32>
    %347 = arith.sitofp %346 : vector<16x128xi32> to vector<16x128xf32>
    %cst_120 = arith.constant -1.400000e+00 : f32
    %348 = vector.broadcast %cst_120 : f32 to vector<16x128xf32>
    %349 = arith.cmpf oge, %332, %348 : vector<16x128xf32>
    %350 = arith.extui %349 : vector<16x128xi1> to vector<16x128xi32>
    %351 = arith.sitofp %350 : vector<16x128xi32> to vector<16x128xf32>
    %cst_121 = arith.constant -1.000000e+00 : f32
    %352 = vector.broadcast %cst_121 : f32 to vector<16x128xf32>
    %353 = arith.cmpf oge, %332, %352 : vector<16x128xf32>
    %354 = arith.extui %353 : vector<16x128xi1> to vector<16x128xi32>
    %355 = arith.sitofp %354 : vector<16x128xi32> to vector<16x128xf32>
    %cst_122 = arith.constant -6.000000e-01 : f32
    %356 = vector.broadcast %cst_122 : f32 to vector<16x128xf32>
    %357 = arith.cmpf oge, %332, %356 : vector<16x128xf32>
    %358 = arith.extui %357 : vector<16x128xi1> to vector<16x128xi32>
    %359 = arith.sitofp %358 : vector<16x128xi32> to vector<16x128xf32>
    %cst_123 = arith.constant -2.000000e-01 : f32
    %360 = vector.broadcast %cst_123 : f32 to vector<16x128xf32>
    %361 = arith.cmpf oge, %332, %360 : vector<16x128xf32>
    %362 = arith.extui %361 : vector<16x128xi1> to vector<16x128xi32>
    %363 = arith.sitofp %362 : vector<16x128xi32> to vector<16x128xf32>
    %cst_124 = arith.constant 2.000000e-01 : f32
    %364 = vector.broadcast %cst_124 : f32 to vector<16x128xf32>
    %365 = arith.cmpf oge, %332, %364 : vector<16x128xf32>
    %366 = arith.extui %365 : vector<16x128xi1> to vector<16x128xi32>
    %367 = arith.sitofp %366 : vector<16x128xi32> to vector<16x128xf32>
    %cst_125 = arith.constant 6.000000e-01 : f32
    %368 = vector.broadcast %cst_125 : f32 to vector<16x128xf32>
    %369 = arith.cmpf oge, %332, %368 : vector<16x128xf32>
    %370 = arith.extui %369 : vector<16x128xi1> to vector<16x128xi32>
    %371 = arith.sitofp %370 : vector<16x128xi32> to vector<16x128xf32>
    %cst_126 = arith.constant 1.000000e+00 : f32
    %372 = vector.broadcast %cst_126 : f32 to vector<16x128xf32>
    %373 = arith.cmpf oge, %332, %372 : vector<16x128xf32>
    %374 = arith.extui %373 : vector<16x128xi1> to vector<16x128xi32>
    %375 = arith.sitofp %374 : vector<16x128xi32> to vector<16x128xf32>
    %cst_127 = arith.constant 1.400000e+00 : f32
    %376 = vector.broadcast %cst_127 : f32 to vector<16x128xf32>
    %377 = arith.cmpf oge, %332, %376 : vector<16x128xf32>
    %378 = arith.extui %377 : vector<16x128xi1> to vector<16x128xi32>
    %379 = arith.sitofp %378 : vector<16x128xi32> to vector<16x128xf32>
    %cst_128 = arith.constant 1.800000e+00 : f32
    %380 = vector.broadcast %cst_128 : f32 to vector<16x128xf32>
    %381 = arith.cmpf oge, %332, %380 : vector<16x128xf32>
    %382 = arith.extui %381 : vector<16x128xi1> to vector<16x128xi32>
    %383 = arith.sitofp %382 : vector<16x128xi32> to vector<16x128xf32>
    %cst_129 = arith.constant 2.200000e+00 : f32
    %384 = vector.broadcast %cst_129 : f32 to vector<16x128xf32>
    %385 = arith.cmpf oge, %332, %384 : vector<16x128xf32>
    %386 = arith.extui %385 : vector<16x128xi1> to vector<16x128xi32>
    %387 = arith.sitofp %386 : vector<16x128xi32> to vector<16x128xf32>
    %388 = arith.subf %343, %347 : vector<16x128xf32>
    %389 = arith.subf %347, %351 : vector<16x128xf32>
    %390 = arith.subf %351, %355 : vector<16x128xf32>
    %391 = arith.subf %355, %359 : vector<16x128xf32>
    %392 = arith.subf %359, %363 : vector<16x128xf32>
    %393 = arith.subf %363, %367 : vector<16x128xf32>
    %394 = arith.subf %367, %371 : vector<16x128xf32>
    %395 = arith.subf %371, %375 : vector<16x128xf32>
    %396 = arith.subf %375, %379 : vector<16x128xf32>
    %397 = arith.subf %379, %383 : vector<16x128xf32>
    %398 = arith.subf %383, %387 : vector<16x128xf32>
    %cst_130 = arith.constant -2.200000e+00 : f32
    %399 = vector.broadcast %cst_130 : f32 to vector<16x128xf32>
    %400 = arith.subf %332, %399 : vector<16x128xf32>
    %cst_131 = arith.constant 2.500000e+00 : f32
    %401 = vector.broadcast %cst_131 : f32 to vector<16x128xf32>
    %402 = arith.mulf %400, %401 : vector<16x128xf32>
    %cst_132 = arith.constant -1.800000e+00 : f32
    %403 = vector.broadcast %cst_132 : f32 to vector<16x128xf32>
    %404 = arith.subf %332, %403 : vector<16x128xf32>
    %cst_133 = arith.constant 2.500000e+00 : f32
    %405 = vector.broadcast %cst_133 : f32 to vector<16x128xf32>
    %406 = arith.mulf %404, %405 : vector<16x128xf32>
    %cst_134 = arith.constant -1.400000e+00 : f32
    %407 = vector.broadcast %cst_134 : f32 to vector<16x128xf32>
    %408 = arith.subf %332, %407 : vector<16x128xf32>
    %cst_135 = arith.constant 2.500000e+00 : f32
    %409 = vector.broadcast %cst_135 : f32 to vector<16x128xf32>
    %410 = arith.mulf %408, %409 : vector<16x128xf32>
    %cst_136 = arith.constant -1.000000e+00 : f32
    %411 = vector.broadcast %cst_136 : f32 to vector<16x128xf32>
    %412 = arith.subf %332, %411 : vector<16x128xf32>
    %cst_137 = arith.constant 2.500000e+00 : f32
    %413 = vector.broadcast %cst_137 : f32 to vector<16x128xf32>
    %414 = arith.mulf %412, %413 : vector<16x128xf32>
    %cst_138 = arith.constant -6.000000e-01 : f32
    %415 = vector.broadcast %cst_138 : f32 to vector<16x128xf32>
    %416 = arith.subf %332, %415 : vector<16x128xf32>
    %cst_139 = arith.constant 2.500000e+00 : f32
    %417 = vector.broadcast %cst_139 : f32 to vector<16x128xf32>
    %418 = arith.mulf %416, %417 : vector<16x128xf32>
    %cst_140 = arith.constant -2.000000e-01 : f32
    %419 = vector.broadcast %cst_140 : f32 to vector<16x128xf32>
    %420 = arith.subf %332, %419 : vector<16x128xf32>
    %cst_141 = arith.constant 2.500000e+00 : f32
    %421 = vector.broadcast %cst_141 : f32 to vector<16x128xf32>
    %422 = arith.mulf %420, %421 : vector<16x128xf32>
    %cst_142 = arith.constant 2.000000e-01 : f32
    %423 = vector.broadcast %cst_142 : f32 to vector<16x128xf32>
    %424 = arith.subf %332, %423 : vector<16x128xf32>
    %cst_143 = arith.constant 2.500000e+00 : f32
    %425 = vector.broadcast %cst_143 : f32 to vector<16x128xf32>
    %426 = arith.mulf %424, %425 : vector<16x128xf32>
    %cst_144 = arith.constant 6.000000e-01 : f32
    %427 = vector.broadcast %cst_144 : f32 to vector<16x128xf32>
    %428 = arith.subf %332, %427 : vector<16x128xf32>
    %cst_145 = arith.constant 2.500000e+00 : f32
    %429 = vector.broadcast %cst_145 : f32 to vector<16x128xf32>
    %430 = arith.mulf %428, %429 : vector<16x128xf32>
    %cst_146 = arith.constant 1.000000e+00 : f32
    %431 = vector.broadcast %cst_146 : f32 to vector<16x128xf32>
    %432 = arith.subf %332, %431 : vector<16x128xf32>
    %cst_147 = arith.constant 2.500000e+00 : f32
    %433 = vector.broadcast %cst_147 : f32 to vector<16x128xf32>
    %434 = arith.mulf %432, %433 : vector<16x128xf32>
    %cst_148 = arith.constant 1.400000e+00 : f32
    %435 = vector.broadcast %cst_148 : f32 to vector<16x128xf32>
    %436 = arith.subf %332, %435 : vector<16x128xf32>
    %cst_149 = arith.constant 2.500000e+00 : f32
    %437 = vector.broadcast %cst_149 : f32 to vector<16x128xf32>
    %438 = arith.mulf %436, %437 : vector<16x128xf32>
    %cst_150 = arith.constant 1.800000e+00 : f32
    %439 = vector.broadcast %cst_150 : f32 to vector<16x128xf32>
    %440 = arith.subf %332, %439 : vector<16x128xf32>
    %cst_151 = arith.constant 2.500000e+00 : f32
    %441 = vector.broadcast %cst_151 : f32 to vector<16x128xf32>
    %442 = arith.mulf %440, %441 : vector<16x128xf32>
    %443 = arith.mulf %402, %388 : vector<16x128xf32>
    %cst_152 = arith.constant 1.000000e+00 : f32
    %444 = vector.broadcast %cst_152 : f32 to vector<16x128xf32>
    %445 = arith.subf %444, %406 : vector<16x128xf32>
    %446 = arith.mulf %445, %389 : vector<16x128xf32>
    %447 = arith.addf %443, %446 : vector<16x128xf32>
    %448 = arith.mulf %406, %389 : vector<16x128xf32>
    %cst_153 = arith.constant 1.000000e+00 : f32
    %449 = vector.broadcast %cst_153 : f32 to vector<16x128xf32>
    %450 = arith.subf %449, %410 : vector<16x128xf32>
    %451 = arith.mulf %450, %390 : vector<16x128xf32>
    %452 = arith.addf %448, %451 : vector<16x128xf32>
    %453 = arith.mulf %410, %390 : vector<16x128xf32>
    %cst_154 = arith.constant 1.000000e+00 : f32
    %454 = vector.broadcast %cst_154 : f32 to vector<16x128xf32>
    %455 = arith.subf %454, %414 : vector<16x128xf32>
    %456 = arith.mulf %455, %391 : vector<16x128xf32>
    %457 = arith.addf %453, %456 : vector<16x128xf32>
    %458 = arith.mulf %414, %391 : vector<16x128xf32>
    %cst_155 = arith.constant 1.000000e+00 : f32
    %459 = vector.broadcast %cst_155 : f32 to vector<16x128xf32>
    %460 = arith.subf %459, %418 : vector<16x128xf32>
    %461 = arith.mulf %460, %392 : vector<16x128xf32>
    %462 = arith.addf %458, %461 : vector<16x128xf32>
    %463 = arith.mulf %418, %392 : vector<16x128xf32>
    %cst_156 = arith.constant 1.000000e+00 : f32
    %464 = vector.broadcast %cst_156 : f32 to vector<16x128xf32>
    %465 = arith.subf %464, %422 : vector<16x128xf32>
    %466 = arith.mulf %465, %393 : vector<16x128xf32>
    %467 = arith.addf %463, %466 : vector<16x128xf32>
    %468 = arith.mulf %422, %393 : vector<16x128xf32>
    %cst_157 = arith.constant 1.000000e+00 : f32
    %469 = vector.broadcast %cst_157 : f32 to vector<16x128xf32>
    %470 = arith.subf %469, %426 : vector<16x128xf32>
    %471 = arith.mulf %470, %394 : vector<16x128xf32>
    %472 = arith.addf %468, %471 : vector<16x128xf32>
    %473 = arith.mulf %426, %394 : vector<16x128xf32>
    %cst_158 = arith.constant 1.000000e+00 : f32
    %474 = vector.broadcast %cst_158 : f32 to vector<16x128xf32>
    %475 = arith.subf %474, %430 : vector<16x128xf32>
    %476 = arith.mulf %475, %395 : vector<16x128xf32>
    %477 = arith.addf %473, %476 : vector<16x128xf32>
    %478 = arith.mulf %430, %395 : vector<16x128xf32>
    %cst_159 = arith.constant 1.000000e+00 : f32
    %479 = vector.broadcast %cst_159 : f32 to vector<16x128xf32>
    %480 = arith.subf %479, %434 : vector<16x128xf32>
    %481 = arith.mulf %480, %396 : vector<16x128xf32>
    %482 = arith.addf %478, %481 : vector<16x128xf32>
    %483 = arith.mulf %434, %396 : vector<16x128xf32>
    %cst_160 = arith.constant 1.000000e+00 : f32
    %484 = vector.broadcast %cst_160 : f32 to vector<16x128xf32>
    %485 = arith.subf %484, %438 : vector<16x128xf32>
    %486 = arith.mulf %485, %397 : vector<16x128xf32>
    %487 = arith.addf %483, %486 : vector<16x128xf32>
    %488 = arith.mulf %438, %397 : vector<16x128xf32>
    %cst_161 = arith.constant 1.000000e+00 : f32
    %489 = vector.broadcast %cst_161 : f32 to vector<16x128xf32>
    %490 = arith.subf %489, %442 : vector<16x128xf32>
    %491 = arith.mulf %490, %398 : vector<16x128xf32>
    %492 = arith.addf %488, %491 : vector<16x128xf32>
    %cst_162 = arith.constant -2.200000e+00 : f32
    %493 = vector.broadcast %cst_162 : f32 to vector<16x128xf32>
    %494 = arith.subf %332, %493 : vector<16x128xf32>
    %cst_163 = arith.constant 1.250000e+00 : f32
    %495 = vector.broadcast %cst_163 : f32 to vector<16x128xf32>
    %496 = arith.mulf %494, %495 : vector<16x128xf32>
    %cst_164 = arith.constant -1.800000e+00 : f32
    %497 = vector.broadcast %cst_164 : f32 to vector<16x128xf32>
    %498 = arith.subf %332, %497 : vector<16x128xf32>
    %cst_165 = arith.constant 1.250000e+00 : f32
    %499 = vector.broadcast %cst_165 : f32 to vector<16x128xf32>
    %500 = arith.mulf %498, %499 : vector<16x128xf32>
    %cst_166 = arith.constant -1.400000e+00 : f32
    %501 = vector.broadcast %cst_166 : f32 to vector<16x128xf32>
    %502 = arith.subf %332, %501 : vector<16x128xf32>
    %cst_167 = arith.constant 1.250000e+00 : f32
    %503 = vector.broadcast %cst_167 : f32 to vector<16x128xf32>
    %504 = arith.mulf %502, %503 : vector<16x128xf32>
    %cst_168 = arith.constant -1.000000e+00 : f32
    %505 = vector.broadcast %cst_168 : f32 to vector<16x128xf32>
    %506 = arith.subf %332, %505 : vector<16x128xf32>
    %cst_169 = arith.constant 1.250000e+00 : f32
    %507 = vector.broadcast %cst_169 : f32 to vector<16x128xf32>
    %508 = arith.mulf %506, %507 : vector<16x128xf32>
    %cst_170 = arith.constant -6.000000e-01 : f32
    %509 = vector.broadcast %cst_170 : f32 to vector<16x128xf32>
    %510 = arith.subf %332, %509 : vector<16x128xf32>
    %cst_171 = arith.constant 1.250000e+00 : f32
    %511 = vector.broadcast %cst_171 : f32 to vector<16x128xf32>
    %512 = arith.mulf %510, %511 : vector<16x128xf32>
    %cst_172 = arith.constant -2.000000e-01 : f32
    %513 = vector.broadcast %cst_172 : f32 to vector<16x128xf32>
    %514 = arith.subf %332, %513 : vector<16x128xf32>
    %cst_173 = arith.constant 1.250000e+00 : f32
    %515 = vector.broadcast %cst_173 : f32 to vector<16x128xf32>
    %516 = arith.mulf %514, %515 : vector<16x128xf32>
    %cst_174 = arith.constant 2.000000e-01 : f32
    %517 = vector.broadcast %cst_174 : f32 to vector<16x128xf32>
    %518 = arith.subf %332, %517 : vector<16x128xf32>
    %cst_175 = arith.constant 1.250000e+00 : f32
    %519 = vector.broadcast %cst_175 : f32 to vector<16x128xf32>
    %520 = arith.mulf %518, %519 : vector<16x128xf32>
    %cst_176 = arith.constant 6.000000e-01 : f32
    %521 = vector.broadcast %cst_176 : f32 to vector<16x128xf32>
    %522 = arith.subf %332, %521 : vector<16x128xf32>
    %cst_177 = arith.constant 1.250000e+00 : f32
    %523 = vector.broadcast %cst_177 : f32 to vector<16x128xf32>
    %524 = arith.mulf %522, %523 : vector<16x128xf32>
    %cst_178 = arith.constant 1.000000e+00 : f32
    %525 = vector.broadcast %cst_178 : f32 to vector<16x128xf32>
    %526 = arith.subf %332, %525 : vector<16x128xf32>
    %cst_179 = arith.constant 1.250000e+00 : f32
    %527 = vector.broadcast %cst_179 : f32 to vector<16x128xf32>
    %528 = arith.mulf %526, %527 : vector<16x128xf32>
    %cst_180 = arith.constant 1.400000e+00 : f32
    %529 = vector.broadcast %cst_180 : f32 to vector<16x128xf32>
    %530 = arith.subf %332, %529 : vector<16x128xf32>
    %cst_181 = arith.constant 1.250000e+00 : f32
    %531 = vector.broadcast %cst_181 : f32 to vector<16x128xf32>
    %532 = arith.mulf %530, %531 : vector<16x128xf32>
    %533 = arith.mulf %496, %447 : vector<16x128xf32>
    %cst_182 = arith.constant 1.000000e+00 : f32
    %534 = vector.broadcast %cst_182 : f32 to vector<16x128xf32>
    %535 = arith.subf %534, %500 : vector<16x128xf32>
    %536 = arith.mulf %535, %452 : vector<16x128xf32>
    %537 = arith.addf %533, %536 : vector<16x128xf32>
    %538 = arith.mulf %500, %452 : vector<16x128xf32>
    %cst_183 = arith.constant 1.000000e+00 : f32
    %539 = vector.broadcast %cst_183 : f32 to vector<16x128xf32>
    %540 = arith.subf %539, %504 : vector<16x128xf32>
    %541 = arith.mulf %540, %457 : vector<16x128xf32>
    %542 = arith.addf %538, %541 : vector<16x128xf32>
    %543 = arith.mulf %504, %457 : vector<16x128xf32>
    %cst_184 = arith.constant 1.000000e+00 : f32
    %544 = vector.broadcast %cst_184 : f32 to vector<16x128xf32>
    %545 = arith.subf %544, %508 : vector<16x128xf32>
    %546 = arith.mulf %545, %462 : vector<16x128xf32>
    %547 = arith.addf %543, %546 : vector<16x128xf32>
    %548 = arith.mulf %508, %462 : vector<16x128xf32>
    %cst_185 = arith.constant 1.000000e+00 : f32
    %549 = vector.broadcast %cst_185 : f32 to vector<16x128xf32>
    %550 = arith.subf %549, %512 : vector<16x128xf32>
    %551 = arith.mulf %550, %467 : vector<16x128xf32>
    %552 = arith.addf %548, %551 : vector<16x128xf32>
    %553 = arith.mulf %512, %467 : vector<16x128xf32>
    %cst_186 = arith.constant 1.000000e+00 : f32
    %554 = vector.broadcast %cst_186 : f32 to vector<16x128xf32>
    %555 = arith.subf %554, %516 : vector<16x128xf32>
    %556 = arith.mulf %555, %472 : vector<16x128xf32>
    %557 = arith.addf %553, %556 : vector<16x128xf32>
    %558 = arith.mulf %516, %472 : vector<16x128xf32>
    %cst_187 = arith.constant 1.000000e+00 : f32
    %559 = vector.broadcast %cst_187 : f32 to vector<16x128xf32>
    %560 = arith.subf %559, %520 : vector<16x128xf32>
    %561 = arith.mulf %560, %477 : vector<16x128xf32>
    %562 = arith.addf %558, %561 : vector<16x128xf32>
    %563 = arith.mulf %520, %477 : vector<16x128xf32>
    %cst_188 = arith.constant 1.000000e+00 : f32
    %564 = vector.broadcast %cst_188 : f32 to vector<16x128xf32>
    %565 = arith.subf %564, %524 : vector<16x128xf32>
    %566 = arith.mulf %565, %482 : vector<16x128xf32>
    %567 = arith.addf %563, %566 : vector<16x128xf32>
    %568 = arith.mulf %524, %482 : vector<16x128xf32>
    %cst_189 = arith.constant 1.000000e+00 : f32
    %569 = vector.broadcast %cst_189 : f32 to vector<16x128xf32>
    %570 = arith.subf %569, %528 : vector<16x128xf32>
    %571 = arith.mulf %570, %487 : vector<16x128xf32>
    %572 = arith.addf %568, %571 : vector<16x128xf32>
    %573 = arith.mulf %528, %487 : vector<16x128xf32>
    %cst_190 = arith.constant 1.000000e+00 : f32
    %574 = vector.broadcast %cst_190 : f32 to vector<16x128xf32>
    %575 = arith.subf %574, %532 : vector<16x128xf32>
    %576 = arith.mulf %575, %492 : vector<16x128xf32>
    %577 = arith.addf %573, %576 : vector<16x128xf32>
    %cst_191 = arith.constant -2.200000e+00 : f32
    %578 = vector.broadcast %cst_191 : f32 to vector<16x128xf32>
    %579 = arith.subf %332, %578 : vector<16x128xf32>
    %cst_192 = arith.constant 0.833333313 : f32
    %580 = vector.broadcast %cst_192 : f32 to vector<16x128xf32>
    %581 = arith.mulf %579, %580 : vector<16x128xf32>
    %cst_193 = arith.constant -1.800000e+00 : f32
    %582 = vector.broadcast %cst_193 : f32 to vector<16x128xf32>
    %583 = arith.subf %332, %582 : vector<16x128xf32>
    %cst_194 = arith.constant 0.833333313 : f32
    %584 = vector.broadcast %cst_194 : f32 to vector<16x128xf32>
    %585 = arith.mulf %583, %584 : vector<16x128xf32>
    %cst_195 = arith.constant -1.400000e+00 : f32
    %586 = vector.broadcast %cst_195 : f32 to vector<16x128xf32>
    %587 = arith.subf %332, %586 : vector<16x128xf32>
    %cst_196 = arith.constant 0.833333313 : f32
    %588 = vector.broadcast %cst_196 : f32 to vector<16x128xf32>
    %589 = arith.mulf %587, %588 : vector<16x128xf32>
    %cst_197 = arith.constant -1.000000e+00 : f32
    %590 = vector.broadcast %cst_197 : f32 to vector<16x128xf32>
    %591 = arith.subf %332, %590 : vector<16x128xf32>
    %cst_198 = arith.constant 0.833333313 : f32
    %592 = vector.broadcast %cst_198 : f32 to vector<16x128xf32>
    %593 = arith.mulf %591, %592 : vector<16x128xf32>
    %cst_199 = arith.constant -6.000000e-01 : f32
    %594 = vector.broadcast %cst_199 : f32 to vector<16x128xf32>
    %595 = arith.subf %332, %594 : vector<16x128xf32>
    %cst_200 = arith.constant 0.833333313 : f32
    %596 = vector.broadcast %cst_200 : f32 to vector<16x128xf32>
    %597 = arith.mulf %595, %596 : vector<16x128xf32>
    %cst_201 = arith.constant -2.000000e-01 : f32
    %598 = vector.broadcast %cst_201 : f32 to vector<16x128xf32>
    %599 = arith.subf %332, %598 : vector<16x128xf32>
    %cst_202 = arith.constant 0.833333313 : f32
    %600 = vector.broadcast %cst_202 : f32 to vector<16x128xf32>
    %601 = arith.mulf %599, %600 : vector<16x128xf32>
    %cst_203 = arith.constant 2.000000e-01 : f32
    %602 = vector.broadcast %cst_203 : f32 to vector<16x128xf32>
    %603 = arith.subf %332, %602 : vector<16x128xf32>
    %cst_204 = arith.constant 0.833333313 : f32
    %604 = vector.broadcast %cst_204 : f32 to vector<16x128xf32>
    %605 = arith.mulf %603, %604 : vector<16x128xf32>
    %cst_205 = arith.constant 6.000000e-01 : f32
    %606 = vector.broadcast %cst_205 : f32 to vector<16x128xf32>
    %607 = arith.subf %332, %606 : vector<16x128xf32>
    %cst_206 = arith.constant 0.833333313 : f32
    %608 = vector.broadcast %cst_206 : f32 to vector<16x128xf32>
    %609 = arith.mulf %607, %608 : vector<16x128xf32>
    %cst_207 = arith.constant 1.000000e+00 : f32
    %610 = vector.broadcast %cst_207 : f32 to vector<16x128xf32>
    %611 = arith.subf %332, %610 : vector<16x128xf32>
    %cst_208 = arith.constant 0.833333313 : f32
    %612 = vector.broadcast %cst_208 : f32 to vector<16x128xf32>
    %613 = arith.mulf %611, %612 : vector<16x128xf32>
    %614 = arith.mulf %581, %537 : vector<16x128xf32>
    %cst_209 = arith.constant 1.000000e+00 : f32
    %615 = vector.broadcast %cst_209 : f32 to vector<16x128xf32>
    %616 = arith.subf %615, %585 : vector<16x128xf32>
    %617 = arith.mulf %616, %542 : vector<16x128xf32>
    %618 = arith.addf %614, %617 : vector<16x128xf32>
    %619 = arith.mulf %585, %542 : vector<16x128xf32>
    %cst_210 = arith.constant 1.000000e+00 : f32
    %620 = vector.broadcast %cst_210 : f32 to vector<16x128xf32>
    %621 = arith.subf %620, %589 : vector<16x128xf32>
    %622 = arith.mulf %621, %547 : vector<16x128xf32>
    %623 = arith.addf %619, %622 : vector<16x128xf32>
    %624 = arith.mulf %589, %547 : vector<16x128xf32>
    %cst_211 = arith.constant 1.000000e+00 : f32
    %625 = vector.broadcast %cst_211 : f32 to vector<16x128xf32>
    %626 = arith.subf %625, %593 : vector<16x128xf32>
    %627 = arith.mulf %626, %552 : vector<16x128xf32>
    %628 = arith.addf %624, %627 : vector<16x128xf32>
    %629 = arith.mulf %593, %552 : vector<16x128xf32>
    %cst_212 = arith.constant 1.000000e+00 : f32
    %630 = vector.broadcast %cst_212 : f32 to vector<16x128xf32>
    %631 = arith.subf %630, %597 : vector<16x128xf32>
    %632 = arith.mulf %631, %557 : vector<16x128xf32>
    %633 = arith.addf %629, %632 : vector<16x128xf32>
    %634 = arith.mulf %597, %557 : vector<16x128xf32>
    %cst_213 = arith.constant 1.000000e+00 : f32
    %635 = vector.broadcast %cst_213 : f32 to vector<16x128xf32>
    %636 = arith.subf %635, %601 : vector<16x128xf32>
    %637 = arith.mulf %636, %562 : vector<16x128xf32>
    %638 = arith.addf %634, %637 : vector<16x128xf32>
    %639 = arith.mulf %601, %562 : vector<16x128xf32>
    %cst_214 = arith.constant 1.000000e+00 : f32
    %640 = vector.broadcast %cst_214 : f32 to vector<16x128xf32>
    %641 = arith.subf %640, %605 : vector<16x128xf32>
    %642 = arith.mulf %641, %567 : vector<16x128xf32>
    %643 = arith.addf %639, %642 : vector<16x128xf32>
    %644 = arith.mulf %605, %567 : vector<16x128xf32>
    %cst_215 = arith.constant 1.000000e+00 : f32
    %645 = vector.broadcast %cst_215 : f32 to vector<16x128xf32>
    %646 = arith.subf %645, %609 : vector<16x128xf32>
    %647 = arith.mulf %646, %572 : vector<16x128xf32>
    %648 = arith.addf %644, %647 : vector<16x128xf32>
    %649 = arith.mulf %609, %572 : vector<16x128xf32>
    %cst_216 = arith.constant 1.000000e+00 : f32
    %650 = vector.broadcast %cst_216 : f32 to vector<16x128xf32>
    %651 = arith.subf %650, %613 : vector<16x128xf32>
    %652 = arith.mulf %651, %577 : vector<16x128xf32>
    %653 = arith.addf %649, %652 : vector<16x128xf32>
    %c16_217 = arith.constant 16 : index
    %c0_218 = arith.constant 0 : index
    %654 = vector.load %arg7[%c16_217, %c0_218] : memref<288x128xf32, #tpu.memory_space<vmem>>, vector<16x128xf32>
    tpu.vector_store %arg7[%c16_217, %c0_218], %618 {strides = array<i32>} : memref<288x128xf32, #tpu.memory_space<vmem>>, vector<16x128xf32>,
    %c32_219 = arith.constant 32 : index
    %c0_220 = arith.constant 0 : index
    %655 = vector.load %arg7[%c32_219, %c0_220] : memref<288x128xf32, #tpu.memory_space<vmem>>, vector<16x128xf32>
    tpu.vector_store %arg7[%c32_219, %c0_220], %623 {strides = array<i32>} : memref<288x128xf32, #tpu.memory_space<vmem>>, vector<16x128xf32>,
    %c48 = arith.constant 48 : index
    %c0_221 = arith.constant 0 : index
    %656 = vector.load %arg7[%c48, %c0_221] : memref<288x128xf32, #tpu.memory_space<vmem>>, vector<16x128xf32>
    tpu.vector_store %arg7[%c48, %c0_221], %628 {strides = array<i32>} : memref<288x128xf32, #tpu.memory_space<vmem>>, vector<16x128xf32>,
    %c64 = arith.constant 64 : index
    %c0_222 = arith.constant 0 : index
    %657 = vector.load %arg7[%c64, %c0_222] : memref<288x128xf32, #tpu.memory_space<vmem>>, vector<16x128xf32>
    tpu.vector_store %arg7[%c64, %c0_222], %633 {strides = array<i32>} : memref<288x128xf32, #tpu.memory_space<vmem>>, vector<16x128xf32>,
    %c80 = arith.constant 80 : index
    %c0_223 = arith.constant 0 : index
    %658 = vector.load %arg7[%c80, %c0_223] : memref<288x128xf32, #tpu.memory_space<vmem>>, vector<16x128xf32>
    tpu.vector_store %arg7[%c80, %c0_223], %638 {strides = array<i32>} : memref<288x128xf32, #tpu.memory_space<vmem>>, vector<16x128xf32>,
    %c96 = arith.constant 96 : index
    %c0_224 = arith.constant 0 : index
    %659 = vector.load %arg7[%c96, %c0_224] : memref<288x128xf32, #tpu.memory_space<vmem>>, vector<16x128xf32>
    tpu.vector_store %arg7[%c96, %c0_224], %643 {strides = array<i32>} : memref<288x128xf32, #tpu.memory_space<vmem>>, vector<16x128xf32>,
    %c112 = arith.constant 112 : index
    %c0_225 = arith.constant 0 : index
    %660 = vector.load %arg7[%c112, %c0_225] : memref<288x128xf32, #tpu.memory_space<vmem>>, vector<16x128xf32>
    tpu.vector_store %arg7[%c112, %c0_225], %648 {strides = array<i32>} : memref<288x128xf32, #tpu.memory_space<vmem>>, vector<16x128xf32>,
    %c128 = arith.constant 128 : index
    %c0_226 = arith.constant 0 : index
    %661 = vector.load %arg7[%c128, %c0_226] : memref<288x128xf32, #tpu.memory_space<vmem>>, vector<16x128xf32>
    tpu.vector_store %arg7[%c128, %c0_226], %653 {strides = array<i32>} : memref<288x128xf32, #tpu.memory_space<vmem>>, vector<16x128xf32>,
    %c0_227 = arith.constant 0 : index
    %c0_228 = arith.constant 0 : index
    %662 = vector.load %arg3[%c0_227, %c0_228] : memref<32x144xf32, #tpu.memory_space<vmem>>, vector<32x144xf32>
    %c0_229 = arith.constant 0 : index
    %c0_230 = arith.constant 0 : index
    %663 = vector.load %arg7[%c0_229, %c0_230] : memref<288x128xf32, #tpu.memory_space<vmem>>, vector<144x128xf32>
    %cst_231 = arith.constant dense<0.000000e+00> : vector<32x128xf32>
    %664 = tpu.matmul %662, %663, %cst_231 {dimension_numbers = #tpu.dot_dimension_numbers<[1], [0], [0], [1], [0, 0, 1, 1], [], []>} : vector<32x144xf32>, vector<144x128xf32>, vector<32x128xf32> -> vector<32x128xf32>
    %665 = arith.negf %664 : vector<32x128xf32>
    %666 = math.exp %665 : vector<32x128xf32>
    %cst_232 = arith.constant 1.000000e+00 : f32
    %667 = vector.broadcast %cst_232 : f32 to vector<32x128xf32>
    %668 = arith.addf %667, %666 : vector<32x128xf32>
    %669 = arith.divf %667, %668 : vector<32x128xf32>
    %670 = arith.mulf %664, %669 : vector<32x128xf32>
    %c0_233 = arith.constant 0 : index
    %c0_234 = arith.constant 0 : index
    %671 = vector.load %arg7[%c0_233, %c0_234] : memref<288x128xf32, #tpu.memory_space<vmem>>, vector<32x128xf32>
    tpu.vector_store %arg7[%c0_233, %c0_234], %670 {strides = array<i32>} : memref<288x128xf32, #tpu.memory_space<vmem>>, vector<32x128xf32>,
    %cst_235 = arith.constant -2.200000e+00 : f32
    %672 = vector.broadcast %cst_235 : f32 to vector<32x128xf32>
    %673 = arith.cmpf oge, %664, %672 : vector<32x128xf32>
    %674 = arith.extui %673 : vector<32x128xi1> to vector<32x128xi32>
    %675 = arith.sitofp %674 : vector<32x128xi32> to vector<32x128xf32>
    %cst_236 = arith.constant -1.800000e+00 : f32
    %676 = vector.broadcast %cst_236 : f32 to vector<32x128xf32>
    %677 = arith.cmpf oge, %664, %676 : vector<32x128xf32>
    %678 = arith.extui %677 : vector<32x128xi1> to vector<32x128xi32>
    %679 = arith.sitofp %678 : vector<32x128xi32> to vector<32x128xf32>
    %cst_237 = arith.constant -1.400000e+00 : f32
    %680 = vector.broadcast %cst_237 : f32 to vector<32x128xf32>
    %681 = arith.cmpf oge, %664, %680 : vector<32x128xf32>
    %682 = arith.extui %681 : vector<32x128xi1> to vector<32x128xi32>
    %683 = arith.sitofp %682 : vector<32x128xi32> to vector<32x128xf32>
    %cst_238 = arith.constant -1.000000e+00 : f32
    %684 = vector.broadcast %cst_238 : f32 to vector<32x128xf32>
    %685 = arith.cmpf oge, %664, %684 : vector<32x128xf32>
    %686 = arith.extui %685 : vector<32x128xi1> to vector<32x128xi32>
    %687 = arith.sitofp %686 : vector<32x128xi32> to vector<32x128xf32>
    %cst_239 = arith.constant -6.000000e-01 : f32
    %688 = vector.broadcast %cst_239 : f32 to vector<32x128xf32>
    %689 = arith.cmpf oge, %664, %688 : vector<32x128xf32>
    %690 = arith.extui %689 : vector<32x128xi1> to vector<32x128xi32>
    %691 = arith.sitofp %690 : vector<32x128xi32> to vector<32x128xf32>
    %cst_240 = arith.constant -2.000000e-01 : f32
    %692 = vector.broadcast %cst_240 : f32 to vector<32x128xf32>
    %693 = arith.cmpf oge, %664, %692 : vector<32x128xf32>
    %694 = arith.extui %693 : vector<32x128xi1> to vector<32x128xi32>
    %695 = arith.sitofp %694 : vector<32x128xi32> to vector<32x128xf32>
    %cst_241 = arith.constant 2.000000e-01 : f32
    %696 = vector.broadcast %cst_241 : f32 to vector<32x128xf32>
    %697 = arith.cmpf oge, %664, %696 : vector<32x128xf32>
    %698 = arith.extui %697 : vector<32x128xi1> to vector<32x128xi32>
    %699 = arith.sitofp %698 : vector<32x128xi32> to vector<32x128xf32>
    %cst_242 = arith.constant 6.000000e-01 : f32
    %700 = vector.broadcast %cst_242 : f32 to vector<32x128xf32>
    %701 = arith.cmpf oge, %664, %700 : vector<32x128xf32>
    %702 = arith.extui %701 : vector<32x128xi1> to vector<32x128xi32>
    %703 = arith.sitofp %702 : vector<32x128xi32> to vector<32x128xf32>
    %cst_243 = arith.constant 1.000000e+00 : f32
    %704 = vector.broadcast %cst_243 : f32 to vector<32x128xf32>
    %705 = arith.cmpf oge, %664, %704 : vector<32x128xf32>
    %706 = arith.extui %705 : vector<32x128xi1> to vector<32x128xi32>
    %707 = arith.sitofp %706 : vector<32x128xi32> to vector<32x128xf32>
    %cst_244 = arith.constant 1.400000e+00 : f32
    %708 = vector.broadcast %cst_244 : f32 to vector<32x128xf32>
    %709 = arith.cmpf oge, %664, %708 : vector<32x128xf32>
    %710 = arith.extui %709 : vector<32x128xi1> to vector<32x128xi32>
    %711 = arith.sitofp %710 : vector<32x128xi32> to vector<32x128xf32>
    %cst_245 = arith.constant 1.800000e+00 : f32
    %712 = vector.broadcast %cst_245 : f32 to vector<32x128xf32>
    %713 = arith.cmpf oge, %664, %712 : vector<32x128xf32>
    %714 = arith.extui %713 : vector<32x128xi1> to vector<32x128xi32>
    %715 = arith.sitofp %714 : vector<32x128xi32> to vector<32x128xf32>
    %cst_246 = arith.constant 2.200000e+00 : f32
    %716 = vector.broadcast %cst_246 : f32 to vector<32x128xf32>
    %717 = arith.cmpf oge, %664, %716 : vector<32x128xf32>
    %718 = arith.extui %717 : vector<32x128xi1> to vector<32x128xi32>
    %719 = arith.sitofp %718 : vector<32x128xi32> to vector<32x128xf32>
    %720 = arith.subf %675, %679 : vector<32x128xf32>
    %721 = arith.subf %679, %683 : vector<32x128xf32>
    %722 = arith.subf %683, %687 : vector<32x128xf32>
    %723 = arith.subf %687, %691 : vector<32x128xf32>
    %724 = arith.subf %691, %695 : vector<32x128xf32>
    %725 = arith.subf %695, %699 : vector<32x128xf32>
    %726 = arith.subf %699, %703 : vector<32x128xf32>
    %727 = arith.subf %703, %707 : vector<32x128xf32>
    %728 = arith.subf %707, %711 : vector<32x128xf32>
    %729 = arith.subf %711, %715 : vector<32x128xf32>
    %730 = arith.subf %715, %719 : vector<32x128xf32>
    %cst_247 = arith.constant -2.200000e+00 : f32
    %731 = vector.broadcast %cst_247 : f32 to vector<32x128xf32>
    %732 = arith.subf %664, %731 : vector<32x128xf32>
    %cst_248 = arith.constant 2.500000e+00 : f32
    %733 = vector.broadcast %cst_248 : f32 to vector<32x128xf32>
    %734 = arith.mulf %732, %733 : vector<32x128xf32>
    %cst_249 = arith.constant -1.800000e+00 : f32
    %735 = vector.broadcast %cst_249 : f32 to vector<32x128xf32>
    %736 = arith.subf %664, %735 : vector<32x128xf32>
    %cst_250 = arith.constant 2.500000e+00 : f32
    %737 = vector.broadcast %cst_250 : f32 to vector<32x128xf32>
    %738 = arith.mulf %736, %737 : vector<32x128xf32>
    %cst_251 = arith.constant -1.400000e+00 : f32
    %739 = vector.broadcast %cst_251 : f32 to vector<32x128xf32>
    %740 = arith.subf %664, %739 : vector<32x128xf32>
    %cst_252 = arith.constant 2.500000e+00 : f32
    %741 = vector.broadcast %cst_252 : f32 to vector<32x128xf32>
    %742 = arith.mulf %740, %741 : vector<32x128xf32>
    %cst_253 = arith.constant -1.000000e+00 : f32
    %743 = vector.broadcast %cst_253 : f32 to vector<32x128xf32>
    %744 = arith.subf %664, %743 : vector<32x128xf32>
    %cst_254 = arith.constant 2.500000e+00 : f32
    %745 = vector.broadcast %cst_254 : f32 to vector<32x128xf32>
    %746 = arith.mulf %744, %745 : vector<32x128xf32>
    %cst_255 = arith.constant -6.000000e-01 : f32
    %747 = vector.broadcast %cst_255 : f32 to vector<32x128xf32>
    %748 = arith.subf %664, %747 : vector<32x128xf32>
    %cst_256 = arith.constant 2.500000e+00 : f32
    %749 = vector.broadcast %cst_256 : f32 to vector<32x128xf32>
    %750 = arith.mulf %748, %749 : vector<32x128xf32>
    %cst_257 = arith.constant -2.000000e-01 : f32
    %751 = vector.broadcast %cst_257 : f32 to vector<32x128xf32>
    %752 = arith.subf %664, %751 : vector<32x128xf32>
    %cst_258 = arith.constant 2.500000e+00 : f32
    %753 = vector.broadcast %cst_258 : f32 to vector<32x128xf32>
    %754 = arith.mulf %752, %753 : vector<32x128xf32>
    %cst_259 = arith.constant 2.000000e-01 : f32
    %755 = vector.broadcast %cst_259 : f32 to vector<32x128xf32>
    %756 = arith.subf %664, %755 : vector<32x128xf32>
    %cst_260 = arith.constant 2.500000e+00 : f32
    %757 = vector.broadcast %cst_260 : f32 to vector<32x128xf32>
    %758 = arith.mulf %756, %757 : vector<32x128xf32>
    %cst_261 = arith.constant 6.000000e-01 : f32
    %759 = vector.broadcast %cst_261 : f32 to vector<32x128xf32>
    %760 = arith.subf %664, %759 : vector<32x128xf32>
    %cst_262 = arith.constant 2.500000e+00 : f32
    %761 = vector.broadcast %cst_262 : f32 to vector<32x128xf32>
    %762 = arith.mulf %760, %761 : vector<32x128xf32>
    %cst_263 = arith.constant 1.000000e+00 : f32
    %763 = vector.broadcast %cst_263 : f32 to vector<32x128xf32>
    %764 = arith.subf %664, %763 : vector<32x128xf32>
    %cst_264 = arith.constant 2.500000e+00 : f32
    %765 = vector.broadcast %cst_264 : f32 to vector<32x128xf32>
    %766 = arith.mulf %764, %765 : vector<32x128xf32>
    %cst_265 = arith.constant 1.400000e+00 : f32
    %767 = vector.broadcast %cst_265 : f32 to vector<32x128xf32>
    %768 = arith.subf %664, %767 : vector<32x128xf32>
    %cst_266 = arith.constant 2.500000e+00 : f32
    %769 = vector.broadcast %cst_266 : f32 to vector<32x128xf32>
    %770 = arith.mulf %768, %769 : vector<32x128xf32>
    %cst_267 = arith.constant 1.800000e+00 : f32
    %771 = vector.broadcast %cst_267 : f32 to vector<32x128xf32>
    %772 = arith.subf %664, %771 : vector<32x128xf32>
    %cst_268 = arith.constant 2.500000e+00 : f32
    %773 = vector.broadcast %cst_268 : f32 to vector<32x128xf32>
    %774 = arith.mulf %772, %773 : vector<32x128xf32>
    %775 = arith.mulf %734, %720 : vector<32x128xf32>
    %cst_269 = arith.constant 1.000000e+00 : f32
    %776 = vector.broadcast %cst_269 : f32 to vector<32x128xf32>
    %777 = arith.subf %776, %738 : vector<32x128xf32>
    %778 = arith.mulf %777, %721 : vector<32x128xf32>
    %779 = arith.addf %775, %778 : vector<32x128xf32>
    %780 = arith.mulf %738, %721 : vector<32x128xf32>
    %cst_270 = arith.constant 1.000000e+00 : f32
    %781 = vector.broadcast %cst_270 : f32 to vector<32x128xf32>
    %782 = arith.subf %781, %742 : vector<32x128xf32>
    %783 = arith.mulf %782, %722 : vector<32x128xf32>
    %784 = arith.addf %780, %783 : vector<32x128xf32>
    %785 = arith.mulf %742, %722 : vector<32x128xf32>
    %cst_271 = arith.constant 1.000000e+00 : f32
    %786 = vector.broadcast %cst_271 : f32 to vector<32x128xf32>
    %787 = arith.subf %786, %746 : vector<32x128xf32>
    %788 = arith.mulf %787, %723 : vector<32x128xf32>
    %789 = arith.addf %785, %788 : vector<32x128xf32>
    %790 = arith.mulf %746, %723 : vector<32x128xf32>
    %cst_272 = arith.constant 1.000000e+00 : f32
    %791 = vector.broadcast %cst_272 : f32 to vector<32x128xf32>
    %792 = arith.subf %791, %750 : vector<32x128xf32>
    %793 = arith.mulf %792, %724 : vector<32x128xf32>
    %794 = arith.addf %790, %793 : vector<32x128xf32>
    %795 = arith.mulf %750, %724 : vector<32x128xf32>
    %cst_273 = arith.constant 1.000000e+00 : f32
    %796 = vector.broadcast %cst_273 : f32 to vector<32x128xf32>
    %797 = arith.subf %796, %754 : vector<32x128xf32>
    %798 = arith.mulf %797, %725 : vector<32x128xf32>
    %799 = arith.addf %795, %798 : vector<32x128xf32>
    %800 = arith.mulf %754, %725 : vector<32x128xf32>
    %cst_274 = arith.constant 1.000000e+00 : f32
    %801 = vector.broadcast %cst_274 : f32 to vector<32x128xf32>
    %802 = arith.subf %801, %758 : vector<32x128xf32>
    %803 = arith.mulf %802, %726 : vector<32x128xf32>
    %804 = arith.addf %800, %803 : vector<32x128xf32>
    %805 = arith.mulf %758, %726 : vector<32x128xf32>
    %cst_275 = arith.constant 1.000000e+00 : f32
    %806 = vector.broadcast %cst_275 : f32 to vector<32x128xf32>
    %807 = arith.subf %806, %762 : vector<32x128xf32>
    %808 = arith.mulf %807, %727 : vector<32x128xf32>
    %809 = arith.addf %805, %808 : vector<32x128xf32>
    %810 = arith.mulf %762, %727 : vector<32x128xf32>
    %cst_276 = arith.constant 1.000000e+00 : f32
    %811 = vector.broadcast %cst_276 : f32 to vector<32x128xf32>
    %812 = arith.subf %811, %766 : vector<32x128xf32>
    %813 = arith.mulf %812, %728 : vector<32x128xf32>
    %814 = arith.addf %810, %813 : vector<32x128xf32>
    %815 = arith.mulf %766, %728 : vector<32x128xf32>
    %cst_277 = arith.constant 1.000000e+00 : f32
    %816 = vector.broadcast %cst_277 : f32 to vector<32x128xf32>
    %817 = arith.subf %816, %770 : vector<32x128xf32>
    %818 = arith.mulf %817, %729 : vector<32x128xf32>
    %819 = arith.addf %815, %818 : vector<32x128xf32>
    %820 = arith.mulf %770, %729 : vector<32x128xf32>
    %cst_278 = arith.constant 1.000000e+00 : f32
    %821 = vector.broadcast %cst_278 : f32 to vector<32x128xf32>
    %822 = arith.subf %821, %774 : vector<32x128xf32>
    %823 = arith.mulf %822, %730 : vector<32x128xf32>
    %824 = arith.addf %820, %823 : vector<32x128xf32>
    %cst_279 = arith.constant -2.200000e+00 : f32
    %825 = vector.broadcast %cst_279 : f32 to vector<32x128xf32>
    %826 = arith.subf %664, %825 : vector<32x128xf32>
    %cst_280 = arith.constant 1.250000e+00 : f32
    %827 = vector.broadcast %cst_280 : f32 to vector<32x128xf32>
    %828 = arith.mulf %826, %827 : vector<32x128xf32>
    %cst_281 = arith.constant -1.800000e+00 : f32
    %829 = vector.broadcast %cst_281 : f32 to vector<32x128xf32>
    %830 = arith.subf %664, %829 : vector<32x128xf32>
    %cst_282 = arith.constant 1.250000e+00 : f32
    %831 = vector.broadcast %cst_282 : f32 to vector<32x128xf32>
    %832 = arith.mulf %830, %831 : vector<32x128xf32>
    %cst_283 = arith.constant -1.400000e+00 : f32
    %833 = vector.broadcast %cst_283 : f32 to vector<32x128xf32>
    %834 = arith.subf %664, %833 : vector<32x128xf32>
    %cst_284 = arith.constant 1.250000e+00 : f32
    %835 = vector.broadcast %cst_284 : f32 to vector<32x128xf32>
    %836 = arith.mulf %834, %835 : vector<32x128xf32>
    %cst_285 = arith.constant -1.000000e+00 : f32
    %837 = vector.broadcast %cst_285 : f32 to vector<32x128xf32>
    %838 = arith.subf %664, %837 : vector<32x128xf32>
    %cst_286 = arith.constant 1.250000e+00 : f32
    %839 = vector.broadcast %cst_286 : f32 to vector<32x128xf32>
    %840 = arith.mulf %838, %839 : vector<32x128xf32>
    %cst_287 = arith.constant -6.000000e-01 : f32
    %841 = vector.broadcast %cst_287 : f32 to vector<32x128xf32>
    %842 = arith.subf %664, %841 : vector<32x128xf32>
    %cst_288 = arith.constant 1.250000e+00 : f32
    %843 = vector.broadcast %cst_288 : f32 to vector<32x128xf32>
    %844 = arith.mulf %842, %843 : vector<32x128xf32>
    %cst_289 = arith.constant -2.000000e-01 : f32
    %845 = vector.broadcast %cst_289 : f32 to vector<32x128xf32>
    %846 = arith.subf %664, %845 : vector<32x128xf32>
    %cst_290 = arith.constant 1.250000e+00 : f32
    %847 = vector.broadcast %cst_290 : f32 to vector<32x128xf32>
    %848 = arith.mulf %846, %847 : vector<32x128xf32>
    %cst_291 = arith.constant 2.000000e-01 : f32
    %849 = vector.broadcast %cst_291 : f32 to vector<32x128xf32>
    %850 = arith.subf %664, %849 : vector<32x128xf32>
    %cst_292 = arith.constant 1.250000e+00 : f32
    %851 = vector.broadcast %cst_292 : f32 to vector<32x128xf32>
    %852 = arith.mulf %850, %851 : vector<32x128xf32>
    %cst_293 = arith.constant 6.000000e-01 : f32
    %853 = vector.broadcast %cst_293 : f32 to vector<32x128xf32>
    %854 = arith.subf %664, %853 : vector<32x128xf32>
    %cst_294 = arith.constant 1.250000e+00 : f32
    %855 = vector.broadcast %cst_294 : f32 to vector<32x128xf32>
    %856 = arith.mulf %854, %855 : vector<32x128xf32>
    %cst_295 = arith.constant 1.000000e+00 : f32
    %857 = vector.broadcast %cst_295 : f32 to vector<32x128xf32>
    %858 = arith.subf %664, %857 : vector<32x128xf32>
    %cst_296 = arith.constant 1.250000e+00 : f32
    %859 = vector.broadcast %cst_296 : f32 to vector<32x128xf32>
    %860 = arith.mulf %858, %859 : vector<32x128xf32>
    %cst_297 = arith.constant 1.400000e+00 : f32
    %861 = vector.broadcast %cst_297 : f32 to vector<32x128xf32>
    %862 = arith.subf %664, %861 : vector<32x128xf32>
    %cst_298 = arith.constant 1.250000e+00 : f32
    %863 = vector.broadcast %cst_298 : f32 to vector<32x128xf32>
    %864 = arith.mulf %862, %863 : vector<32x128xf32>
    %865 = arith.mulf %828, %779 : vector<32x128xf32>
    %cst_299 = arith.constant 1.000000e+00 : f32
    %866 = vector.broadcast %cst_299 : f32 to vector<32x128xf32>
    %867 = arith.subf %866, %832 : vector<32x128xf32>
    %868 = arith.mulf %867, %784 : vector<32x128xf32>
    %869 = arith.addf %865, %868 : vector<32x128xf32>
    %870 = arith.mulf %832, %784 : vector<32x128xf32>
    %cst_300 = arith.constant 1.000000e+00 : f32
    %871 = vector.broadcast %cst_300 : f32 to vector<32x128xf32>
    %872 = arith.subf %871, %836 : vector<32x128xf32>
    %873 = arith.mulf %872, %789 : vector<32x128xf32>
    %874 = arith.addf %870, %873 : vector<32x128xf32>
    %875 = arith.mulf %836, %789 : vector<32x128xf32>
    %cst_301 = arith.constant 1.000000e+00 : f32
    %876 = vector.broadcast %cst_301 : f32 to vector<32x128xf32>
    %877 = arith.subf %876, %840 : vector<32x128xf32>
    %878 = arith.mulf %877, %794 : vector<32x128xf32>
    %879 = arith.addf %875, %878 : vector<32x128xf32>
    %880 = arith.mulf %840, %794 : vector<32x128xf32>
    %cst_302 = arith.constant 1.000000e+00 : f32
    %881 = vector.broadcast %cst_302 : f32 to vector<32x128xf32>
    %882 = arith.subf %881, %844 : vector<32x128xf32>
    %883 = arith.mulf %882, %799 : vector<32x128xf32>
    %884 = arith.addf %880, %883 : vector<32x128xf32>
    %885 = arith.mulf %844, %799 : vector<32x128xf32>
    %cst_303 = arith.constant 1.000000e+00 : f32
    %886 = vector.broadcast %cst_303 : f32 to vector<32x128xf32>
    %887 = arith.subf %886, %848 : vector<32x128xf32>
    %888 = arith.mulf %887, %804 : vector<32x128xf32>
    %889 = arith.addf %885, %888 : vector<32x128xf32>
    %890 = arith.mulf %848, %804 : vector<32x128xf32>
    %cst_304 = arith.constant 1.000000e+00 : f32
    %891 = vector.broadcast %cst_304 : f32 to vector<32x128xf32>
    %892 = arith.subf %891, %852 : vector<32x128xf32>
    %893 = arith.mulf %892, %809 : vector<32x128xf32>
    %894 = arith.addf %890, %893 : vector<32x128xf32>
    %895 = arith.mulf %852, %809 : vector<32x128xf32>
    %cst_305 = arith.constant 1.000000e+00 : f32
    %896 = vector.broadcast %cst_305 : f32 to vector<32x128xf32>
    %897 = arith.subf %896, %856 : vector<32x128xf32>
    %898 = arith.mulf %897, %814 : vector<32x128xf32>
    %899 = arith.addf %895, %898 : vector<32x128xf32>
    %900 = arith.mulf %856, %814 : vector<32x128xf32>
    %cst_306 = arith.constant 1.000000e+00 : f32
    %901 = vector.broadcast %cst_306 : f32 to vector<32x128xf32>
    %902 = arith.subf %901, %860 : vector<32x128xf32>
    %903 = arith.mulf %902, %819 : vector<32x128xf32>
    %904 = arith.addf %900, %903 : vector<32x128xf32>
    %905 = arith.mulf %860, %819 : vector<32x128xf32>
    %cst_307 = arith.constant 1.000000e+00 : f32
    %906 = vector.broadcast %cst_307 : f32 to vector<32x128xf32>
    %907 = arith.subf %906, %864 : vector<32x128xf32>
    %908 = arith.mulf %907, %824 : vector<32x128xf32>
    %909 = arith.addf %905, %908 : vector<32x128xf32>
    %cst_308 = arith.constant -2.200000e+00 : f32
    %910 = vector.broadcast %cst_308 : f32 to vector<32x128xf32>
    %911 = arith.subf %664, %910 : vector<32x128xf32>
    %cst_309 = arith.constant 0.833333313 : f32
    %912 = vector.broadcast %cst_309 : f32 to vector<32x128xf32>
    %913 = arith.mulf %911, %912 : vector<32x128xf32>
    %cst_310 = arith.constant -1.800000e+00 : f32
    %914 = vector.broadcast %cst_310 : f32 to vector<32x128xf32>
    %915 = arith.subf %664, %914 : vector<32x128xf32>
    %cst_311 = arith.constant 0.833333313 : f32
    %916 = vector.broadcast %cst_311 : f32 to vector<32x128xf32>
    %917 = arith.mulf %915, %916 : vector<32x128xf32>
    %cst_312 = arith.constant -1.400000e+00 : f32
    %918 = vector.broadcast %cst_312 : f32 to vector<32x128xf32>
    %919 = arith.subf %664, %918 : vector<32x128xf32>
    %cst_313 = arith.constant 0.833333313 : f32
    %920 = vector.broadcast %cst_313 : f32 to vector<32x128xf32>
    %921 = arith.mulf %919, %920 : vector<32x128xf32>
    %cst_314 = arith.constant -1.000000e+00 : f32
    %922 = vector.broadcast %cst_314 : f32 to vector<32x128xf32>
    %923 = arith.subf %664, %922 : vector<32x128xf32>
    %cst_315 = arith.constant 0.833333313 : f32
    %924 = vector.broadcast %cst_315 : f32 to vector<32x128xf32>
    %925 = arith.mulf %923, %924 : vector<32x128xf32>
    %cst_316 = arith.constant -6.000000e-01 : f32
    %926 = vector.broadcast %cst_316 : f32 to vector<32x128xf32>
    %927 = arith.subf %664, %926 : vector<32x128xf32>
    %cst_317 = arith.constant 0.833333313 : f32
    %928 = vector.broadcast %cst_317 : f32 to vector<32x128xf32>
    %929 = arith.mulf %927, %928 : vector<32x128xf32>
    %cst_318 = arith.constant -2.000000e-01 : f32
    %930 = vector.broadcast %cst_318 : f32 to vector<32x128xf32>
    %931 = arith.subf %664, %930 : vector<32x128xf32>
    %cst_319 = arith.constant 0.833333313 : f32
    %932 = vector.broadcast %cst_319 : f32 to vector<32x128xf32>
    %933 = arith.mulf %931, %932 : vector<32x128xf32>
    %cst_320 = arith.constant 2.000000e-01 : f32
    %934 = vector.broadcast %cst_320 : f32 to vector<32x128xf32>
    %935 = arith.subf %664, %934 : vector<32x128xf32>
    %cst_321 = arith.constant 0.833333313 : f32
    %936 = vector.broadcast %cst_321 : f32 to vector<32x128xf32>
    %937 = arith.mulf %935, %936 : vector<32x128xf32>
    %cst_322 = arith.constant 6.000000e-01 : f32
    %938 = vector.broadcast %cst_322 : f32 to vector<32x128xf32>
    %939 = arith.subf %664, %938 : vector<32x128xf32>
    %cst_323 = arith.constant 0.833333313 : f32
    %940 = vector.broadcast %cst_323 : f32 to vector<32x128xf32>
    %941 = arith.mulf %939, %940 : vector<32x128xf32>
    %cst_324 = arith.constant 1.000000e+00 : f32
    %942 = vector.broadcast %cst_324 : f32 to vector<32x128xf32>
    %943 = arith.subf %664, %942 : vector<32x128xf32>
    %cst_325 = arith.constant 0.833333313 : f32
    %944 = vector.broadcast %cst_325 : f32 to vector<32x128xf32>
    %945 = arith.mulf %943, %944 : vector<32x128xf32>
    %946 = arith.mulf %913, %869 : vector<32x128xf32>
    %cst_326 = arith.constant 1.000000e+00 : f32
    %947 = vector.broadcast %cst_326 : f32 to vector<32x128xf32>
    %948 = arith.subf %947, %917 : vector<32x128xf32>
    %949 = arith.mulf %948, %874 : vector<32x128xf32>
    %950 = arith.addf %946, %949 : vector<32x128xf32>
    %951 = arith.mulf %917, %874 : vector<32x128xf32>
    %cst_327 = arith.constant 1.000000e+00 : f32
    %952 = vector.broadcast %cst_327 : f32 to vector<32x128xf32>
    %953 = arith.subf %952, %921 : vector<32x128xf32>
    %954 = arith.mulf %953, %879 : vector<32x128xf32>
    %955 = arith.addf %951, %954 : vector<32x128xf32>
    %956 = arith.mulf %921, %879 : vector<32x128xf32>
    %cst_328 = arith.constant 1.000000e+00 : f32
    %957 = vector.broadcast %cst_328 : f32 to vector<32x128xf32>
    %958 = arith.subf %957, %925 : vector<32x128xf32>
    %959 = arith.mulf %958, %884 : vector<32x128xf32>
    %960 = arith.addf %956, %959 : vector<32x128xf32>
    %961 = arith.mulf %925, %884 : vector<32x128xf32>
    %cst_329 = arith.constant 1.000000e+00 : f32
    %962 = vector.broadcast %cst_329 : f32 to vector<32x128xf32>
    %963 = arith.subf %962, %929 : vector<32x128xf32>
    %964 = arith.mulf %963, %889 : vector<32x128xf32>
    %965 = arith.addf %961, %964 : vector<32x128xf32>
    %966 = arith.mulf %929, %889 : vector<32x128xf32>
    %cst_330 = arith.constant 1.000000e+00 : f32
    %967 = vector.broadcast %cst_330 : f32 to vector<32x128xf32>
    %968 = arith.subf %967, %933 : vector<32x128xf32>
    %969 = arith.mulf %968, %894 : vector<32x128xf32>
    %970 = arith.addf %966, %969 : vector<32x128xf32>
    %971 = arith.mulf %933, %894 : vector<32x128xf32>
    %cst_331 = arith.constant 1.000000e+00 : f32
    %972 = vector.broadcast %cst_331 : f32 to vector<32x128xf32>
    %973 = arith.subf %972, %937 : vector<32x128xf32>
    %974 = arith.mulf %973, %899 : vector<32x128xf32>
    %975 = arith.addf %971, %974 : vector<32x128xf32>
    %976 = arith.mulf %937, %899 : vector<32x128xf32>
    %cst_332 = arith.constant 1.000000e+00 : f32
    %977 = vector.broadcast %cst_332 : f32 to vector<32x128xf32>
    %978 = arith.subf %977, %941 : vector<32x128xf32>
    %979 = arith.mulf %978, %904 : vector<32x128xf32>
    %980 = arith.addf %976, %979 : vector<32x128xf32>
    %981 = arith.mulf %941, %904 : vector<32x128xf32>
    %cst_333 = arith.constant 1.000000e+00 : f32
    %982 = vector.broadcast %cst_333 : f32 to vector<32x128xf32>
    %983 = arith.subf %982, %945 : vector<32x128xf32>
    %984 = arith.mulf %983, %909 : vector<32x128xf32>
    %985 = arith.addf %981, %984 : vector<32x128xf32>
    %c32_334 = arith.constant 32 : index
    %c0_335 = arith.constant 0 : index
    %986 = vector.load %arg7[%c32_334, %c0_335] : memref<288x128xf32, #tpu.memory_space<vmem>>, vector<32x128xf32>
    tpu.vector_store %arg7[%c32_334, %c0_335], %950 {strides = array<i32>} : memref<288x128xf32, #tpu.memory_space<vmem>>, vector<32x128xf32>,
    %c64_336 = arith.constant 64 : index
    %c0_337 = arith.constant 0 : index
    %987 = vector.load %arg7[%c64_336, %c0_337] : memref<288x128xf32, #tpu.memory_space<vmem>>, vector<32x128xf32>
    tpu.vector_store %arg7[%c64_336, %c0_337], %955 {strides = array<i32>} : memref<288x128xf32, #tpu.memory_space<vmem>>, vector<32x128xf32>,
    %c96_338 = arith.constant 96 : index
    %c0_339 = arith.constant 0 : index
    %988 = vector.load %arg7[%c96_338, %c0_339] : memref<288x128xf32, #tpu.memory_space<vmem>>, vector<32x128xf32>
    tpu.vector_store %arg7[%c96_338, %c0_339], %960 {strides = array<i32>} : memref<288x128xf32, #tpu.memory_space<vmem>>, vector<32x128xf32>,
    %c128_340 = arith.constant 128 : index
    %c0_341 = arith.constant 0 : index
    %989 = vector.load %arg7[%c128_340, %c0_341] : memref<288x128xf32, #tpu.memory_space<vmem>>, vector<32x128xf32>
    tpu.vector_store %arg7[%c128_340, %c0_341], %965 {strides = array<i32>} : memref<288x128xf32, #tpu.memory_space<vmem>>, vector<32x128xf32>,
    %c160 = arith.constant 160 : index
    %c0_342 = arith.constant 0 : index
    %990 = vector.load %arg7[%c160, %c0_342] : memref<288x128xf32, #tpu.memory_space<vmem>>, vector<32x128xf32>
    tpu.vector_store %arg7[%c160, %c0_342], %970 {strides = array<i32>} : memref<288x128xf32, #tpu.memory_space<vmem>>, vector<32x128xf32>,
    %c192 = arith.constant 192 : index
    %c0_343 = arith.constant 0 : index
    %991 = vector.load %arg7[%c192, %c0_343] : memref<288x128xf32, #tpu.memory_space<vmem>>, vector<32x128xf32>
    tpu.vector_store %arg7[%c192, %c0_343], %975 {strides = array<i32>} : memref<288x128xf32, #tpu.memory_space<vmem>>, vector<32x128xf32>,
    %c224 = arith.constant 224 : index
    %c0_344 = arith.constant 0 : index
    %992 = vector.load %arg7[%c224, %c0_344] : memref<288x128xf32, #tpu.memory_space<vmem>>, vector<32x128xf32>
    tpu.vector_store %arg7[%c224, %c0_344], %980 {strides = array<i32>} : memref<288x128xf32, #tpu.memory_space<vmem>>, vector<32x128xf32>,
    %c256 = arith.constant 256 : index
    %c0_345 = arith.constant 0 : index
    %993 = vector.load %arg7[%c256, %c0_345] : memref<288x128xf32, #tpu.memory_space<vmem>>, vector<32x128xf32>
    tpu.vector_store %arg7[%c256, %c0_345], %985 {strides = array<i32>} : memref<288x128xf32, #tpu.memory_space<vmem>>, vector<32x128xf32>,
    %c0_346 = arith.constant 0 : index
    %c0_347 = arith.constant 0 : index
    %994 = vector.load %arg4[%c0_346, %c0_347] : memref<32x288xf32, #tpu.memory_space<vmem>>, vector<32x288xf32>
    %c0_348 = arith.constant 0 : index
    %c0_349 = arith.constant 0 : index
    %995 = vector.load %arg7[%c0_348, %c0_349] : memref<288x128xf32, #tpu.memory_space<vmem>>, vector<288x128xf32>
    %cst_350 = arith.constant dense<0.000000e+00> : vector<32x128xf32>
    %996 = tpu.matmul %994, %995, %cst_350 {dimension_numbers = #tpu.dot_dimension_numbers<[1], [0], [0], [1], [0, 0, 1, 1], [], []>} : vector<32x288xf32>, vector<288x128xf32>, vector<32x128xf32> -> vector<32x128xf32>
    %997 = arith.negf %996 : vector<32x128xf32>
    %998 = math.exp %997 : vector<32x128xf32>
    %cst_351 = arith.constant 1.000000e+00 : f32
    %999 = vector.broadcast %cst_351 : f32 to vector<32x128xf32>
    %1000 = arith.addf %999, %998 : vector<32x128xf32>
    %1001 = arith.divf %999, %1000 : vector<32x128xf32>
    %1002 = arith.mulf %996, %1001 : vector<32x128xf32>
    %c0_352 = arith.constant 0 : index
    %c0_353 = arith.constant 0 : index
    %1003 = vector.load %arg7[%c0_352, %c0_353] : memref<288x128xf32, #tpu.memory_space<vmem>>, vector<32x128xf32>
    tpu.vector_store %arg7[%c0_352, %c0_353], %1002 {strides = array<i32>} : memref<288x128xf32, #tpu.memory_space<vmem>>, vector<32x128xf32>,
    %cst_354 = arith.constant -2.200000e+00 : f32
    %1004 = vector.broadcast %cst_354 : f32 to vector<32x128xf32>
    %1005 = arith.cmpf oge, %996, %1004 : vector<32x128xf32>
    %1006 = arith.extui %1005 : vector<32x128xi1> to vector<32x128xi32>
    %1007 = arith.sitofp %1006 : vector<32x128xi32> to vector<32x128xf32>
    %cst_355 = arith.constant -1.800000e+00 : f32
    %1008 = vector.broadcast %cst_355 : f32 to vector<32x128xf32>
    %1009 = arith.cmpf oge, %996, %1008 : vector<32x128xf32>
    %1010 = arith.extui %1009 : vector<32x128xi1> to vector<32x128xi32>
    %1011 = arith.sitofp %1010 : vector<32x128xi32> to vector<32x128xf32>
    %cst_356 = arith.constant -1.400000e+00 : f32
    %1012 = vector.broadcast %cst_356 : f32 to vector<32x128xf32>
    %1013 = arith.cmpf oge, %996, %1012 : vector<32x128xf32>
    %1014 = arith.extui %1013 : vector<32x128xi1> to vector<32x128xi32>
    %1015 = arith.sitofp %1014 : vector<32x128xi32> to vector<32x128xf32>
    %cst_357 = arith.constant -1.000000e+00 : f32
    %1016 = vector.broadcast %cst_357 : f32 to vector<32x128xf32>
    %1017 = arith.cmpf oge, %996, %1016 : vector<32x128xf32>
    %1018 = arith.extui %1017 : vector<32x128xi1> to vector<32x128xi32>
    %1019 = arith.sitofp %1018 : vector<32x128xi32> to vector<32x128xf32>
    %cst_358 = arith.constant -6.000000e-01 : f32
    %1020 = vector.broadcast %cst_358 : f32 to vector<32x128xf32>
    %1021 = arith.cmpf oge, %996, %1020 : vector<32x128xf32>
    %1022 = arith.extui %1021 : vector<32x128xi1> to vector<32x128xi32>
    %1023 = arith.sitofp %1022 : vector<32x128xi32> to vector<32x128xf32>
    %cst_359 = arith.constant -2.000000e-01 : f32
    %1024 = vector.broadcast %cst_359 : f32 to vector<32x128xf32>
    %1025 = arith.cmpf oge, %996, %1024 : vector<32x128xf32>
    %1026 = arith.extui %1025 : vector<32x128xi1> to vector<32x128xi32>
    %1027 = arith.sitofp %1026 : vector<32x128xi32> to vector<32x128xf32>
    %cst_360 = arith.constant 2.000000e-01 : f32
    %1028 = vector.broadcast %cst_360 : f32 to vector<32x128xf32>
    %1029 = arith.cmpf oge, %996, %1028 : vector<32x128xf32>
    %1030 = arith.extui %1029 : vector<32x128xi1> to vector<32x128xi32>
    %1031 = arith.sitofp %1030 : vector<32x128xi32> to vector<32x128xf32>
    %cst_361 = arith.constant 6.000000e-01 : f32
    %1032 = vector.broadcast %cst_361 : f32 to vector<32x128xf32>
    %1033 = arith.cmpf oge, %996, %1032 : vector<32x128xf32>
    %1034 = arith.extui %1033 : vector<32x128xi1> to vector<32x128xi32>
    %1035 = arith.sitofp %1034 : vector<32x128xi32> to vector<32x128xf32>
    %cst_362 = arith.constant 1.000000e+00 : f32
    %1036 = vector.broadcast %cst_362 : f32 to vector<32x128xf32>
    %1037 = arith.cmpf oge, %996, %1036 : vector<32x128xf32>
    %1038 = arith.extui %1037 : vector<32x128xi1> to vector<32x128xi32>
    %1039 = arith.sitofp %1038 : vector<32x128xi32> to vector<32x128xf32>
    %cst_363 = arith.constant 1.400000e+00 : f32
    %1040 = vector.broadcast %cst_363 : f32 to vector<32x128xf32>
    %1041 = arith.cmpf oge, %996, %1040 : vector<32x128xf32>
    %1042 = arith.extui %1041 : vector<32x128xi1> to vector<32x128xi32>
    %1043 = arith.sitofp %1042 : vector<32x128xi32> to vector<32x128xf32>
    %cst_364 = arith.constant 1.800000e+00 : f32
    %1044 = vector.broadcast %cst_364 : f32 to vector<32x128xf32>
    %1045 = arith.cmpf oge, %996, %1044 : vector<32x128xf32>
    %1046 = arith.extui %1045 : vector<32x128xi1> to vector<32x128xi32>
    %1047 = arith.sitofp %1046 : vector<32x128xi32> to vector<32x128xf32>
    %cst_365 = arith.constant 2.200000e+00 : f32
    %1048 = vector.broadcast %cst_365 : f32 to vector<32x128xf32>
    %1049 = arith.cmpf oge, %996, %1048 : vector<32x128xf32>
    %1050 = arith.extui %1049 : vector<32x128xi1> to vector<32x128xi32>
    %1051 = arith.sitofp %1050 : vector<32x128xi32> to vector<32x128xf32>
    %1052 = arith.subf %1007, %1011 : vector<32x128xf32>
    %1053 = arith.subf %1011, %1015 : vector<32x128xf32>
    %1054 = arith.subf %1015, %1019 : vector<32x128xf32>
    %1055 = arith.subf %1019, %1023 : vector<32x128xf32>
    %1056 = arith.subf %1023, %1027 : vector<32x128xf32>
    %1057 = arith.subf %1027, %1031 : vector<32x128xf32>
    %1058 = arith.subf %1031, %1035 : vector<32x128xf32>
    %1059 = arith.subf %1035, %1039 : vector<32x128xf32>
    %1060 = arith.subf %1039, %1043 : vector<32x128xf32>
    %1061 = arith.subf %1043, %1047 : vector<32x128xf32>
    %1062 = arith.subf %1047, %1051 : vector<32x128xf32>
    %cst_366 = arith.constant -2.200000e+00 : f32
    %1063 = vector.broadcast %cst_366 : f32 to vector<32x128xf32>
    %1064 = arith.subf %996, %1063 : vector<32x128xf32>
    %cst_367 = arith.constant 2.500000e+00 : f32
    %1065 = vector.broadcast %cst_367 : f32 to vector<32x128xf32>
    %1066 = arith.mulf %1064, %1065 : vector<32x128xf32>
    %cst_368 = arith.constant -1.800000e+00 : f32
    %1067 = vector.broadcast %cst_368 : f32 to vector<32x128xf32>
    %1068 = arith.subf %996, %1067 : vector<32x128xf32>
    %cst_369 = arith.constant 2.500000e+00 : f32
    %1069 = vector.broadcast %cst_369 : f32 to vector<32x128xf32>
    %1070 = arith.mulf %1068, %1069 : vector<32x128xf32>
    %cst_370 = arith.constant -1.400000e+00 : f32
    %1071 = vector.broadcast %cst_370 : f32 to vector<32x128xf32>
    %1072 = arith.subf %996, %1071 : vector<32x128xf32>
    %cst_371 = arith.constant 2.500000e+00 : f32
    %1073 = vector.broadcast %cst_371 : f32 to vector<32x128xf32>
    %1074 = arith.mulf %1072, %1073 : vector<32x128xf32>
    %cst_372 = arith.constant -1.000000e+00 : f32
    %1075 = vector.broadcast %cst_372 : f32 to vector<32x128xf32>
    %1076 = arith.subf %996, %1075 : vector<32x128xf32>
    %cst_373 = arith.constant 2.500000e+00 : f32
    %1077 = vector.broadcast %cst_373 : f32 to vector<32x128xf32>
    %1078 = arith.mulf %1076, %1077 : vector<32x128xf32>
    %cst_374 = arith.constant -6.000000e-01 : f32
    %1079 = vector.broadcast %cst_374 : f32 to vector<32x128xf32>
    %1080 = arith.subf %996, %1079 : vector<32x128xf32>
    %cst_375 = arith.constant 2.500000e+00 : f32
    %1081 = vector.broadcast %cst_375 : f32 to vector<32x128xf32>
    %1082 = arith.mulf %1080, %1081 : vector<32x128xf32>
    %cst_376 = arith.constant -2.000000e-01 : f32
    %1083 = vector.broadcast %cst_376 : f32 to vector<32x128xf32>
    %1084 = arith.subf %996, %1083 : vector<32x128xf32>
    %cst_377 = arith.constant 2.500000e+00 : f32
    %1085 = vector.broadcast %cst_377 : f32 to vector<32x128xf32>
    %1086 = arith.mulf %1084, %1085 : vector<32x128xf32>
    %cst_378 = arith.constant 2.000000e-01 : f32
    %1087 = vector.broadcast %cst_378 : f32 to vector<32x128xf32>
    %1088 = arith.subf %996, %1087 : vector<32x128xf32>
    %cst_379 = arith.constant 2.500000e+00 : f32
    %1089 = vector.broadcast %cst_379 : f32 to vector<32x128xf32>
    %1090 = arith.mulf %1088, %1089 : vector<32x128xf32>
    %cst_380 = arith.constant 6.000000e-01 : f32
    %1091 = vector.broadcast %cst_380 : f32 to vector<32x128xf32>
    %1092 = arith.subf %996, %1091 : vector<32x128xf32>
    %cst_381 = arith.constant 2.500000e+00 : f32
    %1093 = vector.broadcast %cst_381 : f32 to vector<32x128xf32>
    %1094 = arith.mulf %1092, %1093 : vector<32x128xf32>
    %cst_382 = arith.constant 1.000000e+00 : f32
    %1095 = vector.broadcast %cst_382 : f32 to vector<32x128xf32>
    %1096 = arith.subf %996, %1095 : vector<32x128xf32>
    %cst_383 = arith.constant 2.500000e+00 : f32
    %1097 = vector.broadcast %cst_383 : f32 to vector<32x128xf32>
    %1098 = arith.mulf %1096, %1097 : vector<32x128xf32>
    %cst_384 = arith.constant 1.400000e+00 : f32
    %1099 = vector.broadcast %cst_384 : f32 to vector<32x128xf32>
    %1100 = arith.subf %996, %1099 : vector<32x128xf32>
    %cst_385 = arith.constant 2.500000e+00 : f32
    %1101 = vector.broadcast %cst_385 : f32 to vector<32x128xf32>
    %1102 = arith.mulf %1100, %1101 : vector<32x128xf32>
    %cst_386 = arith.constant 1.800000e+00 : f32
    %1103 = vector.broadcast %cst_386 : f32 to vector<32x128xf32>
    %1104 = arith.subf %996, %1103 : vector<32x128xf32>
    %cst_387 = arith.constant 2.500000e+00 : f32
    %1105 = vector.broadcast %cst_387 : f32 to vector<32x128xf32>
    %1106 = arith.mulf %1104, %1105 : vector<32x128xf32>
    %1107 = arith.mulf %1066, %1052 : vector<32x128xf32>
    %cst_388 = arith.constant 1.000000e+00 : f32
    %1108 = vector.broadcast %cst_388 : f32 to vector<32x128xf32>
    %1109 = arith.subf %1108, %1070 : vector<32x128xf32>
    %1110 = arith.mulf %1109, %1053 : vector<32x128xf32>
    %1111 = arith.addf %1107, %1110 : vector<32x128xf32>
    %1112 = arith.mulf %1070, %1053 : vector<32x128xf32>
    %cst_389 = arith.constant 1.000000e+00 : f32
    %1113 = vector.broadcast %cst_389 : f32 to vector<32x128xf32>
    %1114 = arith.subf %1113, %1074 : vector<32x128xf32>
    %1115 = arith.mulf %1114, %1054 : vector<32x128xf32>
    %1116 = arith.addf %1112, %1115 : vector<32x128xf32>
    %1117 = arith.mulf %1074, %1054 : vector<32x128xf32>
    %cst_390 = arith.constant 1.000000e+00 : f32
    %1118 = vector.broadcast %cst_390 : f32 to vector<32x128xf32>
    %1119 = arith.subf %1118, %1078 : vector<32x128xf32>
    %1120 = arith.mulf %1119, %1055 : vector<32x128xf32>
    %1121 = arith.addf %1117, %1120 : vector<32x128xf32>
    %1122 = arith.mulf %1078, %1055 : vector<32x128xf32>
    %cst_391 = arith.constant 1.000000e+00 : f32
    %1123 = vector.broadcast %cst_391 : f32 to vector<32x128xf32>
    %1124 = arith.subf %1123, %1082 : vector<32x128xf32>
    %1125 = arith.mulf %1124, %1056 : vector<32x128xf32>
    %1126 = arith.addf %1122, %1125 : vector<32x128xf32>
    %1127 = arith.mulf %1082, %1056 : vector<32x128xf32>
    %cst_392 = arith.constant 1.000000e+00 : f32
    %1128 = vector.broadcast %cst_392 : f32 to vector<32x128xf32>
    %1129 = arith.subf %1128, %1086 : vector<32x128xf32>
    %1130 = arith.mulf %1129, %1057 : vector<32x128xf32>
    %1131 = arith.addf %1127, %1130 : vector<32x128xf32>
    %1132 = arith.mulf %1086, %1057 : vector<32x128xf32>
    %cst_393 = arith.constant 1.000000e+00 : f32
    %1133 = vector.broadcast %cst_393 : f32 to vector<32x128xf32>
    %1134 = arith.subf %1133, %1090 : vector<32x128xf32>
    %1135 = arith.mulf %1134, %1058 : vector<32x128xf32>
    %1136 = arith.addf %1132, %1135 : vector<32x128xf32>
    %1137 = arith.mulf %1090, %1058 : vector<32x128xf32>
    %cst_394 = arith.constant 1.000000e+00 : f32
    %1138 = vector.broadcast %cst_394 : f32 to vector<32x128xf32>
    %1139 = arith.subf %1138, %1094 : vector<32x128xf32>
    %1140 = arith.mulf %1139, %1059 : vector<32x128xf32>
    %1141 = arith.addf %1137, %1140 : vector<32x128xf32>
    %1142 = arith.mulf %1094, %1059 : vector<32x128xf32>
    %cst_395 = arith.constant 1.000000e+00 : f32
    %1143 = vector.broadcast %cst_395 : f32 to vector<32x128xf32>
    %1144 = arith.subf %1143, %1098 : vector<32x128xf32>
    %1145 = arith.mulf %1144, %1060 : vector<32x128xf32>
    %1146 = arith.addf %1142, %1145 : vector<32x128xf32>
    %1147 = arith.mulf %1098, %1060 : vector<32x128xf32>
    %cst_396 = arith.constant 1.000000e+00 : f32
    %1148 = vector.broadcast %cst_396 : f32 to vector<32x128xf32>
    %1149 = arith.subf %1148, %1102 : vector<32x128xf32>
    %1150 = arith.mulf %1149, %1061 : vector<32x128xf32>
    %1151 = arith.addf %1147, %1150 : vector<32x128xf32>
    %1152 = arith.mulf %1102, %1061 : vector<32x128xf32>
    %cst_397 = arith.constant 1.000000e+00 : f32
    %1153 = vector.broadcast %cst_397 : f32 to vector<32x128xf32>
    %1154 = arith.subf %1153, %1106 : vector<32x128xf32>
    %1155 = arith.mulf %1154, %1062 : vector<32x128xf32>
    %1156 = arith.addf %1152, %1155 : vector<32x128xf32>
    %cst_398 = arith.constant -2.200000e+00 : f32
    %1157 = vector.broadcast %cst_398 : f32 to vector<32x128xf32>
    %1158 = arith.subf %996, %1157 : vector<32x128xf32>
    %cst_399 = arith.constant 1.250000e+00 : f32
    %1159 = vector.broadcast %cst_399 : f32 to vector<32x128xf32>
    %1160 = arith.mulf %1158, %1159 : vector<32x128xf32>
    %cst_400 = arith.constant -1.800000e+00 : f32
    %1161 = vector.broadcast %cst_400 : f32 to vector<32x128xf32>
    %1162 = arith.subf %996, %1161 : vector<32x128xf32>
    %cst_401 = arith.constant 1.250000e+00 : f32
    %1163 = vector.broadcast %cst_401 : f32 to vector<32x128xf32>
    %1164 = arith.mulf %1162, %1163 : vector<32x128xf32>
    %cst_402 = arith.constant -1.400000e+00 : f32
    %1165 = vector.broadcast %cst_402 : f32 to vector<32x128xf32>
    %1166 = arith.subf %996, %1165 : vector<32x128xf32>
    %cst_403 = arith.constant 1.250000e+00 : f32
    %1167 = vector.broadcast %cst_403 : f32 to vector<32x128xf32>
    %1168 = arith.mulf %1166, %1167 : vector<32x128xf32>
    %cst_404 = arith.constant -1.000000e+00 : f32
    %1169 = vector.broadcast %cst_404 : f32 to vector<32x128xf32>
    %1170 = arith.subf %996, %1169 : vector<32x128xf32>
    %cst_405 = arith.constant 1.250000e+00 : f32
    %1171 = vector.broadcast %cst_405 : f32 to vector<32x128xf32>
    %1172 = arith.mulf %1170, %1171 : vector<32x128xf32>
    %cst_406 = arith.constant -6.000000e-01 : f32
    %1173 = vector.broadcast %cst_406 : f32 to vector<32x128xf32>
    %1174 = arith.subf %996, %1173 : vector<32x128xf32>
    %cst_407 = arith.constant 1.250000e+00 : f32
    %1175 = vector.broadcast %cst_407 : f32 to vector<32x128xf32>
    %1176 = arith.mulf %1174, %1175 : vector<32x128xf32>
    %cst_408 = arith.constant -2.000000e-01 : f32
    %1177 = vector.broadcast %cst_408 : f32 to vector<32x128xf32>
    %1178 = arith.subf %996, %1177 : vector<32x128xf32>
    %cst_409 = arith.constant 1.250000e+00 : f32
    %1179 = vector.broadcast %cst_409 : f32 to vector<32x128xf32>
    %1180 = arith.mulf %1178, %1179 : vector<32x128xf32>
    %cst_410 = arith.constant 2.000000e-01 : f32
    %1181 = vector.broadcast %cst_410 : f32 to vector<32x128xf32>
    %1182 = arith.subf %996, %1181 : vector<32x128xf32>
    %cst_411 = arith.constant 1.250000e+00 : f32
    %1183 = vector.broadcast %cst_411 : f32 to vector<32x128xf32>
    %1184 = arith.mulf %1182, %1183 : vector<32x128xf32>
    %cst_412 = arith.constant 6.000000e-01 : f32
    %1185 = vector.broadcast %cst_412 : f32 to vector<32x128xf32>
    %1186 = arith.subf %996, %1185 : vector<32x128xf32>
    %cst_413 = arith.constant 1.250000e+00 : f32
    %1187 = vector.broadcast %cst_413 : f32 to vector<32x128xf32>
    %1188 = arith.mulf %1186, %1187 : vector<32x128xf32>
    %cst_414 = arith.constant 1.000000e+00 : f32
    %1189 = vector.broadcast %cst_414 : f32 to vector<32x128xf32>
    %1190 = arith.subf %996, %1189 : vector<32x128xf32>
    %cst_415 = arith.constant 1.250000e+00 : f32
    %1191 = vector.broadcast %cst_415 : f32 to vector<32x128xf32>
    %1192 = arith.mulf %1190, %1191 : vector<32x128xf32>
    %cst_416 = arith.constant 1.400000e+00 : f32
    %1193 = vector.broadcast %cst_416 : f32 to vector<32x128xf32>
    %1194 = arith.subf %996, %1193 : vector<32x128xf32>
    %cst_417 = arith.constant 1.250000e+00 : f32
    %1195 = vector.broadcast %cst_417 : f32 to vector<32x128xf32>
    %1196 = arith.mulf %1194, %1195 : vector<32x128xf32>
    %1197 = arith.mulf %1160, %1111 : vector<32x128xf32>
    %cst_418 = arith.constant 1.000000e+00 : f32
    %1198 = vector.broadcast %cst_418 : f32 to vector<32x128xf32>
    %1199 = arith.subf %1198, %1164 : vector<32x128xf32>
    %1200 = arith.mulf %1199, %1116 : vector<32x128xf32>
    %1201 = arith.addf %1197, %1200 : vector<32x128xf32>
    %1202 = arith.mulf %1164, %1116 : vector<32x128xf32>
    %cst_419 = arith.constant 1.000000e+00 : f32
    %1203 = vector.broadcast %cst_419 : f32 to vector<32x128xf32>
    %1204 = arith.subf %1203, %1168 : vector<32x128xf32>
    %1205 = arith.mulf %1204, %1121 : vector<32x128xf32>
    %1206 = arith.addf %1202, %1205 : vector<32x128xf32>
    %1207 = arith.mulf %1168, %1121 : vector<32x128xf32>
    %cst_420 = arith.constant 1.000000e+00 : f32
    %1208 = vector.broadcast %cst_420 : f32 to vector<32x128xf32>
    %1209 = arith.subf %1208, %1172 : vector<32x128xf32>
    %1210 = arith.mulf %1209, %1126 : vector<32x128xf32>
    %1211 = arith.addf %1207, %1210 : vector<32x128xf32>
    %1212 = arith.mulf %1172, %1126 : vector<32x128xf32>
    %cst_421 = arith.constant 1.000000e+00 : f32
    %1213 = vector.broadcast %cst_421 : f32 to vector<32x128xf32>
    %1214 = arith.subf %1213, %1176 : vector<32x128xf32>
    %1215 = arith.mulf %1214, %1131 : vector<32x128xf32>
    %1216 = arith.addf %1212, %1215 : vector<32x128xf32>
    %1217 = arith.mulf %1176, %1131 : vector<32x128xf32>
    %cst_422 = arith.constant 1.000000e+00 : f32
    %1218 = vector.broadcast %cst_422 : f32 to vector<32x128xf32>
    %1219 = arith.subf %1218, %1180 : vector<32x128xf32>
    %1220 = arith.mulf %1219, %1136 : vector<32x128xf32>
    %1221 = arith.addf %1217, %1220 : vector<32x128xf32>
    %1222 = arith.mulf %1180, %1136 : vector<32x128xf32>
    %cst_423 = arith.constant 1.000000e+00 : f32
    %1223 = vector.broadcast %cst_423 : f32 to vector<32x128xf32>
    %1224 = arith.subf %1223, %1184 : vector<32x128xf32>
    %1225 = arith.mulf %1224, %1141 : vector<32x128xf32>
    %1226 = arith.addf %1222, %1225 : vector<32x128xf32>
    %1227 = arith.mulf %1184, %1141 : vector<32x128xf32>
    %cst_424 = arith.constant 1.000000e+00 : f32
    %1228 = vector.broadcast %cst_424 : f32 to vector<32x128xf32>
    %1229 = arith.subf %1228, %1188 : vector<32x128xf32>
    %1230 = arith.mulf %1229, %1146 : vector<32x128xf32>
    %1231 = arith.addf %1227, %1230 : vector<32x128xf32>
    %1232 = arith.mulf %1188, %1146 : vector<32x128xf32>
    %cst_425 = arith.constant 1.000000e+00 : f32
    %1233 = vector.broadcast %cst_425 : f32 to vector<32x128xf32>
    %1234 = arith.subf %1233, %1192 : vector<32x128xf32>
    %1235 = arith.mulf %1234, %1151 : vector<32x128xf32>
    %1236 = arith.addf %1232, %1235 : vector<32x128xf32>
    %1237 = arith.mulf %1192, %1151 : vector<32x128xf32>
    %cst_426 = arith.constant 1.000000e+00 : f32
    %1238 = vector.broadcast %cst_426 : f32 to vector<32x128xf32>
    %1239 = arith.subf %1238, %1196 : vector<32x128xf32>
    %1240 = arith.mulf %1239, %1156 : vector<32x128xf32>
    %1241 = arith.addf %1237, %1240 : vector<32x128xf32>
    %cst_427 = arith.constant -2.200000e+00 : f32
    %1242 = vector.broadcast %cst_427 : f32 to vector<32x128xf32>
    %1243 = arith.subf %996, %1242 : vector<32x128xf32>
    %cst_428 = arith.constant 0.833333313 : f32
    %1244 = vector.broadcast %cst_428 : f32 to vector<32x128xf32>
    %1245 = arith.mulf %1243, %1244 : vector<32x128xf32>
    %cst_429 = arith.constant -1.800000e+00 : f32
    %1246 = vector.broadcast %cst_429 : f32 to vector<32x128xf32>
    %1247 = arith.subf %996, %1246 : vector<32x128xf32>
    %cst_430 = arith.constant 0.833333313 : f32
    %1248 = vector.broadcast %cst_430 : f32 to vector<32x128xf32>
    %1249 = arith.mulf %1247, %1248 : vector<32x128xf32>
    %cst_431 = arith.constant -1.400000e+00 : f32
    %1250 = vector.broadcast %cst_431 : f32 to vector<32x128xf32>
    %1251 = arith.subf %996, %1250 : vector<32x128xf32>
    %cst_432 = arith.constant 0.833333313 : f32
    %1252 = vector.broadcast %cst_432 : f32 to vector<32x128xf32>
    %1253 = arith.mulf %1251, %1252 : vector<32x128xf32>
    %cst_433 = arith.constant -1.000000e+00 : f32
    %1254 = vector.broadcast %cst_433 : f32 to vector<32x128xf32>
    %1255 = arith.subf %996, %1254 : vector<32x128xf32>
    %cst_434 = arith.constant 0.833333313 : f32
    %1256 = vector.broadcast %cst_434 : f32 to vector<32x128xf32>
    %1257 = arith.mulf %1255, %1256 : vector<32x128xf32>
    %cst_435 = arith.constant -6.000000e-01 : f32
    %1258 = vector.broadcast %cst_435 : f32 to vector<32x128xf32>
    %1259 = arith.subf %996, %1258 : vector<32x128xf32>
    %cst_436 = arith.constant 0.833333313 : f32
    %1260 = vector.broadcast %cst_436 : f32 to vector<32x128xf32>
    %1261 = arith.mulf %1259, %1260 : vector<32x128xf32>
    %cst_437 = arith.constant -2.000000e-01 : f32
    %1262 = vector.broadcast %cst_437 : f32 to vector<32x128xf32>
    %1263 = arith.subf %996, %1262 : vector<32x128xf32>
    %cst_438 = arith.constant 0.833333313 : f32
    %1264 = vector.broadcast %cst_438 : f32 to vector<32x128xf32>
    %1265 = arith.mulf %1263, %1264 : vector<32x128xf32>
    %cst_439 = arith.constant 2.000000e-01 : f32
    %1266 = vector.broadcast %cst_439 : f32 to vector<32x128xf32>
    %1267 = arith.subf %996, %1266 : vector<32x128xf32>
    %cst_440 = arith.constant 0.833333313 : f32
    %1268 = vector.broadcast %cst_440 : f32 to vector<32x128xf32>
    %1269 = arith.mulf %1267, %1268 : vector<32x128xf32>
    %cst_441 = arith.constant 6.000000e-01 : f32
    %1270 = vector.broadcast %cst_441 : f32 to vector<32x128xf32>
    %1271 = arith.subf %996, %1270 : vector<32x128xf32>
    %cst_442 = arith.constant 0.833333313 : f32
    %1272 = vector.broadcast %cst_442 : f32 to vector<32x128xf32>
    %1273 = arith.mulf %1271, %1272 : vector<32x128xf32>
    %cst_443 = arith.constant 1.000000e+00 : f32
    %1274 = vector.broadcast %cst_443 : f32 to vector<32x128xf32>
    %1275 = arith.subf %996, %1274 : vector<32x128xf32>
    %cst_444 = arith.constant 0.833333313 : f32
    %1276 = vector.broadcast %cst_444 : f32 to vector<32x128xf32>
    %1277 = arith.mulf %1275, %1276 : vector<32x128xf32>
    %1278 = arith.mulf %1245, %1201 : vector<32x128xf32>
    %cst_445 = arith.constant 1.000000e+00 : f32
    %1279 = vector.broadcast %cst_445 : f32 to vector<32x128xf32>
    %1280 = arith.subf %1279, %1249 : vector<32x128xf32>
    %1281 = arith.mulf %1280, %1206 : vector<32x128xf32>
    %1282 = arith.addf %1278, %1281 : vector<32x128xf32>
    %1283 = arith.mulf %1249, %1206 : vector<32x128xf32>
    %cst_446 = arith.constant 1.000000e+00 : f32
    %1284 = vector.broadcast %cst_446 : f32 to vector<32x128xf32>
    %1285 = arith.subf %1284, %1253 : vector<32x128xf32>
    %1286 = arith.mulf %1285, %1211 : vector<32x128xf32>
    %1287 = arith.addf %1283, %1286 : vector<32x128xf32>
    %1288 = arith.mulf %1253, %1211 : vector<32x128xf32>
    %cst_447 = arith.constant 1.000000e+00 : f32
    %1289 = vector.broadcast %cst_447 : f32 to vector<32x128xf32>
    %1290 = arith.subf %1289, %1257 : vector<32x128xf32>
    %1291 = arith.mulf %1290, %1216 : vector<32x128xf32>
    %1292 = arith.addf %1288, %1291 : vector<32x128xf32>
    %1293 = arith.mulf %1257, %1216 : vector<32x128xf32>
    %cst_448 = arith.constant 1.000000e+00 : f32
    %1294 = vector.broadcast %cst_448 : f32 to vector<32x128xf32>
    %1295 = arith.subf %1294, %1261 : vector<32x128xf32>
    %1296 = arith.mulf %1295, %1221 : vector<32x128xf32>
    %1297 = arith.addf %1293, %1296 : vector<32x128xf32>
    %1298 = arith.mulf %1261, %1221 : vector<32x128xf32>
    %cst_449 = arith.constant 1.000000e+00 : f32
    %1299 = vector.broadcast %cst_449 : f32 to vector<32x128xf32>
    %1300 = arith.subf %1299, %1265 : vector<32x128xf32>
    %1301 = arith.mulf %1300, %1226 : vector<32x128xf32>
    %1302 = arith.addf %1298, %1301 : vector<32x128xf32>
    %1303 = arith.mulf %1265, %1226 : vector<32x128xf32>
    %cst_450 = arith.constant 1.000000e+00 : f32
    %1304 = vector.broadcast %cst_450 : f32 to vector<32x128xf32>
    %1305 = arith.subf %1304, %1269 : vector<32x128xf32>
    %1306 = arith.mulf %1305, %1231 : vector<32x128xf32>
    %1307 = arith.addf %1303, %1306 : vector<32x128xf32>
    %1308 = arith.mulf %1269, %1231 : vector<32x128xf32>
    %cst_451 = arith.constant 1.000000e+00 : f32
    %1309 = vector.broadcast %cst_451 : f32 to vector<32x128xf32>
    %1310 = arith.subf %1309, %1273 : vector<32x128xf32>
    %1311 = arith.mulf %1310, %1236 : vector<32x128xf32>
    %1312 = arith.addf %1308, %1311 : vector<32x128xf32>
    %1313 = arith.mulf %1273, %1236 : vector<32x128xf32>
    %cst_452 = arith.constant 1.000000e+00 : f32
    %1314 = vector.broadcast %cst_452 : f32 to vector<32x128xf32>
    %1315 = arith.subf %1314, %1277 : vector<32x128xf32>
    %1316 = arith.mulf %1315, %1241 : vector<32x128xf32>
    %1317 = arith.addf %1313, %1316 : vector<32x128xf32>
    %c32_453 = arith.constant 32 : index
    %c0_454 = arith.constant 0 : index
    %1318 = vector.load %arg7[%c32_453, %c0_454] : memref<288x128xf32, #tpu.memory_space<vmem>>, vector<32x128xf32>
    tpu.vector_store %arg7[%c32_453, %c0_454], %1282 {strides = array<i32>} : memref<288x128xf32, #tpu.memory_space<vmem>>, vector<32x128xf32>,
    %c64_455 = arith.constant 64 : index
    %c0_456 = arith.constant 0 : index
    %1319 = vector.load %arg7[%c64_455, %c0_456] : memref<288x128xf32, #tpu.memory_space<vmem>>, vector<32x128xf32>
    tpu.vector_store %arg7[%c64_455, %c0_456], %1287 {strides = array<i32>} : memref<288x128xf32, #tpu.memory_space<vmem>>, vector<32x128xf32>,
    %c96_457 = arith.constant 96 : index
    %c0_458 = arith.constant 0 : index
    %1320 = vector.load %arg7[%c96_457, %c0_458] : memref<288x128xf32, #tpu.memory_space<vmem>>, vector<32x128xf32>
    tpu.vector_store %arg7[%c96_457, %c0_458], %1292 {strides = array<i32>} : memref<288x128xf32, #tpu.memory_space<vmem>>, vector<32x128xf32>,
    %c128_459 = arith.constant 128 : index
    %c0_460 = arith.constant 0 : index
    %1321 = vector.load %arg7[%c128_459, %c0_460] : memref<288x128xf32, #tpu.memory_space<vmem>>, vector<32x128xf32>
    tpu.vector_store %arg7[%c128_459, %c0_460], %1297 {strides = array<i32>} : memref<288x128xf32, #tpu.memory_space<vmem>>, vector<32x128xf32>,
    %c160_461 = arith.constant 160 : index
    %c0_462 = arith.constant 0 : index
    %1322 = vector.load %arg7[%c160_461, %c0_462] : memref<288x128xf32, #tpu.memory_space<vmem>>, vector<32x128xf32>
    tpu.vector_store %arg7[%c160_461, %c0_462], %1302 {strides = array<i32>} : memref<288x128xf32, #tpu.memory_space<vmem>>, vector<32x128xf32>,
    %c192_463 = arith.constant 192 : index
    %c0_464 = arith.constant 0 : index
    %1323 = vector.load %arg7[%c192_463, %c0_464] : memref<288x128xf32, #tpu.memory_space<vmem>>, vector<32x128xf32>
    tpu.vector_store %arg7[%c192_463, %c0_464], %1307 {strides = array<i32>} : memref<288x128xf32, #tpu.memory_space<vmem>>, vector<32x128xf32>,
    %c224_465 = arith.constant 224 : index
    %c0_466 = arith.constant 0 : index
    %1324 = vector.load %arg7[%c224_465, %c0_466] : memref<288x128xf32, #tpu.memory_space<vmem>>, vector<32x128xf32>
    tpu.vector_store %arg7[%c224_465, %c0_466], %1312 {strides = array<i32>} : memref<288x128xf32, #tpu.memory_space<vmem>>, vector<32x128xf32>,
    %c256_467 = arith.constant 256 : index
    %c0_468 = arith.constant 0 : index
    %1325 = vector.load %arg7[%c256_467, %c0_468] : memref<288x128xf32, #tpu.memory_space<vmem>>, vector<32x128xf32>
    tpu.vector_store %arg7[%c256_467, %c0_468], %1317 {strides = array<i32>} : memref<288x128xf32, #tpu.memory_space<vmem>>, vector<32x128xf32>,
    %c0_469 = arith.constant 0 : index
    %c0_470 = arith.constant 0 : index
    %1326 = vector.load %arg5[%c0_469, %c0_470] : memref<3x288xf32, #tpu.memory_space<vmem>>, vector<3x288xf32>
    %c0_471 = arith.constant 0 : index
    %c0_472 = arith.constant 0 : index
    %1327 = vector.load %arg7[%c0_471, %c0_472] : memref<288x128xf32, #tpu.memory_space<vmem>>, vector<288x128xf32>
    %cst_473 = arith.constant dense<0.000000e+00> : vector<3x128xf32>
    %1328 = tpu.matmul %1326, %1327, %cst_473 {dimension_numbers = #tpu.dot_dimension_numbers<[1], [0], [0], [1], [0, 0, 1, 1], [], []>} : vector<3x288xf32>, vector<288x128xf32>, vector<3x128xf32> -> vector<3x128xf32>
    %c0_474 = arith.constant 0 : index
    %c0_475 = arith.constant 0 : index
    %1329 = vector.load %arg6[%c0_474, %c0_475] : memref<3x128xf32, #tpu.memory_space<vmem>>, vector<3x128xf32>
    tpu.vector_store %arg6[%c0_474, %c0_475], %1328 {strides = array<i32>} : memref<3x128xf32, #tpu.memory_space<vmem>>, vector<3x128xf32>,
    return
  }
  func.func @transform_0(%arg0: i32) -> (i32, i32) {
    %c0_i32 = arith.constant 0 : i32
    %c0_i32_0 = arith.constant 0 : i32
    return %c0_i32, %arg0 : i32, i32
  }
  func.func @transform_1(%arg0: i32) -> (i32, i32) {
    %c0_i32 = arith.constant 0 : i32
    %c0_i32_0 = arith.constant 0 : i32
    %c0_i32_1 = arith.constant 0 : i32
    return %c0_i32, %c0_i32_0 : i32, i32
  }
  func.func @transform_2(%arg0: i32) -> (i32, i32) {
    %c0_i32 = arith.constant 0 : i32
    %c0_i32_0 = arith.constant 0 : i32
    %c0_i32_1 = arith.constant 0 : i32
    return %c0_i32, %c0_i32_0 : i32, i32
  }
  func.func @transform_3(%arg0: i32) -> (i32, i32) {
    %c0_i32 = arith.constant 0 : i32
    %c0_i32_0 = arith.constant 0 : i32
    %c0_i32_1 = arith.constant 0 : i32
    return %c0_i32, %c0_i32_0 : i32, i32
  }
  func.func @transform_4(%arg0: i32) -> (i32, i32) {
    %c0_i32 = arith.constant 0 : i32
    %c0_i32_0 = arith.constant 0 : i32
    %c0_i32_1 = arith.constant 0 : i32
    return %c0_i32, %c0_i32_0 : i32, i32
  }
  func.func @transform_5(%arg0: i32) -> (i32, i32) {
    %c0_i32 = arith.constant 0 : i32
    %c0_i32_0 = arith.constant 0 : i32
    return %c0_i32, %arg0 : i32, i32
  }
}

</mosaic_0001>

<llo_original>
// kernel: kan_actor_critic_forward.1
$region0: #{kan_actor_critic_forward.1}
  #allocation0 [shape = 'u32[]', space=smem, size = 0x4, offset = 0x4, fixed_abs, tag = 'smem constant byte address 0x4 - core index']
  #allocation1 [shape = 'u32[144,128]{1,0:T(1,128)}', space=vmem, size = 0x12000, scoped, tag = 'internal scratch']
  #allocation2 [shape = 'f32[288,128]{1,0:T(8,128)}', space=vmem, size = 0x24000, scoped, tag = 'scratch operand']
  %s0 = inlined_call_operand.vmem [shape: f32[4,128], index: 0, kind: input, shape index: {}]
  %s1 = inlined_call_operand.hbm [shape: f32[16,36], index: 1, kind: input, shape index: {}]
  %s2 = inlined_call_operand.hbm [shape: f32[32,144], index: 2, kind: input, shape index: {}]
  %s3 = inlined_call_operand.hbm [shape: f32[32,288], index: 3, kind: input, shape index: {}]
  %s4 = inlined_call_operand.vmem [shape: f32[3,288], index: 4, kind: input, shape index: {}]
  %s5 = inlined_call_operand.vmem [shape: f32[3,128], index: 5, kind: output, shape index: {}]
  %s6 = sld [smem:[#allocation0]]
  $region42: #{kan_actor_critic_forward.1} parent=0
    _
  %s8 = ssub.s32 1, %s6
  %s9 = scalar_select 0, %s8, %s6
  $region1: #{kan_actor_critic_forward.1} parent=0
    #allocation3 [shape = 'u8[8192]{0}', space=vmem, size = 0x2000, scoped, tag = 'input window, operand 1, single buffered']
    #allocation4 [shape = 's32[1]{0}', space=sflag, size = 0x4, scoped, tag = 'scoped memory for kan_actor_critic_forward.1']
    #allocation5 [shape = 'u8[32768]{0}', space=vmem, size = 0x8000, scoped, tag = 'input window, operand 2, single buffered']
    #allocation6 [shape = 's32[1]{0}', space=sflag, size = 0x4, scoped, tag = 'scoped memory for kan_actor_critic_forward.1']
    #allocation7 [shape = 'u8[49152]{0}', space=vmem, size = 0xc000, scoped, tag = 'input window, operand 3, single buffered']
    %10 = vsyncpa [#allocation4], 0
    %11 = vsyncpa [#allocation6], 0
    // Predicated region
    $region2: #{kan_actor_critic_forward.1} parent=1 // pred_check
      _
    $region3: #{kan_actor_critic_forward.1} parent=1 // pred_check_branch
      %13 = sbr.rel (0) target = $region5
    $region4: #{kan_actor_critic_forward.1} parent=1 // pred_region
      _
    $region5: #{kan_actor_critic_forward.1} parent=1 // pred_fallthru
      _
    // Predicated region
    $region6: #{kan_actor_critic_forward.1} parent=1 // pred_check
      _
    $region7: #{kan_actor_critic_forward.1} parent=1 // pred_check_branch
      %15 = sbr.rel (0) target = $region9
    $region8: #{kan_actor_critic_forward.1} parent=1 // pred_region
      %s17 = ssub.s32 256, 256
      %18 = vsyncadd [#allocation4], %s17
      %s19 = sshll.u32 [#allocation3], 4
      %s20 = int_to_ptr.vmem [resolvable:$true] %s19
      %25 = dma.hbm_to_vmem [thread:$0]  %s1, 256, %s20, [#allocation4], 128, 128, 8
    $region9: #{kan_actor_critic_forward.1} parent=1 // pred_fallthru
      _
    // Predicated region
    $region10: #{kan_actor_critic_forward.1} parent=1 // pred_check
      _
    $region11: #{kan_actor_critic_forward.1} parent=1 // pred_check_branch
      %27 = sbr.rel (0) target = $region13
    $region12: #{kan_actor_critic_forward.1} parent=1 // pred_region
      %s29 = ssub.s32 1024, 1024
      %30 = vsyncadd [#allocation6], %s29
      %s31 = sshll.u32 [#allocation5], 4
      %s32 = int_to_ptr.vmem [resolvable:$true] %s31
      %37 = dma.hbm_to_vmem [thread:$0]  %s2, 1024, %s32, [#allocation6], 256, 256, 16
    $region13: #{kan_actor_critic_forward.1} parent=1 // pred_fallthru
      _
    // Predicated region
    $region14: #{kan_actor_critic_forward.1} parent=1 // pred_check
      _
    $region15: #{kan_actor_critic_forward.1} parent=1 // pred_check_branch
      %39 = sbr.rel (0) target = $region17
    $region16: #{kan_actor_critic_forward.1} parent=1 // pred_region
      %s41 = ssub.s32 1536, 1536
      %42 = vsyncadd [#allocation6], %s41
      %s43 = sshll.u32 [#allocation7], 4
      %s44 = int_to_ptr.vmem [resolvable:$true] %s43
      %49 = dma.hbm_to_vmem [thread:$0]  %s3, 1536, %s44, [#allocation6], 384, 384, 24
    $region17: #{kan_actor_critic_forward.1} parent=1 // pred_fallthru
      _
    // Predicated region
    $region18: #{kan_actor_critic_forward.1} parent=1 // pred_check
      _
    $region19: #{kan_actor_critic_forward.1} parent=1 // pred_check_branch
      %51 = sbr.rel (0) target = $region21
    $region20: #{kan_actor_critic_forward.1} parent=1 // pred_region
      _
    $region21: #{kan_actor_critic_forward.1} parent=1 // pred_fallthru
      _
    // Predicated region
    $region22: #{kan_actor_critic_forward.1} parent=1 // pred_check
      _
    $region23: #{kan_actor_critic_forward.1} parent=1 // pred_check_branch
      %53 = sbr.rel (0) target = $region25
    $region24: #{kan_actor_critic_forward.1} parent=1 // pred_region
      %54 = dma.done [#allocation4], 256
    $region25: #{kan_actor_critic_forward.1} parent=1 // pred_fallthru
      _
    // Predicated region
    $region26: #{kan_actor_critic_forward.1} parent=1 // pred_check
      _
    $region27: #{kan_actor_critic_forward.1} parent=1 // pred_check_branch
      %56 = sbr.rel (0) target = $region29
    $region28: #{kan_actor_critic_forward.1} parent=1 // pred_region
      %57 = dma.done [#allocation6], 1024
    $region29: #{kan_actor_critic_forward.1} parent=1 // pred_fallthru
      _
    // Predicated region
    $region30: #{kan_actor_critic_forward.1} parent=1 // pred_check
      _
    $region31: #{kan_actor_critic_forward.1} parent=1 // pred_check_branch
      %59 = sbr.rel (0) target = $region33
    $region32: #{kan_actor_critic_forward.1} parent=1 // pred_region
      %60 = dma.done [#allocation6], 1536
    $region33: #{kan_actor_critic_forward.1} parent=1 // pred_fallthru
      _
    %v61 = vld [vmem:[%s0] sm:$0xf]
    %v62 = vxor.u32 %v61, 2147483648
    %v63 = vmul.f32 %v62, 1.442695
    %v64 = vpow.pop %v63
    %v65 = vadd.f32 %v64, 1.0
    %v66 = vrcp.pop %v65
    %v67 = vmul.f32 1.0, %v66
    %v68 = vmul.f32 %v61, %v67
    %69 = vst [vmem:[#allocation2] sm:$0xf] %v68
    %vm70 = vcmp.ge.f32.partialorder %v61, -2.2
    %v71 = vsel %vm70, 1, 0
    %v72 = vcvt.s32.f32 %v71
    %vm73 = vcmp.ge.f32.partialorder %v61, -1.8
    %v74 = vsel %vm73, 1, 0
    %v75 = vcvt.s32.f32 %v74
    %vm76 = vcmp.ge.f32.partialorder %v61, -1.4
    %v77 = vsel %vm76, 1, 0
    %v78 = vcvt.s32.f32 %v77
    %vm79 = vcmp.ge.f32.partialorder %v61, -1.0
    %v80 = vsel %vm79, 1, 0
    %v81 = vcvt.s32.f32 %v80
    %vm82 = vcmp.ge.f32.partialorder %v61, -0.6
    %v83 = vsel %vm82, 1, 0
    %v84 = vcvt.s32.f32 %v83
    %vm85 = vcmp.ge.f32.partialorder %v61, -0.2
    %v86 = vsel %vm85, 1, 0
    %v87 = vcvt.s32.f32 %v86
    %vm88 = vcmp.ge.f32.partialorder %v61, 0.2
    %v89 = vsel %vm88, 1, 0
    %v90 = vcvt.s32.f32 %v89
    %vm91 = vcmp.ge.f32.partialorder %v61, 0.6
    %v92 = vsel %vm91, 1, 0
    %v93 = vcvt.s32.f32 %v92
    %vm94 = vcmp.ge.f32.partialorder %v61, 1.0
    %v95 = vsel %vm94, 1, 0
    %v96 = vcvt.s32.f32 %v95
    %vm97 = vcmp.ge.f32.partialorder %v61, 1.4
    %v98 = vsel %vm97, 1, 0
    %v99 = vcvt.s32.f32 %v98
    %vm100 = vcmp.ge.f32.partialorder %v61, 1.8
    %v101 = vsel %vm100, 1, 0
    %v102 = vcvt.s32.f32 %v101
    %vm103 = vcmp.ge.f32.partialorder %v61, 2.2
    %v104 = vsel %vm103, 1, 0
    %v105 = vcvt.s32.f32 %v104
    %v106 = vsub.f32 %v72, %v75
    %v107 = vsub.f32 %v75, %v78
    %v108 = vsub.f32 %v78, %v81
    %v109 = vsub.f32 %v81, %v84
    %v110 = vsub.f32 %v84, %v87
    %v111 = vsub.f32 %v87, %v90
    %v112 = vsub.f32 %v90, %v93
    %v113 = vsub.f32 %v93, %v96
    %v114 = vsub.f32 %v96, %v99
    %v115 = vsub.f32 %v99, %v102
    %v116 = vsub.f32 %v102, %v105
    %v117 = vsub.f32 %v61, -2.2
    %v118 = vmul.f32 %v117, 2.5
    %v119 = vsub.f32 %v61, -1.8
    %v120 = vmul.f32 %v119, 2.5
    %v121 = vsub.f32 %v61, -1.4
    %v122 = vmul.f32 %v121, 2.5
    %v123 = vsub.f32 %v61, -1.0
    %v124 = vmul.f32 %v123, 2.5
    %v125 = vsub.f32 %v61, -0.6
    %v126 = vmul.f32 %v125, 2.5
    %v127 = vsub.f32 %v61, -0.2
    %v128 = vmul.f32 %v127, 2.5
    %v129 = vsub.f32 %v61, 0.2
    %v130 = vmul.f32 %v129, 2.5
    %v131 = vsub.f32 %v61, 0.6
    %v132 = vmul.f32 %v131, 2.5
    %v133 = vsub.f32 %v61, 1.0
    %v134 = vmul.f32 %v133, 2.5
    %v135 = vsub.f32 %v61, 1.4
    %v136 = vmul.f32 %v135, 2.5
    %v137 = vsub.f32 %v61, 1.8
    %v138 = vmul.f32 %v137, 2.5
    %v139 = vmul.f32 %v118, %v106
    %v140 = vsub.f32 1.0, %v120
    %v141 = vmul.f32 %v140, %v107
    %v142 = vadd.f32 %v139, %v141
    %v143 = vmul.f32 %v120, %v107
    %v144 = vsub.f32 1.0, %v122
    %v145 = vmul.f32 %v144, %v108
    %v146 = vadd.f32 %v143, %v145
    %v147 = vmul.f32 %v122, %v108
    %v148 = vsub.f32 1.0, %v124
    %v149 = vmul.f32 %v148, %v109
    %v150 = vadd.f32 %v147, %v149
    %v151 = vmul.f32 %v124, %v109
    %v152 = vsub.f32 1.0, %v126
    %v153 = vmul.f32 %v152, %v110
    %v154 = vadd.f32 %v151, %v153
    %v155 = vmul.f32 %v126, %v110
    %v156 = vsub.f32 1.0, %v128
    %v157 = vmul.f32 %v156, %v111
    %v158 = vadd.f32 %v155, %v157
    %v159 = vmul.f32 %v128, %v111
    %v160 = vsub.f32 1.0, %v130
    %v161 = vmul.f32 %v160, %v112
    %v162 = vadd.f32 %v159, %v161
    %v163 = vmul.f32 %v130, %v112
    %v164 = vsub.f32 1.0, %v132
    %v165 = vmul.f32 %v164, %v113
    %v166 = vadd.f32 %v163, %v165
    %v167 = vmul.f32 %v132, %v113
    %v168 = vsub.f32 1.0, %v134
    %v169 = vmul.f32 %v168, %v114
    %v170 = vadd.f32 %v167, %v169
    %v171 = vmul.f32 %v134, %v114
    %v172 = vsub.f32 1.0, %v136
    %v173 = vmul.f32 %v172, %v115
    %v174 = vadd.f32 %v171, %v173
    %v175 = vmul.f32 %v136, %v115
    %v176 = vsub.f32 1.0, %v138
    %v177 = vmul.f32 %v176, %v116
    %v178 = vadd.f32 %v175, %v177
    %v179 = vmul.f32 %v117, 1.25
    %v180 = vmul.f32 %v119, 1.25
    %v181 = vmul.f32 %v121, 1.25
    %v182 = vmul.f32 %v123, 1.25
    %v183 = vmul.f32 %v125, 1.25
    %v184 = vmul.f32 %v127, 1.25
    %v185 = vmul.f32 %v129, 1.25
    %v186 = vmul.f32 %v131, 1.25
    %v187 = vmul.f32 %v133, 1.25
    %v188 = vmul.f32 %v135, 1.25
    %v189 = vmul.f32 %v179, %v142
    %v190 = vsub.f32 1.0, %v180
    %v191 = vmul.f32 %v190, %v146
    %v192 = vadd.f32 %v189, %v191
    %v193 = vmul.f32 %v180, %v146
    %v194 = vsub.f32 1.0, %v181
    %v195 = vmul.f32 %v194, %v150
    %v196 = vadd.f32 %v193, %v195
    %v197 = vmul.f32 %v181, %v150
    %v198 = vsub.f32 1.0, %v182
    %v199 = vmul.f32 %v198, %v154
    %v200 = vadd.f32 %v197, %v199
    %v201 = vmul.f32 %v182, %v154
    %v202 = vsub.f32 1.0, %v183
    %v203 = vmul.f32 %v202, %v158
    %v204 = vadd.f32 %v201, %v203
    %v205 = vmul.f32 %v183, %v158
    %v206 = vsub.f32 1.0, %v184
    %v207 = vmul.f32 %v206, %v162
    %v208 = vadd.f32 %v205, %v207
    %v209 = vmul.f32 %v184, %v162
    %v210 = vsub.f32 1.0, %v185
    %v211 = vmul.f32 %v210, %v166
    %v212 = vadd.f32 %v209, %v211
    %v213 = vmul.f32 %v185, %v166
    %v214 = vsub.f32 1.0, %v186
    %v215 = vmul.f32 %v214, %v170
    %v216 = vadd.f32 %v213, %v215
    %v217 = vmul.f32 %v186, %v170
    %v218 = vsub.f32 1.0, %v187
    %v219 = vmul.f32 %v218, %v174
    %v220 = vadd.f32 %v217, %v219
    %v221 = vmul.f32 %v187, %v174
    %v222 = vsub.f32 1.0, %v188
    %v223 = vmul.f32 %v222, %v178
    %v224 = vadd.f32 %v221, %v223
    %v225 = vmul.f32 %v117, 0.8333333
    %v226 = vmul.f32 %v119, 0.8333333
    %v227 = vmul.f32 %v121, 0.8333333
    %v228 = vmul.f32 %v123, 0.8333333
    %v229 = vmul.f32 %v125, 0.8333333
    %v230 = vmul.f32 %v127, 0.8333333
    %v231 = vmul.f32 %v129, 0.8333333
    %v232 = vmul.f32 %v131, 0.8333333
    %v233 = vmul.f32 %v133, 0.8333333
    %v234 = vmul.f32 %v225, %v192
    %v235 = vsub.f32 1.0, %v226
    %v236 = vmul.f32 %v235, %v196
    %v237 = vadd.f32 %v234, %v236
    %v238 = vmul.f32 %v226, %v196
    %v239 = vsub.f32 1.0, %v227
    %v240 = vmul.f32 %v239, %v200
    %v241 = vadd.f32 %v238, %v240
    %v242 = vmul.f32 %v227, %v200
    %v243 = vsub.f32 1.0, %v228
    %v244 = vmul.f32 %v243, %v204
    %v245 = vadd.f32 %v242, %v244
    %v246 = vmul.f32 %v228, %v204
    %v247 = vsub.f32 1.0, %v229
    %v248 = vmul.f32 %v247, %v208
    %v249 = vadd.f32 %v246, %v248
    %v250 = vmul.f32 %v229, %v208
    %v251 = vsub.f32 1.0, %v230
    %v252 = vmul.f32 %v251, %v212
    %v253 = vadd.f32 %v250, %v252
    %v254 = vmul.f32 %v230, %v212
    %v255 = vsub.f32 1.0, %v231
    %v256 = vmul.f32 %v255, %v216
    %v257 = vadd.f32 %v254, %v256
    %v258 = vmul.f32 %v231, %v216
    %v259 = vsub.f32 1.0, %v232
    %v260 = vmul.f32 %v259, %v220
    %v261 = vadd.f32 %v258, %v260
    %v262 = vmul.f32 %v232, %v220
    %v263 = vsub.f32 1.0, %v233
    %v264 = vmul.f32 %v263, %v224
    %v265 = vadd.f32 %v262, %v264
    %266 = vst [vmem:[#allocation2 + $0x4] sm:$0xf] %v237
    %267 = vst [vmem:[#allocation2 + $0x8] sm:$0xf] %v241
    %268 = vst [vmem:[#allocation2 + $0xc] sm:$0xf] %v245
    %269 = vst [vmem:[#allocation2 + $0x10] sm:$0xf] %v249
    %270 = vst [vmem:[#allocation2 + $0x14] sm:$0xf] %v253
    %271 = vst [vmem:[#allocation2 + $0x18] sm:$0xf] %v257
    %272 = vst [vmem:[#allocation2 + $0x1c] sm:$0xf] %v261
    %273 = vst [vmem:[#allocation2 + $0x20] sm:$0xf] %v265
    %v274 = vld [vmem:[#allocation3] sm:$0xff]
    %v275 = vld [vmem:[#allocation3 + $0x8] sm:$0xff]
    %v276 = vld [vmem:[#allocation2] sm:$0xff]
    %v277 = vld [vmem:[#allocation2 + $0x8] sm:$0xff]
    %v278 = vld [vmem:[#allocation2 + $0x10] sm:$0xff]
    %v279 = vld [vmem:[#allocation2 + $0x18] sm:$0xff]
    %v280 = vld [vmem:[#allocation2 + $0x20] sm:$0xf]
    %vm281 = vcmask 293888
    %v283 = vsel %vm281, %v274, 0
    %v286 = vsel %vm281, %v275, 0
    %vm288 = vcmask 1043456
    %v290 = vsel %vm288, %v280, 0
    %292 = vmatprep.subr.mxu0 0.0
    %293 = vmatpush1.msra.mxu0 %v276
    %294 = vmatprep.subr.mxu0 0.0
    %295 = vmatpush1.msra.mxu0 %v277
    %296 = vmatprep.subr.mxu0 0.0
    %297 = vmatpush1.msra.mxu0 %v278
    %298 = vmatprep.subr.mxu0 0.0
    %299 = vmatpush1.msra.mxu0 %v279
    %300 = vmatprep.subr.mxu0 0.0
    %301 = vmatpush1.msra.mxu0 %v290
    %302 = vmatprep.subr.mxu0 0.0
    %303 = vmatpush1.msra.mxu0 0.0
    %304 = vmatprep.subr.mxu0 0.0
    %305 = vmatpush1.msra.mxu0 0.0
    %306 = vmatprep.subr.mxu0 0.0
    %307 = vmatpush1.msra.mxu0 0.0
    %308 = vmatprep.subr.mxu0 0.0
    %309 = vmatpush1.msra.mxu0 0.0
    %310 = vmatprep.subr.mxu0 0.0
    %311 = vmatpush1.msra.mxu0 0.0
    %312 = vmatprep.subr.mxu0 0.0
    %313 = vmatpush1.msra.mxu0 0.0
    %314 = vmatprep.subr.mxu0 0.0
    %315 = vmatpush1.msra.mxu0 0.0
    %316 = vmatprep.subr.mxu0 0.0
    %317 = vmatpush1.msra.mxu0 0.0
    %318 = vmatprep.subr.mxu0 0.0
    %319 = vmatpush1.msra.mxu0 0.0
    %320 = vmatprep.subr.mxu0 0.0
    %321 = vmatpush1.msra.mxu0 0.0
    %322 = vmatprep.subr.mxu0 0.0
    %323 = vmatpush1.msra.mxu0 0.0
    %324 = vmatprep.subr.mxu0 0.0
    %325 = vmatpush1.msra.mxu0 0.0
    %326 = vmatprep.subr.mxu0 0.0
    %327 = vmatpush1.msra.mxu0 0.0
    %328 = vmatprep.subr.mxu0 0.0
    %329 = vmatpush1.msra.mxu0 0.0
    %330 = vmatprep.subr.mxu0 0.0
    %331 = vmatpush1.msra.mxu0 0.0
    %332 = vmatprep.subr.mxu0 0.0
    %333 = vmatpush1.msra.mxu0 0.0
    %334 = vmatprep.subr.mxu0 0.0
    %335 = vmatpush1.msra.mxu0 0.0
    %336 = vmatprep.subr.mxu0 0.0
    %337 = vmatpush1.msra.mxu0 0.0
    %338 = vmatprep.subr.mxu0 0.0
    %339 = vmatpush1.msra.mxu0 0.0
    %340 = vmatprep.subr.mxu0 0.0
    %341 = vmatpush1.msra.mxu0 0.0
    %342 = vmatprep.subr.mxu0 0.0
    %343 = vmatpush1.msra.mxu0 0.0
    %344 = vmatprep.subr.mxu0 0.0
    %345 = vmatpush1.msra.mxu0 0.0
    %346 = vmatprep.subr.mxu0 0.0
    %347 = vmatpush1.msra.mxu0 0.0
    %348 = vmatprep.subr.mxu0 0.0
    %349 = vmatpush1.msra.mxu0 0.0
    %350 = vmatprep.subr.mxu0 0.0
    %351 = vmatpush1.msra.mxu0 0.0
    %352 = vmatprep.subr.mxu0 0.0
    %353 = vmatpush1.msra.mxu0 0.0
    %354 = vmatprep.subr.mxu0 0.0
    %355 = vmatpush1.msra.mxu0 0.0
    %356 = vmatprep.mubr.f32.mxu0 0.0
    %357 = vmatmul.mubr.f32.gmra.mrb[0].mxu0 %v283
    %v358 = vpop.f32.mrb[0].mxu0
    %v359 = vadd.f32 0.0, %v358
    %v360 = vpop.f32.mrb[0].mxu0
    %361 = vmatprep.mubr.f32.mxu0 0.0
    %362 = vmatmul.mubr.f32.gmra.mrb[0].mxu0 %v286
    %v363 = vpop.f32.mrb[0].mxu0
    %v364 = vadd.f32 0.0, %v363
    %v365 = vpop.f32.mrb[0].mxu0
    %366 = vdwg.mxu0
    %v367 = vxor.u32 %v359, 2147483648
    %v368 = vxor.u32 %v364, 2147483648
    %v369 = vmul.f32 %v367, 1.442695
    %v370 = vpow.pop %v369
    %v371 = vmul.f32 %v368, 1.442695
    %v372 = vpow.pop %v371
    %v373 = vadd.f32 %v370, 1.0
    %v374 = vadd.f32 %v372, 1.0
    %v375 = vrcp.pop %v373
    %v376 = vmul.f32 1.0, %v375
    %v377 = vrcp.pop %v374
    %v378 = vmul.f32 1.0, %v377
    %v379 = vmul.f32 %v359, %v376
    %v380 = vmul.f32 %v364, %v378
    %381 = vst [vmem:[#allocation2] sm:$0xff] %v379
    %382 = vst [vmem:[#allocation2 + $0x8] sm:$0xff] %v380
    %vm383 = vcmp.ge.f32.partialorder %v359, -2.2
    %vm384 = vcmp.ge.f32.partialorder %v364, -2.2
    %v385 = vsel %vm383, 1, 0
    %v386 = vsel %vm384, 1, 0
    %v387 = vcvt.s32.f32 %v385
    %v388 = vcvt.s32.f32 %v386
    %vm389 = vcmp.ge.f32.partialorder %v359, -1.8
    %vm390 = vcmp.ge.f32.partialorder %v364, -1.8
    %v391 = vsel %vm389, 1, 0
    %v392 = vsel %vm390, 1, 0
    %v393 = vcvt.s32.f32 %v391
    %v394 = vcvt.s32.f32 %v392
    %vm395 = vcmp.ge.f32.partialorder %v359, -1.4
    %vm396 = vcmp.ge.f32.partialorder %v364, -1.4
    %v397 = vsel %vm395, 1, 0
    %v398 = vsel %vm396, 1, 0
    %v399 = vcvt.s32.f32 %v397
    %v400 = vcvt.s32.f32 %v398
    %vm401 = vcmp.ge.f32.partialorder %v359, -1.0
    %vm402 = vcmp.ge.f32.partialorder %v364, -1.0
    %v403 = vsel %vm401, 1, 0
    %v404 = vsel %vm402, 1, 0
    %v405 = vcvt.s32.f32 %v403
    %v406 = vcvt.s32.f32 %v404
    %vm407 = vcmp.ge.f32.partialorder %v359, -0.6
    %vm408 = vcmp.ge.f32.partialorder %v364, -0.6
    %v409 = vsel %vm407, 1, 0
    %v410 = vsel %vm408, 1, 0
    %v411 = vcvt.s32.f32 %v409
    %v412 = vcvt.s32.f32 %v410
    %vm413 = vcmp.ge.f32.partialorder %v359, -0.2
    %vm414 = vcmp.ge.f32.partialorder %v364, -0.2
    %v415 = vsel %vm413, 1, 0
    %v416 = vsel %vm414, 1, 0
    %v417 = vcvt.s32.f32 %v415
    %v418 = vcvt.s32.f32 %v416
    %vm419 = vcmp.ge.f32.partialorder %v359, 0.2
    %vm420 = vcmp.ge.f32.partialorder %v364, 0.2
    %v421 = vsel %vm419, 1, 0
    %v422 = vsel %vm420, 1, 0
    %v423 = vcvt.s32.f32 %v421
    %v424 = vcvt.s32.f32 %v422
    %vm425 = vcmp.ge.f32.partialorder %v359, 0.6
    %vm426 = vcmp.ge.f32.partialorder %v364, 0.6
    %v427 = vsel %vm425, 1, 0
    %v428 = vsel %vm426, 1, 0
    %v429 = vcvt.s32.f32 %v427
    %v430 = vcvt.s32.f32 %v428
    %vm431 = vcmp.ge.f32.partialorder %v359, 1.0
    %vm432 = vcmp.ge.f32.partialorder %v364, 1.0
    %v433 = vsel %vm431, 1, 0
    %v434 = vsel %vm432, 1, 0
    %v435 = vcvt.s32.f32 %v433
    %v436 = vcvt.s32.f32 %v434
    %vm437 = vcmp.ge.f32.partialorder %v359, 1.4
    %vm438 = vcmp.ge.f32.partialorder %v364, 1.4
    %v439 = vsel %vm437, 1, 0
    %v440 = vsel %vm438, 1, 0
    %v441 = vcvt.s32.f32 %v439
    %v442 = vcvt.s32.f32 %v440
    %vm443 = vcmp.ge.f32.partialorder %v359, 1.8
    %vm444 = vcmp.ge.f32.partialorder %v364, 1.8
    %v445 = vsel %vm443, 1, 0
    %v446 = vsel %vm444, 1, 0
    %v447 = vcvt.s32.f32 %v445
    %v448 = vcvt.s32.f32 %v446
    %vm449 = vcmp.ge.f32.partialorder %v359, 2.2
    %vm450 = vcmp.ge.f32.partialorder %v364, 2.2
    %v451 = vsel %vm449, 1, 0
    %v452 = vsel %vm450, 1, 0
    %v453 = vcvt.s32.f32 %v451
    %v454 = vcvt.s32.f32 %v452
    %v455 = vsub.f32 %v387, %v393
    %v456 = vsub.f32 %v388, %v394
    %v457 = vsub.f32 %v393, %v399
    %v458 = vsub.f32 %v394, %v400
    %v459 = vsub.f32 %v399, %v405
    %v460 = vsub.f32 %v400, %v406
    %v461 = vsub.f32 %v405, %v411
    %v462 = vsub.f32 %v406, %v412
    %v463 = vsub.f32 %v411, %v417
    %v464 = vsub.f32 %v412, %v418
    %v465 = vsub.f32 %v417, %v423
    %v466 = vsub.f32 %v418, %v424
    %v467 = vsub.f32 %v423, %v429
    %v468 = vsub.f32 %v424, %v430
    %v469 = vsub.f32 %v429, %v435
    %v470 = vsub.f32 %v430, %v436
    %v471 = vsub.f32 %v435, %v441
    %v472 = vsub.f32 %v436, %v442
    %v473 = vsub.f32 %v441, %v447
    %v474 = vsub.f32 %v442, %v448
    %v475 = vsub.f32 %v447, %v453
    %v476 = vsub.f32 %v448, %v454
    %v477 = vsub.f32 %v359, -2.2
    %v478 = vsub.f32 %v364, -2.2
    %v479 = vmul.f32 %v477, 2.5
    %v480 = vmul.f32 %v478, 2.5
    %v481 = vsub.f32 %v359, -1.8
    %v482 = vsub.f32 %v364, -1.8
    %v483 = vmul.f32 %v481, 2.5
    %v484 = vmul.f32 %v482, 2.5
    %v485 = vsub.f32 %v359, -1.4
    %v486 = vsub.f32 %v364, -1.4
    %v487 = vmul.f32 %v485, 2.5
    %v488 = vmul.f32 %v486, 2.5
    %v489 = vsub.f32 %v359, -1.0
    %v490 = vsub.f32 %v364, -1.0
    %v491 = vmul.f32 %v489, 2.5
    %v492 = vmul.f32 %v490, 2.5
    %v493 = vsub.f32 %v359, -0.6
    %v494 = vsub.f32 %v364, -0.6
    %v495 = vmul.f32 %v493, 2.5
    %v496 = vmul.f32 %v494, 2.5
    %v497 = vsub.f32 %v359, -0.2
    %v498 = vsub.f32 %v364, -0.2
    %v499 = vmul.f32 %v497, 2.5
    %v500 = vmul.f32 %v498, 2.5
    %v501 = vsub.f32 %v359, 0.2
    %v502 = vsub.f32 %v364, 0.2
    %v503 = vmul.f32 %v501, 2.5
    %v504 = vmul.f32 %v502, 2.5
    %v505 = vsub.f32 %v359, 0.6
    %v506 = vsub.f32 %v364, 0.6
    %v507 = vmul.f32 %v505, 2.5
    %v508 = vmul.f32 %v506, 2.5
    %v509 = vsub.f32 %v359, 1.0
    %v510 = vsub.f32 %v364, 1.0
    %v511 = vmul.f32 %v509, 2.5
    %v512 = vmul.f32 %v510, 2.5
    %v513 = vsub.f32 %v359, 1.4
    %v514 = vsub.f32 %v364, 1.4
    %v515 = vmul.f32 %v513, 2.5
    %v516 = vmul.f32 %v514, 2.5
    %v517 = vsub.f32 %v359, 1.8
    %v518 = vsub.f32 %v364, 1.8
    %v519 = vmul.f32 %v517, 2.5
    %v520 = vmul.f32 %v518, 2.5
    %v521 = vmul.f32 %v479, %v455
    %v522 = vmul.f32 %v480, %v456
    %v523 = vsub.f32 1.0, %v483
    %v524 = vsub.f32 1.0, %v484
    %v525 = vmul.f32 %v523, %v457
    %v526 = vmul.f32 %v524, %v458
    %v527 = vadd.f32 %v521, %v525
    %v528 = vadd.f32 %v522, %v526
    %v529 = vmul.f32 %v483, %v457
    %v530 = vmul.f32 %v484, %v458
    %v531 = vsub.f32 1.0, %v487
    %v532 = vsub.f32 1.0, %v488
    %v533 = vmul.f32 %v531, %v459
    %v534 = vmul.f32 %v532, %v460
    %v535 = vadd.f32 %v529, %v533
    %v536 = vadd.f32 %v530, %v534
    %v537 = vmul.f32 %v487, %v459
    %v538 = vmul.f32 %v488, %v460
    %v539 = vsub.f32 1.0, %v491
    %v540 = vsub.f32 1.0, %v492
    %v541 = vmul.f32 %v539, %v461
    %v542 = vmul.f32 %v540, %v462
    %v543 = vadd.f32 %v537, %v541
    %v544 = vadd.f32 %v538, %v542
    %v545 = vmul.f32 %v491, %v461
    %v546 = vmul.f32 %v492, %v462
    %v547 = vsub.f32 1.0, %v495
    %v548 = vsub.f32 1.0, %v496
    %v549 = vmul.f32 %v547, %v463
    %v550 = vmul.f32 %v548, %v464
    %v551 = vadd.f32 %v545, %v549
    %v552 = vadd.f32 %v546, %v550
    %v553 = vmul.f32 %v495, %v463
    %v554 = vmul.f32 %v496, %v464
    %v555 = vsub.f32 1.0, %v499
    %v556 = vsub.f32 1.0, %v500
    %v557 = vmul.f32 %v555, %v465
    %v558 = vmul.f32 %v556, %v466
    %v559 = vadd.f32 %v553, %v557
    %v560 = vadd.f32 %v554, %v558
    %v561 = vmul.f32 %v499, %v465
    %v562 = vmul.f32 %v500, %v466
    %v563 = vsub.f32 1.0, %v503
    %v564 = vsub.f32 1.0, %v504
    %v565 = vmul.f32 %v563, %v467
    %v566 = vmul.f32 %v564, %v468
    %v567 = vadd.f32 %v561, %v565
    %v568 = vadd.f32 %v562, %v566
    %v569 = vmul.f32 %v503, %v467
    %v570 = vmul.f32 %v504, %v468
    %v571 = vsub.f32 1.0, %v507
    %v572 = vsub.f32 1.0, %v508
    %v573 = vmul.f32 %v571, %v469
    %v574 = vmul.f32 %v572, %v470
    %v575 = vadd.f32 %v569, %v573
    %v576 = vadd.f32 %v570, %v574
    %v577 = vmul.f32 %v507, %v469
    %v578 = vmul.f32 %v508, %v470
    %v579 = vsub.f32 1.0, %v511
    %v580 = vsub.f32 1.0, %v512
    %v581 = vmul.f32 %v579, %v471
    %v582 = vmul.f32 %v580, %v472
    %v583 = vadd.f32 %v577, %v581
    %v584 = vadd.f32 %v578, %v582
    %v585 = vmul.f32 %v511, %v471
    %v586 = vmul.f32 %v512, %v472
    %v587 = vsub.f32 1.0, %v515
    %v588 = vsub.f32 1.0, %v516
    %v589 = vmul.f32 %v587, %v473
    %v590 = vmul.f32 %v588, %v474
    %v591 = vadd.f32 %v585, %v589
    %v592 = vadd.f32 %v586, %v590
    %v593 = vmul.f32 %v515, %v473
    %v594 = vmul.f32 %v516, %v474
    %v595 = vsub.f32 1.0, %v519
    %v596 = vsub.f32 1.0, %v520
    %v597 = vmul.f32 %v595, %v475
    %v598 = vmul.f32 %v596, %v476
    %v599 = vadd.f32 %v593, %v597
    %v600 = vadd.f32 %v594, %v598
    %v601 = vmul.f32 %v477, 1.25
    %v602 = vmul.f32 %v478, 1.25
    %v603 = vmul.f32 %v481, 1.25
    %v604 = vmul.f32 %v482, 1.25
    %v605 = vmul.f32 %v485, 1.25
    %v606 = vmul.f32 %v486, 1.25
    %v607 = vmul.f32 %v489, 1.25
    %v608 = vmul.f32 %v490, 1.25
    %v609 = vmul.f32 %v493, 1.25
    %v610 = vmul.f32 %v494, 1.25
    %v611 = vmul.f32 %v497, 1.25
    %v612 = vmul.f32 %v498, 1.25
    %v613 = vmul.f32 %v501, 1.25
    %v614 = vmul.f32 %v502, 1.25
    %v615 = vmul.f32 %v505, 1.25
    %v616 = vmul.f32 %v506, 1.25
    %v617 = vmul.f32 %v509, 1.25
    %v618 = vmul.f32 %v510, 1.25
    %v619 = vmul.f32 %v513, 1.25
    %v620 = vmul.f32 %v514, 1.25
    %v621 = vmul.f32 %v601, %v527
    %v622 = vmul.f32 %v602, %v528
    %v623 = vsub.f32 1.0, %v603
    %v624 = vsub.f32 1.0, %v604
    %v625 = vmul.f32 %v623, %v535
    %v626 = vmul.f32 %v624, %v536
    %v627 = vadd.f32 %v621, %v625
    %v628 = vadd.f32 %v622, %v626
    %v629 = vmul.f32 %v603, %v535
    %v630 = vmul.f32 %v604, %v536
    %v631 = vsub.f32 1.0, %v605
    %v632 = vsub.f32 1.0, %v606
    %v633 = vmul.f32 %v631, %v543
    %v634 = vmul.f32 %v632, %v544
    %v635 = vadd.f32 %v629, %v633
    %v636 = vadd.f32 %v630, %v634
    %v637 = vmul.f32 %v605, %v543
    %v638 = vmul.f32 %v606, %v544
    %v639 = vsub.f32 1.0, %v607
    %v640 = vsub.f32 1.0, %v608
    %v641 = vmul.f32 %v639, %v551
    %v642 = vmul.f32 %v640, %v552
    %v643 = vadd.f32 %v637, %v641
    %v644 = vadd.f32 %v638, %v642
    %v645 = vmul.f32 %v607, %v551
    %v646 = vmul.f32 %v608, %v552
    %v647 = vsub.f32 1.0, %v609
    %v648 = vsub.f32 1.0, %v610
    %v649 = vmul.f32 %v647, %v559
    %v650 = vmul.f32 %v648, %v560
    %v651 = vadd.f32 %v645, %v649
    %v652 = vadd.f32 %v646, %v650
    %v653 = vmul.f32 %v609, %v559
    %v654 = vmul.f32 %v610, %v560
    %v655 = vsub.f32 1.0, %v611
    %v656 = vsub.f32 1.0, %v612
    %v657 = vmul.f32 %v655, %v567
    %v658 = vmul.f32 %v656, %v568
    %v659 = vadd.f32 %v653, %v657
    %v660 = vadd.f32 %v654, %v658
    %v661 = vmul.f32 %v611, %v567
    %v662 = vmul.f32 %v612, %v568
    %v663 = vsub.f32 1.0, %v613
    %v664 = vsub.f32 1.0, %v614
    %v665 = vmul.f32 %v663, %v575
    %v666 = vmul.f32 %v664, %v576
    %v667 = vadd.f32 %v661, %v665
    %v668 = vadd.f32 %v662, %v666
    %v669 = vmul.f32 %v613, %v575
    %v670 = vmul.f32 %v614, %v576
    %v671 = vsub.f32 1.0, %v615
    %v672 = vsub.f32 1.0, %v616
    %v673 = vmul.f32 %v671, %v583
    %v674 = vmul.f32 %v672, %v584
    %v675 = vadd.f32 %v669, %v673
    %v676 = vadd.f32 %v670, %v674
    %v677 = vmul.f32 %v615, %v583
    %v678 = vmul.f32 %v616, %v584
    %v679 = vsub.f32 1.0, %v617
    %v680 = vsub.f32 1.0, %v618
    %v681 = vmul.f32 %v679, %v591
    %v682 = vmul.f32 %v680, %v592
    %v683 = vadd.f32 %v677, %v681
    %v684 = vadd.f32 %v678, %v682
    %v685 = vmul.f32 %v617, %v591
    %v686 = vmul.f32 %v618, %v592
    %v687 = vsub.f32 1.0, %v619
    %v688 = vsub.f32 1.0, %v620
    %v689 = vmul.f32 %v687, %v599
    %v690 = vmul.f32 %v688, %v600
    %v691 = vadd.f32 %v685, %v689
    %v692 = vadd.f32 %v686, %v690
    %v693 = vmul.f32 %v477, 0.8333333
    %v694 = vmul.f32 %v478, 0.8333333
    %v695 = vmul.f32 %v481, 0.8333333
    %v696 = vmul.f32 %v482, 0.8333333
    %v697 = vmul.f32 %v485, 0.8333333
    %v698 = vmul.f32 %v486, 0.8333333
    %v699 = vmul.f32 %v489, 0.8333333
    %v700 = vmul.f32 %v490, 0.8333333
    %v701 = vmul.f32 %v493, 0.8333333
    %v702 = vmul.f32 %v494, 0.8333333
    %v703 = vmul.f32 %v497, 0.8333333
    %v704 = vmul.f32 %v498, 0.8333333
    %v705 = vmul.f32 %v501, 0.8333333
    %v706 = vmul.f32 %v502, 0.8333333
    %v707 = vmul.f32 %v505, 0.8333333
    %v708 = vmul.f32 %v506, 0.8333333
    %v709 = vmul.f32 %v509, 0.8333333
    %v710 = vmul.f32 %v510, 0.8333333
    %v711 = vmul.f32 %v693, %v627
    %v712 = vmul.f32 %v694, %v628
    %v713 = vsub.f32 1.0, %v695
    %v714 = vsub.f32 1.0, %v696
    %v715 = vmul.f32 %v713, %v635
    %v716 = vmul.f32 %v714, %v636
    %v717 = vadd.f32 %v711, %v715
    %v718 = vadd.f32 %v712, %v716
    %v719 = vmul.f32 %v695, %v635
    %v720 = vmul.f32 %v696, %v636
    %v721 = vsub.f32 1.0, %v697
    %v722 = vsub.f32 1.0, %v698
    %v723 = vmul.f32 %v721, %v643
    %v724 = vmul.f32 %v722, %v644
    %v725 = vadd.f32 %v719, %v723
    %v726 = vadd.f32 %v720, %v724
    %v727 = vmul.f32 %v697, %v643
    %v728 = vmul.f32 %v698, %v644
    %v729 = vsub.f32 1.0, %v699
    %v730 = vsub.f32 1.0, %v700
    %v731 = vmul.f32 %v729, %v651
    %v732 = vmul.f32 %v730, %v652
    %v733 = vadd.f32 %v727, %v731
    %v734 = vadd.f32 %v728, %v732
    %v735 = vmul.f32 %v699, %v651
    %v736 = vmul.f32 %v700, %v652
    %v737 = vsub.f32 1.0, %v701
    %v738 = vsub.f32 1.0, %v702
    %v739 = vmul.f32 %v737, %v659
    %v740 = vmul.f32 %v738, %v660
    %v741 = vadd.f32 %v735, %v739
    %v742 = vadd.f32 %v736, %v740
    %v743 = vmul.f32 %v701, %v659
    %v744 = vmul.f32 %v702, %v660
    %v745 = vsub.f32 1.0, %v703
    %v746 = vsub.f32 1.0, %v704
    %v747 = vmul.f32 %v745, %v667
    %v748 = vmul.f32 %v746, %v668
    %v749 = vadd.f32 %v743, %v747
    %v750 = vadd.f32 %v744, %v748
    %v751 = vmul.f32 %v703, %v667
    %v752 = vmul.f32 %v704, %v668
    %v753 = vsub.f32 1.0, %v705
    %v754 = vsub.f32 1.0, %v706
    %v755 = vmul.f32 %v753, %v675
    %v756 = vmul.f32 %v754, %v676
    %v757 = vadd.f32 %v751, %v755
    %v758 = vadd.f32 %v752, %v756
    %v759 = vmul.f32 %v705, %v675
    %v760 = vmul.f32 %v706, %v676
    %v761 = vsub.f32 1.0, %v707
    %v762 = vsub.f32 1.0, %v708
    %v763 = vmul.f32 %v761, %v683
    %v764 = vmul.f32 %v762, %v684
    %v765 = vadd.f32 %v759, %v763
    %v766 = vadd.f32 %v760, %v764
    %v767 = vmul.f32 %v707, %v683
    %v768 = vmul.f32 %v708, %v684
    %v769 = vsub.f32 1.0, %v709
    %v770 = vsub.f32 1.0, %v710
    %v771 = vmul.f32 %v769, %v691
    %v772 = vmul.f32 %v770, %v692
    %v773 = vadd.f32 %v767, %v771
    %v774 = vadd.f32 %v768, %v772
    %775 = vst [vmem:[#allocation2 + $0x10] sm:$0xff] %v717
    %776 = vst [vmem:[#allocation2 + $0x18] sm:$0xff] %v718
    %777 = vst [vmem:[#allocation2 + $0x20] sm:$0xff] %v725
    %778 = vst [vmem:[#allocation2 + $0x28] sm:$0xff] %v726
    %779 = vst [vmem:[#allocation2 + $0x30] sm:$0xff] %v733
    %780 = vst [vmem:[#allocation2 + $0x38] sm:$0xff] %v734
    %781 = vst [vmem:[#allocation2 + $0x40] sm:$0xff] %v741
    %782 = vst [vmem:[#allocation2 + $0x48] sm:$0xff] %v742
    %783 = vst [vmem:[#allocation2 + $0x50] sm:$0xff] %v749
    %784 = vst [vmem:[#allocation2 + $0x58] sm:$0xff] %v750
    %785 = vst [vmem:[#allocation2 + $0x60] sm:$0xff] %v757
    %786 = vst [vmem:[#allocation2 + $0x68] sm:$0xff] %v758
    %787 = vst [vmem:[#allocation2 + $0x70] sm:$0xff] %v765
    %788 = vst [vmem:[#allocation2 + $0x78] sm:$0xff] %v766
    %789 = vst [vmem:[#allocation2 + $0x80] sm:$0xff] %v773
    %790 = vst [vmem:[#allocation2 + $0x88] sm:$0xff] %v774
    %v791 = vld [vmem:[#allocation5] sm:$0xff]
    %v792 = vld [vmem:[#allocation5 + $0x8] sm:$0xff]
    %v793 = vld [vmem:[#allocation5 + $0x10] sm:$0xff]
    %v794 = vld [vmem:[#allocation5 + $0x18] sm:$0xff]
    %v795 = vld [vmem:[#allocation5 + $0x20] sm:$0xff]
    %v796 = vld [vmem:[#allocation5 + $0x28] sm:$0xff]
    %v797 = vld [vmem:[#allocation5 + $0x30] sm:$0xff]
    %v798 = vld [vmem:[#allocation5 + $0x38] sm:$0xff]
    %v799 = vld [vmem:[#allocation2] sm:$0xff]
    %v800 = vld [vmem:[#allocation2 + $0x8] sm:$0xff]
    %v801 = vld [vmem:[#allocation2 + $0x10] sm:$0xff]
    %v802 = vld [vmem:[#allocation2 + $0x18] sm:$0xff]
    %v803 = vld [vmem:[#allocation2 + $0x20] sm:$0xff]
    %v804 = vld [vmem:[#allocation2 + $0x28] sm:$0xff]
    %v805 = vld [vmem:[#allocation2 + $0x30] sm:$0xff]
    %v806 = vld [vmem:[#allocation2 + $0x38] sm:$0xff]
    %v807 = vld [vmem:[#allocation2 + $0x40] sm:$0xff]
    %v808 = vld [vmem:[#allocation2 + $0x48] sm:$0xff]
    %v809 = vld [vmem:[#allocation2 + $0x50] sm:$0xff]
    %v810 = vld [vmem:[#allocation2 + $0x58] sm:$0xff]
    %v811 = vld [vmem:[#allocation2 + $0x60] sm:$0xff]
    %v812 = vld [vmem:[#allocation2 + $0x68] sm:$0xff]
    %v813 = vld [vmem:[#allocation2 + $0x70] sm:$0xff]
    %v814 = vld [vmem:[#allocation2 + $0x78] sm:$0xff]
    %v815 = vld [vmem:[#allocation2 + $0x80] sm:$0xff]
    %v816 = vld [vmem:[#allocation2 + $0x88] sm:$0xff]
    %vm817 = vcmask 130048
    %v819 = vsel %vm817, %v792, 0
    %v822 = vsel %vm817, %v794, 0
    %v825 = vsel %vm817, %v796, 0
    %v828 = vsel %vm817, %v798, 0
    %830 = vmatprep.subr.mxu0 0.0
    %831 = vmatpush1.msra.mxu0 %v799
    %832 = vmatprep.subr.mxu0 0.0
    %833 = vmatpush1.msra.mxu0 %v800
    %834 = vmatprep.subr.mxu0 0.0
    %835 = vmatpush1.msra.mxu0 %v801
    %836 = vmatprep.subr.mxu0 0.0
    %837 = vmatpush1.msra.mxu0 %v802
    %838 = vmatprep.subr.mxu0 0.0
    %839 = vmatpush1.msra.mxu0 %v803
    %840 = vmatprep.subr.mxu0 0.0
    %841 = vmatpush1.msra.mxu0 %v804
    %842 = vmatprep.subr.mxu0 0.0
    %843 = vmatpush1.msra.mxu0 %v805
    %844 = vmatprep.subr.mxu0 0.0
    %845 = vmatpush1.msra.mxu0 %v806
    %846 = vmatprep.subr.mxu0 0.0
    %847 = vmatpush1.msra.mxu0 %v807
    %848 = vmatprep.subr.mxu0 0.0
    %849 = vmatpush1.msra.mxu0 %v808
    %850 = vmatprep.subr.mxu0 0.0
    %851 = vmatpush1.msra.mxu0 %v809
    %852 = vmatprep.subr.mxu0 0.0
    %853 = vmatpush1.msra.mxu0 %v810
    %854 = vmatprep.subr.mxu0 0.0
    %855 = vmatpush1.msra.mxu0 %v811
    %856 = vmatprep.subr.mxu0 0.0
    %857 = vmatpush1.msra.mxu0 %v812
    %858 = vmatprep.subr.mxu0 0.0
    %859 = vmatpush1.msra.mxu0 %v813
    %860 = vmatprep.subr.mxu0 0.0
    %861 = vmatpush1.msra.mxu0 %v814
    %862 = vmatprep.subr.mxu0 0.0
    %863 = vmatpush1.msra.mxu0 %v815
    %864 = vmatprep.subr.mxu0 0.0
    %865 = vmatpush1.msra.mxu0 %v816
    %866 = vmatprep.subr.mxu0 0.0
    %867 = vmatpush1.msra.mxu0 0.0
    %868 = vmatprep.subr.mxu0 0.0
    %869 = vmatpush1.msra.mxu0 0.0
    %870 = vmatprep.subr.mxu0 0.0
    %871 = vmatpush1.msra.mxu0 0.0
    %872 = vmatprep.subr.mxu0 0.0
    %873 = vmatpush1.msra.mxu0 0.0
    %874 = vmatprep.subr.mxu0 0.0
    %875 = vmatpush1.msra.mxu0 0.0
    %876 = vmatprep.subr.mxu0 0.0
    %877 = vmatpush1.msra.mxu0 0.0
    %878 = vmatprep.subr.mxu0 0.0
    %879 = vmatpush1.msra.mxu0 0.0
    %880 = vmatprep.subr.mxu0 0.0
    %881 = vmatpush1.msra.mxu0 0.0
    %882 = vmatprep.subr.mxu0 0.0
    %883 = vmatpush1.msra.mxu0 0.0
    %884 = vmatprep.subr.mxu0 0.0
    %885 = vmatpush1.msra.mxu0 0.0
    %886 = vmatprep.subr.mxu0 0.0
    %887 = vmatpush1.msra.mxu0 0.0
    %888 = vmatprep.subr.mxu0 0.0
    %889 = vmatpush1.msra.mxu0 0.0
    %890 = vmatprep.subr.mxu0 0.0
    %891 = vmatpush1.msra.mxu0 0.0
    %892 = vmatprep.subr.mxu0 0.0
    %893 = vmatpush1.msra.mxu0 0.0
    %894 = vmatprep.mubr.f32.mxu0 %v819
    %895 = vmatmul.mubr.f32.gmra.mrb[0].mxu0 %v791
    %v896 = vpop.f32.mrb[0].mxu0
    %v897 = vadd.f32 0.0, %v896
    %v898 = vpop.f32.mrb[0].mxu0
    %899 = vmatprep.mubr.f32.mxu0 %v822
    %900 = vmatmul.mubr.f32.gmra.mrb[0].mxu0 %v793
    %v901 = vpop.f32.mrb[0].mxu0
    %v902 = vadd.f32 0.0, %v901
    %v903 = vpop.f32.mrb[0].mxu0
    %904 = vmatprep.mubr.f32.mxu0 %v825
    %905 = vmatmul.mubr.f32.gmra.mrb[0].mxu0 %v795
    %v906 = vpop.f32.mrb[0].mxu0
    %v907 = vadd.f32 0.0, %v906
    %v908 = vpop.f32.mrb[0].mxu0
    %909 = vmatprep.mubr.f32.mxu0 %v828
    %910 = vmatmul.mubr.f32.gmra.mrb[0].mxu0 %v797
    %v911 = vpop.f32.mrb[0].mxu0
    %v912 = vadd.f32 0.0, %v911
    %v913 = vpop.f32.mrb[0].mxu0
    %914 = vdwg.mxu0
    %v915 = vxor.u32 %v897, 2147483648
    %v916 = vxor.u32 %v902, 2147483648
    %v917 = vxor.u32 %v907, 2147483648
    %v918 = vxor.u32 %v912, 2147483648
    %v919 = vmul.f32 %v915, 1.442695
    %v920 = vpow.pop %v919
    %v921 = vmul.f32 %v916, 1.442695
    %v922 = vpow.pop %v921
    %v923 = vmul.f32 %v917, 1.442695
    %v924 = vpow.pop %v923
    %v925 = vmul.f32 %v918, 1.442695
    %v926 = vpow.pop %v925
    %v927 = vadd.f32 %v920, 1.0
    %v928 = vadd.f32 %v922, 1.0
    %v929 = vadd.f32 %v924, 1.0
    %v930 = vadd.f32 %v926, 1.0
    %v931 = vrcp.pop %v927
    %v932 = vmul.f32 1.0, %v931
    %v933 = vrcp.pop %v928
    %v934 = vmul.f32 1.0, %v933
    %v935 = vrcp.pop %v929
    %v936 = vmul.f32 1.0, %v935
    %v937 = vrcp.pop %v930
    %v938 = vmul.f32 1.0, %v937
    %v939 = vmul.f32 %v897, %v932
    %v940 = vmul.f32 %v902, %v934
    %v941 = vmul.f32 %v907, %v936
    %v942 = vmul.f32 %v912, %v938
    %943 = vst [vmem:[#allocation2] sm:$0xff] %v939
    %944 = vst [vmem:[#allocation2 + $0x8] sm:$0xff] %v940
    %945 = vst [vmem:[#allocation2 + $0x10] sm:$0xff] %v941
    %946 = vst [vmem:[#allocation2 + $0x18] sm:$0xff] %v942
    %vm947 = vcmp.ge.f32.partialorder %v897, -2.2
    %vm948 = vcmp.ge.f32.partialorder %v902, -2.2
    %vm949 = vcmp.ge.f32.partialorder %v907, -2.2
    %vm950 = vcmp.ge.f32.partialorder %v912, -2.2
    %v951 = vsel %vm947, 1, 0
    %v952 = vsel %vm948, 1, 0
    %v953 = vsel %vm949, 1, 0
    %v954 = vsel %vm950, 1, 0
    %v955 = vcvt.s32.f32 %v951
    %v956 = vcvt.s32.f32 %v952
    %v957 = vcvt.s32.f32 %v953
    %v958 = vcvt.s32.f32 %v954
    %vm959 = vcmp.ge.f32.partialorder %v897, -1.8
    %vm960 = vcmp.ge.f32.partialorder %v902, -1.8
    %vm961 = vcmp.ge.f32.partialorder %v907, -1.8
    %vm962 = vcmp.ge.f32.partialorder %v912, -1.8
    %v963 = vsel %vm959, 1, 0
    %v964 = vsel %vm960, 1, 0
    %v965 = vsel %vm961, 1, 0
    %v966 = vsel %vm962, 1, 0
    %v967 = vcvt.s32.f32 %v963
    %v968 = vcvt.s32.f32 %v964
    %v969 = vcvt.s32.f32 %v965
    %v970 = vcvt.s32.f32 %v966
    %vm971 = vcmp.ge.f32.partialorder %v897, -1.4
    %vm972 = vcmp.ge.f32.partialorder %v902, -1.4
    %vm973 = vcmp.ge.f32.partialorder %v907, -1.4
    %vm974 = vcmp.ge.f32.partialorder %v912, -1.4
    %v975 = vsel %vm971, 1, 0
    %v976 = vsel %vm972, 1, 0
    %v977 = vsel %vm973, 1, 0
    %v978 = vsel %vm974, 1, 0
    %v979 = vcvt.s32.f32 %v975
    %v980 = vcvt.s32.f32 %v976
    %v981 = vcvt.s32.f32 %v977
    %v982 = vcvt.s32.f32 %v978
    %vm983 = vcmp.ge.f32.partialorder %v897, -1.0
    %vm984 = vcmp.ge.f32.partialorder %v902, -1.0
    %vm985 = vcmp.ge.f32.partialorder %v907, -1.0
    %vm986 = vcmp.ge.f32.partialorder %v912, -1.0
    %v987 = vsel %vm983, 1, 0
    %v988 = vsel %vm984, 1, 0
    %v989 = vsel %vm985, 1, 0
    %v990 = vsel %vm986, 1, 0
    %v991 = vcvt.s32.f32 %v987
    %v992 = vcvt.s32.f32 %v988
    %v993 = vcvt.s32.f32 %v989
    %v994 = vcvt.s32.f32 %v990
    %vm995 = vcmp.ge.f32.partialorder %v897, -0.6
    %vm996 = vcmp.ge.f32.partialorder %v902, -0.6
    %vm997 = vcmp.ge.f32.partialorder %v907, -0.6
    %vm998 = vcmp.ge.f32.partialorder %v912, -0.6
    %v999 = vsel %vm995, 1, 0
    %v1000 = vsel %vm996, 1, 0
    %v1001 = vsel %vm997, 1, 0
    %v1002 = vsel %vm998, 1, 0
    %v1003 = vcvt.s32.f32 %v999
    %v1004 = vcvt.s32.f32 %v1000
    %v1005 = vcvt.s32.f32 %v1001
    %v1006 = vcvt.s32.f32 %v1002
    %vm1007 = vcmp.ge.f32.partialorder %v897, -0.2
    %vm1008 = vcmp.ge.f32.partialorder %v902, -0.2
    %vm1009 = vcmp.ge.f32.partialorder %v907, -0.2
    %vm1010 = vcmp.ge.f32.partialorder %v912, -0.2
    %v1011 = vsel %vm1007, 1, 0
    %v1012 = vsel %vm1008, 1, 0
    %v1013 = vsel %vm1009, 1, 0
    %v1014 = vsel %vm1010, 1, 0
    %v1015 = vcvt.s32.f32 %v1011
    %v1016 = vcvt.s32.f32 %v1012
    %v1017 = vcvt.s32.f32 %v1013
    %v1018 = vcvt.s32.f32 %v1014
    %vm1019 = vcmp.ge.f32.partialorder %v897, 0.2
    %vm1020 = vcmp.ge.f32.partialorder %v902, 0.2
    %vm1021 = vcmp.ge.f32.partialorder %v907, 0.2
    %vm1022 = vcmp.ge.f32.partialorder %v912, 0.2
    %v1023 = vsel %vm1019, 1, 0
    %v1024 = vsel %vm1020, 1, 0
    %v1025 = vsel %vm1021, 1, 0
    %v1026 = vsel %vm1022, 1, 0
    %v1027 = vcvt.s32.f32 %v1023
    %v1028 = vcvt.s32.f32 %v1024
    %v1029 = vcvt.s32.f32 %v1025
    %v1030 = vcvt.s32.f32 %v1026
    %vm1031 = vcmp.ge.f32.partialorder %v897, 0.6
    %vm1032 = vcmp.ge.f32.partialorder %v902, 0.6
    %vm1033 = vcmp.ge.f32.partialorder %v907, 0.6
    %vm1034 = vcmp.ge.f32.partialorder %v912, 0.6
    %v1035 = vsel %vm1031, 1, 0
    %v1036 = vsel %vm1032, 1, 0
    %v1037 = vsel %vm1033, 1, 0
    %v1038 = vsel %vm1034, 1, 0
    %v1039 = vcvt.s32.f32 %v1035
    %v1040 = vcvt.s32.f32 %v1036
    %v1041 = vcvt.s32.f32 %v1037
    %v1042 = vcvt.s32.f32 %v1038
    %vm1043 = vcmp.ge.f32.partialorder %v897, 1.0
    %vm1044 = vcmp.ge.f32.partialorder %v902, 1.0
    %vm1045 = vcmp.ge.f32.partialorder %v907, 1.0
    %vm1046 = vcmp.ge.f32.partialorder %v912, 1.0
    %v1047 = vsel %vm1043, 1, 0
    %v1048 = vsel %vm1044, 1, 0
    %v1049 = vsel %vm1045, 1, 0
    %v1050 = vsel %vm1046, 1, 0
    %v1051 = vcvt.s32.f32 %v1047
    %v1052 = vcvt.s32.f32 %v1048
    %v1053 = vcvt.s32.f32 %v1049
    %v1054 = vcvt.s32.f32 %v1050
    %vm1055 = vcmp.ge.f32.partialorder %v897, 1.4
    %vm1056 = vcmp.ge.f32.partialorder %v902, 1.4
    %vm1057 = vcmp.ge.f32.partialorder %v907, 1.4
    %vm1058 = vcmp.ge.f32.partialorder %v912, 1.4
    %v1059 = vsel %vm1055, 1, 0
    %v1060 = vsel %vm1056, 1, 0
    %v1061 = vsel %vm1057, 1, 0
    %v1062 = vsel %vm1058, 1, 0
    %v1063 = vcvt.s32.f32 %v1059
    %v1064 = vcvt.s32.f32 %v1060
    %v1065 = vcvt.s32.f32 %v1061
    %v1066 = vcvt.s32.f32 %v1062
    %vm1067 = vcmp.ge.f32.partialorder %v897, 1.8
    %vm1068 = vcmp.ge.f32.partialorder %v902, 1.8
    %vm1069 = vcmp.ge.f32.partialorder %v907, 1.8
    %vm1070 = vcmp.ge.f32.partialorder %v912, 1.8
    %v1071 = vsel %vm1067, 1, 0
    %v1072 = vsel %vm1068, 1, 0
    %v1073 = vsel %vm1069, 1, 0
    %v1074 = vsel %vm1070, 1, 0
    %v1075 = vcvt.s32.f32 %v1071
    %v1076 = vcvt.s32.f32 %v1072
    %v1077 = vcvt.s32.f32 %v1073
    %v1078 = vcvt.s32.f32 %v1074
    %vm1079 = vcmp.ge.f32.partialorder %v897, 2.2
    %vm1080 = vcmp.ge.f32.partialorder %v902, 2.2
    %vm1081 = vcmp.ge.f32.partialorder %v907, 2.2
    %vm1082 = vcmp.ge.f32.partialorder %v912, 2.2
    %v1083 = vsel %vm1079, 1, 0
    %v1084 = vsel %vm1080, 1, 0
    %v1085 = vsel %vm1081, 1, 0
    %v1086 = vsel %vm1082, 1, 0
    %v1087 = vcvt.s32.f32 %v1083
    %v1088 = vcvt.s32.f32 %v1084
    %v1089 = vcvt.s32.f32 %v1085
    %v1090 = vcvt.s32.f32 %v1086
    %v1091 = vsub.f32 %v955, %v967
    %v1092 = vsub.f32 %v956, %v968
    %v1093 = vsub.f32 %v957, %v969
    %v1094 = vsub.f32 %v958, %v970
    %v1095 = vsub.f32 %v967, %v979
    %v1096 = vsub.f32 %v968, %v980
    %v1097 = vsub.f32 %v969, %v981
    %v1098 = vsub.f32 %v970, %v982
    %v1099 = vsub.f32 %v979, %v991
    %v1100 = vsub.f32 %v980, %v992
    %v1101 = vsub.f32 %v981, %v993
    %v1102 = vsub.f32 %v982, %v994
    %v1103 = vsub.f32 %v991, %v1003
    %v1104 = vsub.f32 %v992, %v1004
    %v1105 = vsub.f32 %v993, %v1005
    %v1106 = vsub.f32 %v994, %v1006
    %v1107 = vsub.f32 %v1003, %v1015
    %v1108 = vsub.f32 %v1004, %v1016
    %v1109 = vsub.f32 %v1005, %v1017
    %v1110 = vsub.f32 %v1006, %v1018
    %v1111 = vsub.f32 %v1015, %v1027
    %v1112 = vsub.f32 %v1016, %v1028
    %v1113 = vsub.f32 %v1017, %v1029
    %v1114 = vsub.f32 %v1018, %v1030
    %v1115 = vsub.f32 %v1027, %v1039
    %v1116 = vsub.f32 %v1028, %v1040
    %v1117 = vsub.f32 %v1029, %v1041
    %v1118 = vsub.f32 %v1030, %v1042
    %v1119 = vsub.f32 %v1039, %v1051
    %v1120 = vsub.f32 %v1040, %v1052
    %v1121 = vsub.f32 %v1041, %v1053
    %v1122 = vsub.f32 %v1042, %v1054
    %v1123 = vsub.f32 %v1051, %v1063
    %v1124 = vsub.f32 %v1052, %v1064
    %v1125 = vsub.f32 %v1053, %v1065
    %v1126 = vsub.f32 %v1054, %v1066
    %v1127 = vsub.f32 %v1063, %v1075
    %v1128 = vsub.f32 %v1064, %v1076
    %v1129 = vsub.f32 %v1065, %v1077
    %v1130 = vsub.f32 %v1066, %v1078
    %v1131 = vsub.f32 %v1075, %v1087
    %v1132 = vsub.f32 %v1076, %v1088
    %v1133 = vsub.f32 %v1077, %v1089
    %v1134 = vsub.f32 %v1078, %v1090
    %v1135 = vsub.f32 %v897, -2.2
    %v1136 = vsub.f32 %v902, -2.2
    %v1137 = vsub.f32 %v907, -2.2
    %v1138 = vsub.f32 %v912, -2.2
    %v1139 = vmul.f32 %v1135, 2.5
    %v1140 = vmul.f32 %v1136, 2.5
    %v1141 = vmul.f32 %v1137, 2.5
    %v1142 = vmul.f32 %v1138, 2.5
    %v1143 = vsub.f32 %v897, -1.8
    %v1144 = vsub.f32 %v902, -1.8
    %v1145 = vsub.f32 %v907, -1.8
    %v1146 = vsub.f32 %v912, -1.8
    %v1147 = vmul.f32 %v1143, 2.5
    %v1148 = vmul.f32 %v1144, 2.5
    %v1149 = vmul.f32 %v1145, 2.5
    %v1150 = vmul.f32 %v1146, 2.5
    %v1151 = vsub.f32 %v897, -1.4
    %v1152 = vsub.f32 %v902, -1.4
    %v1153 = vsub.f32 %v907, -1.4
    %v1154 = vsub.f32 %v912, -1.4
    %v1155 = vmul.f32 %v1151, 2.5
    %v1156 = vmul.f32 %v1152, 2.5
    %v1157 = vmul.f32 %v1153, 2.5
    %v1158 = vmul.f32 %v1154, 2.5
    %v1159 = vsub.f32 %v897, -1.0
    %v1160 = vsub.f32 %v902, -1.0
    %v1161 = vsub.f32 %v907, -1.0
    %v1162 = vsub.f32 %v912, -1.0
    %v1163 = vmul.f32 %v1159, 2.5
    %v1164 = vmul.f32 %v1160, 2.5
    %v1165 = vmul.f32 %v1161, 2.5
    %v1166 = vmul.f32 %v1162, 2.5
    %v1167 = vsub.f32 %v897, -0.6
    %v1168 = vsub.f32 %v902, -0.6
    %v1169 = vsub.f32 %v907, -0.6
    %v1170 = vsub.f32 %v912, -0.6
    %v1171 = vmul.f32 %v1167, 2.5
    %v1172 = vmul.f32 %v1168, 2.5
    %v1173 = vmul.f32 %v1169, 2.5
    %v1174 = vmul.f32 %v1170, 2.5
    %v1175 = vsub.f32 %v897, -0.2
    %v1176 = vsub.f32 %v902, -0.2
    %v1177 = vsub.f32 %v907, -0.2
    %v1178 = vsub.f32 %v912, -0.2
    %v1179 = vmul.f32 %v1175, 2.5
    %v1180 = vmul.f32 %v1176, 2.5
    %v1181 = vmul.f32 %v1177, 2.5
    %v1182 = vmul.f32 %v1178, 2.5
    %v1183 = vsub.f32 %v897, 0.2
    %v1184 = vsub.f32 %v902, 0.2
    %v1185 = vsub.f32 %v907, 0.2
    %v1186 = vsub.f32 %v912, 0.2
    %v1187 = vmul.f32 %v1183, 2.5
    %v1188 = vmul.f32 %v1184, 2.5
    %v1189 = vmul.f32 %v1185, 2.5
    %v1190 = vmul.f32 %v1186, 2.5
    %v1191 = vsub.f32 %v897, 0.6
    %v1192 = vsub.f32 %v902, 0.6
    %v1193 = vsub.f32 %v907, 0.6
    %v1194 = vsub.f32 %v912, 0.6
    %v1195 = vmul.f32 %v1191, 2.5
    %v1196 = vmul.f32 %v1192, 2.5
    %v1197 = vmul.f32 %v1193, 2.5
    %v1198 = vmul.f32 %v1194, 2.5
    %v1199 = vsub.f32 %v897, 1.0
    %v1200 = vsub.f32 %v902, 1.0
    %v1201 = vsub.f32 %v907, 1.0
    %v1202 = vsub.f32 %v912, 1.0
    %v1203 = vmul.f32 %v1199, 2.5
    %v1204 = vmul.f32 %v1200, 2.5
    %v1205 = vmul.f32 %v1201, 2.5
    %v1206 = vmul.f32 %v1202, 2.5
    %v1207 = vsub.f32 %v897, 1.4
    %v1208 = vsub.f32 %v902, 1.4
    %v1209 = vsub.f32 %v907, 1.4
    %v1210 = vsub.f32 %v912, 1.4
    %v1211 = vmul.f32 %v1207, 2.5
    %v1212 = vmul.f32 %v1208, 2.5
    %v1213 = vmul.f32 %v1209, 2.5
    %v1214 = vmul.f32 %v1210, 2.5
    %v1215 = vsub.f32 %v897, 1.8
    %v1216 = vsub.f32 %v902, 1.8
    %v1217 = vsub.f32 %v907, 1.8
    %v1218 = vsub.f32 %v912, 1.8
    %v1219 = vmul.f32 %v1215, 2.5
    %v1220 = vmul.f32 %v1216, 2.5
    %v1221 = vmul.f32 %v1217, 2.5
    %v1222 = vmul.f32 %v1218, 2.5
    %v1223 = vmul.f32 %v1139, %v1091
    %v1224 = vmul.f32 %v1140, %v1092
    %v1225 = vmul.f32 %v1141, %v1093
    %v1226 = vmul.f32 %v1142, %v1094
    %v1227 = vsub.f32 1.0, %v1147
    %v1228 = vsub.f32 1.0, %v1148
    %v1229 = vsub.f32 1.0, %v1149
    %v1230 = vsub.f32 1.0, %v1150
    %v1231 = vmul.f32 %v1227, %v1095
    %v1232 = vmul.f32 %v1228, %v1096
    %v1233 = vmul.f32 %v1229, %v1097
    %v1234 = vmul.f32 %v1230, %v1098
    %v1235 = vadd.f32 %v1223, %v1231
    %v1236 = vadd.f32 %v1224, %v1232
    %v1237 = vadd.f32 %v1225, %v1233
    %v1238 = vadd.f32 %v1226, %v1234
    %v1239 = vmul.f32 %v1147, %v1095
    %v1240 = vmul.f32 %v1148, %v1096
    %v1241 = vmul.f32 %v1149, %v1097
    %v1242 = vmul.f32 %v1150, %v1098
    %v1243 = vsub.f32 1.0, %v1155
    %v1244 = vsub.f32 1.0, %v1156
    %v1245 = vsub.f32 1.0, %v1157
    %v1246 = vsub.f32 1.0, %v1158
    %v1247 = vmul.f32 %v1243, %v1099
    %v1248 = vmul.f32 %v1244, %v1100
    %v1249 = vmul.f32 %v1245, %v1101
    %v1250 = vmul.f32 %v1246, %v1102
    %v1251 = vadd.f32 %v1239, %v1247
    %v1252 = vadd.f32 %v1240, %v1248
    %v1253 = vadd.f32 %v1241, %v1249
    %v1254 = vadd.f32 %v1242, %v1250
    %v1255 = vmul.f32 %v1155, %v1099
    %v1256 = vmul.f32 %v1156, %v1100
    %v1257 = vmul.f32 %v1157, %v1101
    %v1258 = vmul.f32 %v1158, %v1102
    %v1259 = vsub.f32 1.0, %v1163
    %v1260 = vsub.f32 1.0, %v1164
    %v1261 = vsub.f32 1.0, %v1165
    %v1262 = vsub.f32 1.0, %v1166
    %v1263 = vmul.f32 %v1259, %v1103
    %v1264 = vmul.f32 %v1260, %v1104
    %v1265 = vmul.f32 %v1261, %v1105
    %v1266 = vmul.f32 %v1262, %v1106
    %v1267 = vadd.f32 %v1255, %v1263
    %v1268 = vadd.f32 %v1256, %v1264
    %v1269 = vadd.f32 %v1257, %v1265
    %v1270 = vadd.f32 %v1258, %v1266
    %v1271 = vmul.f32 %v1163, %v1103
    %v1272 = vmul.f32 %v1164, %v1104
    %v1273 = vmul.f32 %v1165, %v1105
    %v1274 = vmul.f32 %v1166, %v1106
    %v1275 = vsub.f32 1.0, %v1171
    %v1276 = vsub.f32 1.0, %v1172
    %v1277 = vsub.f32 1.0, %v1173
    %v1278 = vsub.f32 1.0, %v1174
    %v1279 = vmul.f32 %v1275, %v1107
    %v1280 = vmul.f32 %v1276, %v1108
    %v1281 = vmul.f32 %v1277, %v1109
    %v1282 = vmul.f32 %v1278, %v1110
    %v1283 = vadd.f32 %v1271, %v1279
    %v1284 = vadd.f32 %v1272, %v1280
    %v1285 = vadd.f32 %v1273, %v1281
    %v1286 = vadd.f32 %v1274, %v1282
    %v1287 = vmul.f32 %v1171, %v1107
    %v1288 = vmul.f32 %v1172, %v1108
    %v1289 = vmul.f32 %v1173, %v1109
    %v1290 = vmul.f32 %v1174, %v1110
    %v1291 = vsub.f32 1.0, %v1179
    %v1292 = vsub.f32 1.0, %v1180
    %v1293 = vsub.f32 1.0, %v1181
    %v1294 = vsub.f32 1.0, %v1182
    %v1295 = vmul.f32 %v1291, %v1111
    %v1296 = vmul.f32 %v1292, %v1112
    %v1297 = vmul.f32 %v1293, %v1113
    %v1298 = vmul.f32 %v1294, %v1114
    %v1299 = vadd.f32 %v1287, %v1295
    %v1300 = vadd.f32 %v1288, %v1296
    %v1301 = vadd.f32 %v1289, %v1297
    %v1302 = vadd.f32 %v1290, %v1298
    %v1303 = vmul.f32 %v1179, %v1111
    %v1304 = vmul.f32 %v1180, %v1112
    %v1305 = vmul.f32 %v1181, %v1113
    %v1306 = vmul.f32 %v1182, %v1114
    %v1307 = vsub.f32 1.0, %v1187
    %v1308 = vsub.f32 1.0, %v1188
    %v1309 = vsub.f32 1.0, %v1189
    %v1310 = vsub.f32 1.0, %v1190
    %v1311 = vmul.f32 %v1307, %v1115
    %v1312 = vmul.f32 %v1308, %v1116
    %v1313 = vmul.f32 %v1309, %v1117
    %v1314 = vmul.f32 %v1310, %v1118
    %v1315 = vadd.f32 %v1303, %v1311
    %v1316 = vadd.f32 %v1304, %v1312
    %v1317 = vadd.f32 %v1305, %v1313
    %v1318 = vadd.f32 %v1306, %v1314
    %v1319 = vmul.f32 %v1187, %v1115
    %v1320 = vmul.f32 %v1188, %v1116
    %v1321 = vmul.f32 %v1189, %v1117
    %v1322 = vmul.f32 %v1190, %v1118
    %v1323 = vsub.f32 1.0, %v1195
    %v1324 = vsub.f32 1.0, %v1196
    %v1325 = vsub.f32 1.0, %v1197
    %v1326 = vsub.f32 1.0, %v1198
    %v1327 = vmul.f32 %v1323, %v1119
    %v1328 = vmul.f32 %v1324, %v1120
    %v1329 = vmul.f32 %v1325, %v1121
    %v1330 = vmul.f32 %v1326, %v1122
    %v1331 = vadd.f32 %v1319, %v1327
    %v1332 = vadd.f32 %v1320, %v1328
    %v1333 = vadd.f32 %v1321, %v1329
    %v1334 = vadd.f32 %v1322, %v1330
    %v1335 = vmul.f32 %v1195, %v1119
    %v1336 = vmul.f32 %v1196, %v1120
    %v1337 = vmul.f32 %v1197, %v1121
    %v1338 = vmul.f32 %v1198, %v1122
    %v1339 = vsub.f32 1.0, %v1203
    %v1340 = vsub.f32 1.0, %v1204
    %v1341 = vsub.f32 1.0, %v1205
    %v1342 = vsub.f32 1.0, %v1206
    %v1343 = vmul.f32 %v1339, %v1123
    %v1344 = vmul.f32 %v1340, %v1124
    %v1345 = vmul.f32 %v1341, %v1125
    %v1346 = vmul.f32 %v1342, %v1126
    %v1347 = vadd.f32 %v1335, %v1343
    %v1348 = vadd.f32 %v1336, %v1344
    %v1349 = vadd.f32 %v1337, %v1345
    %v1350 = vadd.f32 %v1338, %v1346
    %v1351 = vmul.f32 %v1203, %v1123
    %v1352 = vmul.f32 %v1204, %v1124
    %v1353 = vmul.f32 %v1205, %v1125
    %v1354 = vmul.f32 %v1206, %v1126
    %v1355 = vsub.f32 1.0, %v1211
    %v1356 = vsub.f32 1.0, %v1212
    %v1357 = vsub.f32 1.0, %v1213
    %v1358 = vsub.f32 1.0, %v1214
    %v1359 = vmul.f32 %v1355, %v1127
    %v1360 = vmul.f32 %v1356, %v1128
    %v1361 = vmul.f32 %v1357, %v1129
    %v1362 = vmul.f32 %v1358, %v1130
    %v1363 = vadd.f32 %v1351, %v1359
    %v1364 = vadd.f32 %v1352, %v1360
    %v1365 = vadd.f32 %v1353, %v1361
    %v1366 = vadd.f32 %v1354, %v1362
    %v1367 = vmul.f32 %v1211, %v1127
    %v1368 = vmul.f32 %v1212, %v1128
    %v1369 = vmul.f32 %v1213, %v1129
    %v1370 = vmul.f32 %v1214, %v1130
    %v1371 = vsub.f32 1.0, %v1219
    %v1372 = vsub.f32 1.0, %v1220
    %v1373 = vsub.f32 1.0, %v1221
    %v1374 = vsub.f32 1.0, %v1222
    %v1375 = vmul.f32 %v1371, %v1131
    %v1376 = vmul.f32 %v1372, %v1132
    %v1377 = vmul.f32 %v1373, %v1133
    %v1378 = vmul.f32 %v1374, %v1134
    %v1379 = vadd.f32 %v1367, %v1375
    %v1380 = vadd.f32 %v1368, %v1376
    %v1381 = vadd.f32 %v1369, %v1377
    %v1382 = vadd.f32 %v1370, %v1378
    %v1383 = vmul.f32 %v1135, 1.25
    %v1384 = vmul.f32 %v1136, 1.25
    %v1385 = vmul.f32 %v1137, 1.25
    %v1386 = vmul.f32 %v1138, 1.25
    %v1387 = vmul.f32 %v1143, 1.25
    %v1388 = vmul.f32 %v1144, 1.25
    %v1389 = vmul.f32 %v1145, 1.25
    %v1390 = vmul.f32 %v1146, 1.25
    %v1391 = vmul.f32 %v1151, 1.25
    %v1392 = vmul.f32 %v1152, 1.25
    %v1393 = vmul.f32 %v1153, 1.25
    %v1394 = vmul.f32 %v1154, 1.25
    %v1395 = vmul.f32 %v1159, 1.25
    %v1396 = vmul.f32 %v1160, 1.25
    %v1397 = vmul.f32 %v1161, 1.25
    %v1398 = vmul.f32 %v1162, 1.25
    %v1399 = vmul.f32 %v1167, 1.25
    %v1400 = vmul.f32 %v1168, 1.25
    %v1401 = vmul.f32 %v1169, 1.25
    %v1402 = vmul.f32 %v1170, 1.25
    %v1403 = vmul.f32 %v1175, 1.25
    %v1404 = vmul.f32 %v1176, 1.25
    %v1405 = vmul.f32 %v1177, 1.25
    %v1406 = vmul.f32 %v1178, 1.25
    %v1407 = vmul.f32 %v1183, 1.25
    %v1408 = vmul.f32 %v1184, 1.25
    %v1409 = vmul.f32 %v1185, 1.25
    %v1410 = vmul.f32 %v1186, 1.25
    %v1411 = vmul.f32 %v1191, 1.25
    %v1412 = vmul.f32 %v1192, 1.25
    %v1413 = vmul.f32 %v1193, 1.25
    %v1414 = vmul.f32 %v1194, 1.25
    %v1415 = vmul.f32 %v1199, 1.25
    %v1416 = vmul.f32 %v1200, 1.25
    %v1417 = vmul.f32 %v1201, 1.25
    %v1418 = vmul.f32 %v1202, 1.25
    %v1419 = vmul.f32 %v1207, 1.25
    %v1420 = vmul.f32 %v1208, 1.25
    %v1421 = vmul.f32 %v1209, 1.25
    %v1422 = vmul.f32 %v1210, 1.25
    %v1423 = vmul.f32 %v1383, %v1235
    %v1424 = vmul.f32 %v1384, %v1236
    %v1425 = vmul.f32 %v1385, %v1237
    %v1426 = vmul.f32 %v1386, %v1238
    %v1427 = vsub.f32 1.0, %v1387
    %v1428 = vsub.f32 1.0, %v1388
    %v1429 = vsub.f32 1.0, %v1389
    %v1430 = vsub.f32 1.0, %v1390
    %v1431 = vmul.f32 %v1427, %v1251
    %v1432 = vmul.f32 %v1428, %v1252
    %v1433 = vmul.f32 %v1429, %v1253
    %v1434 = vmul.f32 %v1430, %v1254
    %v1435 = vadd.f32 %v1423, %v1431
    %v1436 = vadd.f32 %v1424, %v1432
    %v1437 = vadd.f32 %v1425, %v1433
    %v1438 = vadd.f32 %v1426, %v1434
    %v1439 = vmul.f32 %v1387, %v1251
    %v1440 = vmul.f32 %v1388, %v1252
    %v1441 = vmul.f32 %v1389, %v1253
    %v1442 = vmul.f32 %v1390, %v1254
    %v1443 = vsub.f32 1.0, %v1391
    %v1444 = vsub.f32 1.0, %v1392
    %v1445 = vsub.f32 1.0, %v1393
    %v1446 = vsub.f32 1.0, %v1394
    %v1447 = vmul.f32 %v1443, %v1267
    %v1448 = vmul.f32 %v1444, %v1268
    %v1449 = vmul.f32 %v1445, %v1269
    %v1450 = vmul.f32 %v1446, %v1270
    %v1451 = vadd.f32 %v1439, %v1447
    %v1452 = vadd.f32 %v1440, %v1448
    %v1453 = vadd.f32 %v1441, %v1449
    %v1454 = vadd.f32 %v1442, %v1450
    %v1455 = vmul.f32 %v1391, %v1267
    %v1456 = vmul.f32 %v1392, %v1268
    %v1457 = vmul.f32 %v1393, %v1269
    %v1458 = vmul.f32 %v1394, %v1270
    %v1459 = vsub.f32 1.0, %v1395
    %v1460 = vsub.f32 1.0, %v1396
    %v1461 = vsub.f32 1.0, %v1397
    %v1462 = vsub.f32 1.0, %v1398
    %v1463 = vmul.f32 %v1459, %v1283
    %v1464 = vmul.f32 %v1460, %v1284
    %v1465 = vmul.f32 %v1461, %v1285
    %v1466 = vmul.f32 %v1462, %v1286
    %v1467 = vadd.f32 %v1455, %v1463
    %v1468 = vadd.f32 %v1456, %v1464
    %v1469 = vadd.f32 %v1457, %v1465
    %v1470 = vadd.f32 %v1458, %v1466
    %v1471 = vmul.f32 %v1395, %v1283
    %v1472 = vmul.f32 %v1396, %v1284
    %v1473 = vmul.f32 %v1397, %v1285
    %v1474 = vmul.f32 %v1398, %v1286
    %v1475 = vsub.f32 1.0, %v1399
    %v1476 = vsub.f32 1.0, %v1400
    %v1477 = vsub.f32 1.0, %v1401
    %v1478 = vsub.f32 1.0, %v1402
    %v1479 = vmul.f32 %v1475, %v1299
    %v1480 = vmul.f32 %v1476, %v1300
    %v1481 = vmul.f32 %v1477, %v1301
    %v1482 = vmul.f32 %v1478, %v1302
    %v1483 = vadd.f32 %v1471, %v1479
    %v1484 = vadd.f32 %v1472, %v1480
    %v1485 = vadd.f32 %v1473, %v1481
    %v1486 = vadd.f32 %v1474, %v1482
    %v1487 = vmul.f32 %v1399, %v1299
    %v1488 = vmul.f32 %v1400, %v1300
    %v1489 = vmul.f32 %v1401, %v1301
    %v1490 = vmul.f32 %v1402, %v1302
    %v1491 = vsub.f32 1.0, %v1403
    %v1492 = vsub.f32 1.0, %v1404
    %v1493 = vsub.f32 1.0, %v1405
    %v1494 = vsub.f32 1.0, %v1406
    %v1495 = vmul.f32 %v1491, %v1315
    %v1496 = vmul.f32 %v1492, %v1316
    %v1497 = vmul.f32 %v1493, %v1317
    %v1498 = vmul.f32 %v1494, %v1318
    %v1499 = vadd.f32 %v1487, %v1495
    %v1500 = vadd.f32 %v1488, %v1496
    %v1501 = vadd.f32 %v1489, %v1497
    %v1502 = vadd.f32 %v1490, %v1498
    %v1503 = vmul.f32 %v1403, %v1315
    %v1504 = vmul.f32 %v1404, %v1316
    %v1505 = vmul.f32 %v1405, %v1317
    %v1506 = vmul.f32 %v1406, %v1318
    %v1507 = vsub.f32 1.0, %v1407
    %v1508 = vsub.f32 1.0, %v1408
    %v1509 = vsub.f32 1.0, %v1409
    %v1510 = vsub.f32 1.0, %v1410
    %v1511 = vmul.f32 %v1507, %v1331
    %v1512 = vmul.f32 %v1508, %v1332
    %v1513 = vmul.f32 %v1509, %v1333
    %v1514 = vmul.f32 %v1510, %v1334
    %v1515 = vadd.f32 %v1503, %v1511
    %v1516 = vadd.f32 %v1504, %v1512
    %v1517 = vadd.f32 %v1505, %v1513
    %v1518 = vadd.f32 %v1506, %v1514
    %v1519 = vmul.f32 %v1407, %v1331
    %v1520 = vmul.f32 %v1408, %v1332
    %v1521 = vmul.f32 %v1409, %v1333
    %v1522 = vmul.f32 %v1410, %v1334
    %v1523 = vsub.f32 1.0, %v1411
    %v1524 = vsub.f32 1.0, %v1412
    %v1525 = vsub.f32 1.0, %v1413
    %v1526 = vsub.f32 1.0, %v1414
    %v1527 = vmul.f32 %v1523, %v1347
    %v1528 = vmul.f32 %v1524, %v1348
    %v1529 = vmul.f32 %v1525, %v1349
    %v1530 = vmul.f32 %v1526, %v1350
    %v1531 = vadd.f32 %v1519, %v1527
    %v1532 = vadd.f32 %v1520, %v1528
    %v1533 = vadd.f32 %v1521, %v1529
    %v1534 = vadd.f32 %v1522, %v1530
    %v1535 = vmul.f32 %v1411, %v1347
    %v1536 = vmul.f32 %v1412, %v1348
    %v1537 = vmul.f32 %v1413, %v1349
    %v1538 = vmul.f32 %v1414, %v1350
    %v1539 = vsub.f32 1.0, %v1415
    %v1540 = vsub.f32 1.0, %v1416
    %v1541 = vsub.f32 1.0, %v1417
    %v1542 = vsub.f32 1.0, %v1418
    %v1543 = vmul.f32 %v1539, %v1363
    %v1544 = vmul.f32 %v1540, %v1364
    %v1545 = vmul.f32 %v1541, %v1365
    %v1546 = vmul.f32 %v1542, %v1366
    %v1547 = vadd.f32 %v1535, %v1543
    %v1548 = vadd.f32 %v1536, %v1544
    %v1549 = vadd.f32 %v1537, %v1545
    %v1550 = vadd.f32 %v1538, %v1546
    %v1551 = vmul.f32 %v1415, %v1363
    %v1552 = vmul.f32 %v1416, %v1364
    %v1553 = vmul.f32 %v1417, %v1365
    %v1554 = vmul.f32 %v1418, %v1366
    %v1555 = vsub.f32 1.0, %v1419
    %v1556 = vsub.f32 1.0, %v1420
    %v1557 = vsub.f32 1.0, %v1421
    %v1558 = vsub.f32 1.0, %v1422
    %v1559 = vmul.f32 %v1555, %v1379
    %v1560 = vmul.f32 %v1556, %v1380
    %v1561 = vmul.f32 %v1557, %v1381
    %v1562 = vmul.f32 %v1558, %v1382
    %v1563 = vadd.f32 %v1551, %v1559
    %v1564 = vadd.f32 %v1552, %v1560
    %v1565 = vadd.f32 %v1553, %v1561
    %v1566 = vadd.f32 %v1554, %v1562
    %v1567 = vmul.f32 %v1135, 0.8333333
    %v1568 = vmul.f32 %v1136, 0.8333333
    %v1569 = vmul.f32 %v1137, 0.8333333
    %v1570 = vmul.f32 %v1138, 0.8333333
    %v1571 = vmul.f32 %v1143, 0.8333333
    %v1572 = vmul.f32 %v1144, 0.8333333
    %v1573 = vmul.f32 %v1145, 0.8333333
    %v1574 = vmul.f32 %v1146, 0.8333333
    %v1575 = vmul.f32 %v1151, 0.8333333
    %v1576 = vmul.f32 %v1152, 0.8333333
    %v1577 = vmul.f32 %v1153, 0.8333333
    %v1578 = vmul.f32 %v1154, 0.8333333
    %v1579 = vmul.f32 %v1159, 0.8333333
    %v1580 = vmul.f32 %v1160, 0.8333333
    %v1581 = vmul.f32 %v1161, 0.8333333
    %v1582 = vmul.f32 %v1162, 0.8333333
    %v1583 = vmul.f32 %v1167, 0.8333333
    %v1584 = vmul.f32 %v1168, 0.8333333
    %v1585 = vmul.f32 %v1169, 0.8333333
    %v1586 = vmul.f32 %v1170, 0.8333333
    %v1587 = vmul.f32 %v1175, 0.8333333
    %v1588 = vmul.f32 %v1176, 0.8333333
    %v1589 = vmul.f32 %v1177, 0.8333333
    %v1590 = vmul.f32 %v1178, 0.8333333
    %v1591 = vmul.f32 %v1183, 0.8333333
    %v1592 = vmul.f32 %v1184, 0.8333333
    %v1593 = vmul.f32 %v1185, 0.8333333
    %v1594 = vmul.f32 %v1186, 0.8333333
    %v1595 = vmul.f32 %v1191, 0.8333333
    %v1596 = vmul.f32 %v1192, 0.8333333
    %v1597 = vmul.f32 %v1193, 0.8333333
    %v1598 = vmul.f32 %v1194, 0.8333333
    %v1599 = vmul.f32 %v1199, 0.8333333
    %v1600 = vmul.f32 %v1200, 0.8333333
    %v1601 = vmul.f32 %v1201, 0.8333333
    %v1602 = vmul.f32 %v1202, 0.8333333
    %v1603 = vmul.f32 %v1567, %v1435
    %v1604 = vmul.f32 %v1568, %v1436
    %v1605 = vmul.f32 %v1569, %v1437
    %v1606 = vmul.f32 %v1570, %v1438
    %v1607 = vsub.f32 1.0, %v1571
    %v1608 = vsub.f32 1.0, %v1572
    %v1609 = vsub.f32 1.0, %v1573
    %v1610 = vsub.f32 1.0, %v1574
    %v1611 = vmul.f32 %v1607, %v1451
    %v1612 = vmul.f32 %v1608, %v1452
    %v1613 = vmul.f32 %v1609, %v1453
    %v1614 = vmul.f32 %v1610, %v1454
    %v1615 = vadd.f32 %v1603, %v1611
    %v1616 = vadd.f32 %v1604, %v1612
    %v1617 = vadd.f32 %v1605, %v1613
    %v1618 = vadd.f32 %v1606, %v1614
    %v1619 = vmul.f32 %v1571, %v1451
    %v1620 = vmul.f32 %v1572, %v1452
    %v1621 = vmul.f32 %v1573, %v1453
    %v1622 = vmul.f32 %v1574, %v1454
    %v1623 = vsub.f32 1.0, %v1575
    %v1624 = vsub.f32 1.0, %v1576
    %v1625 = vsub.f32 1.0, %v1577
    %v1626 = vsub.f32 1.0, %v1578
    %v1627 = vmul.f32 %v1623, %v1467
    %v1628 = vmul.f32 %v1624, %v1468
    %v1629 = vmul.f32 %v1625, %v1469
    %v1630 = vmul.f32 %v1626, %v1470
    %v1631 = vadd.f32 %v1619, %v1627
    %v1632 = vadd.f32 %v1620, %v1628
    %v1633 = vadd.f32 %v1621, %v1629
    %v1634 = vadd.f32 %v1622, %v1630
    %v1635 = vmul.f32 %v1575, %v1467
    %v1636 = vmul.f32 %v1576, %v1468
    %v1637 = vmul.f32 %v1577, %v1469
    %v1638 = vmul.f32 %v1578, %v1470
    %v1639 = vsub.f32 1.0, %v1579
    %v1640 = vsub.f32 1.0, %v1580
    %v1641 = vsub.f32 1.0, %v1581
    %v1642 = vsub.f32 1.0, %v1582
    %v1643 = vmul.f32 %v1639, %v1483
    %v1644 = vmul.f32 %v1640, %v1484
    %v1645 = vmul.f32 %v1641, %v1485
    %v1646 = vmul.f32 %v1642, %v1486
    %v1647 = vadd.f32 %v1635, %v1643
    %v1648 = vadd.f32 %v1636, %v1644
    %v1649 = vadd.f32 %v1637, %v1645
    %v1650 = vadd.f32 %v1638, %v1646
    %v1651 = vmul.f32 %v1579, %v1483
    %v1652 = vmul.f32 %v1580, %v1484
    %v1653 = vmul.f32 %v1581, %v1485
    %v1654 = vmul.f32 %v1582, %v1486
    %v1655 = vsub.f32 1.0, %v1583
    %v1656 = vsub.f32 1.0, %v1584
    %v1657 = vsub.f32 1.0, %v1585
    %v1658 = vsub.f32 1.0, %v1586
    %v1659 = vmul.f32 %v1655, %v1499
    %v1660 = vmul.f32 %v1656, %v1500
    %v1661 = vmul.f32 %v1657, %v1501
    %v1662 = vmul.f32 %v1658, %v1502
    %v1663 = vadd.f32 %v1651, %v1659
    %v1664 = vadd.f32 %v1652, %v1660
    %v1665 = vadd.f32 %v1653, %v1661
    %v1666 = vadd.f32 %v1654, %v1662
    %v1667 = vmul.f32 %v1583, %v1499
    %v1668 = vmul.f32 %v1584, %v1500
    %v1669 = vmul.f32 %v1585, %v1501
    %v1670 = vmul.f32 %v1586, %v1502
    %v1671 = vsub.f32 1.0, %v1587
    %v1672 = vsub.f32 1.0, %v1588
    %v1673 = vsub.f32 1.0, %v1589
    %v1674 = vsub.f32 1.0, %v1590
    %v1675 = vmul.f32 %v1671, %v1515
    %v1676 = vmul.f32 %v1672, %v1516
    %v1677 = vmul.f32 %v1673, %v1517
    %v1678 = vmul.f32 %v1674, %v1518
    %v1679 = vadd.f32 %v1667, %v1675
    %v1680 = vadd.f32 %v1668, %v1676
    %v1681 = vadd.f32 %v1669, %v1677
    %v1682 = vadd.f32 %v1670, %v1678
    %v1683 = vmul.f32 %v1587, %v1515
    %v1684 = vmul.f32 %v1588, %v1516
    %v1685 = vmul.f32 %v1589, %v1517
    %v1686 = vmul.f32 %v1590, %v1518
    %v1687 = vsub.f32 1.0, %v1591
    %v1688 = vsub.f32 1.0, %v1592
    %v1689 = vsub.f32 1.0, %v1593
    %v1690 = vsub.f32 1.0, %v1594
    %v1691 = vmul.f32 %v1687, %v1531
    %v1692 = vmul.f32 %v1688, %v1532
    %v1693 = vmul.f32 %v1689, %v1533
    %v1694 = vmul.f32 %v1690, %v1534
    %v1695 = vadd.f32 %v1683, %v1691
    %v1696 = vadd.f32 %v1684, %v1692
    %v1697 = vadd.f32 %v1685, %v1693
    %v1698 = vadd.f32 %v1686, %v1694
    %v1699 = vmul.f32 %v1591, %v1531
    %v1700 = vmul.f32 %v1592, %v1532
    %v1701 = vmul.f32 %v1593, %v1533
    %v1702 = vmul.f32 %v1594, %v1534
    %v1703 = vsub.f32 1.0, %v1595
    %v1704 = vsub.f32 1.0, %v1596
    %v1705 = vsub.f32 1.0, %v1597
    %v1706 = vsub.f32 1.0, %v1598
    %v1707 = vmul.f32 %v1703, %v1547
    %v1708 = vmul.f32 %v1704, %v1548
    %v1709 = vmul.f32 %v1705, %v1549
    %v1710 = vmul.f32 %v1706, %v1550
    %v1711 = vadd.f32 %v1699, %v1707
    %v1712 = vadd.f32 %v1700, %v1708
    %v1713 = vadd.f32 %v1701, %v1709
    %v1714 = vadd.f32 %v1702, %v1710
    %v1715 = vmul.f32 %v1595, %v1547
    %v1716 = vmul.f32 %v1596, %v1548
    %v1717 = vmul.f32 %v1597, %v1549
    %v1718 = vmul.f32 %v1598, %v1550
    %v1719 = vsub.f32 1.0, %v1599
    %v1720 = vsub.f32 1.0, %v1600
    %v1721 = vsub.f32 1.0, %v1601
    %v1722 = vsub.f32 1.0, %v1602
    %v1723 = vmul.f32 %v1719, %v1563
    %v1724 = vmul.f32 %v1720, %v1564
    %v1725 = vmul.f32 %v1721, %v1565
    %v1726 = vmul.f32 %v1722, %v1566
    %v1727 = vadd.f32 %v1715, %v1723
    %v1728 = vadd.f32 %v1716, %v1724
    %v1729 = vadd.f32 %v1717, %v1725
    %v1730 = vadd.f32 %v1718, %v1726
    %1731 = vst [vmem:[#allocation2 + $0x20] sm:$0xff] %v1615
    %1732 = vst [vmem:[#allocation2 + $0x28] sm:$0xff] %v1616
    %1733 = vst [vmem:[#allocation2 + $0x30] sm:$0xff] %v1617
    %1734 = vst [vmem:[#allocation2 + $0x38] sm:$0xff] %v1618
    %1735 = vst [vmem:[#allocation2 + $0x40] sm:$0xff] %v1631
    %1736 = vst [vmem:[#allocation2 + $0x48] sm:$0xff] %v1632
    %1737 = vst [vmem:[#allocation2 + $0x50] sm:$0xff] %v1633
    %1738 = vst [vmem:[#allocation2 + $0x58] sm:$0xff] %v1634
    %1739 = vst [vmem:[#allocation2 + $0x60] sm:$0xff] %v1647
    %1740 = vst [vmem:[#allocation2 + $0x68] sm:$0xff] %v1648
    %1741 = vst [vmem:[#allocation2 + $0x70] sm:$0xff] %v1649
    %1742 = vst [vmem:[#allocation2 + $0x78] sm:$0xff] %v1650
    %1743 = vst [vmem:[#allocation2 + $0x80] sm:$0xff] %v1663
    %1744 = vst [vmem:[#allocation2 + $0x88] sm:$0xff] %v1664
    %1745 = vst [vmem:[#allocation2 + $0x90] sm:$0xff] %v1665
    %1746 = vst [vmem:[#allocation2 + $0x98] sm:$0xff] %v1666
    %1747 = vst [vmem:[#allocation2 + $0xa0] sm:$0xff] %v1679
    %1748 = vst [vmem:[#allocation2 + $0xa8] sm:$0xff] %v1680
    %1749 = vst [vmem:[#allocation2 + $0xb0] sm:$0xff] %v1681
    %1750 = vst [vmem:[#allocation2 + $0xb8] sm:$0xff] %v1682
    %1751 = vst [vmem:[#allocation2 + $0xc0] sm:$0xff] %v1695
    %1752 = vst [vmem:[#allocation2 + $0xc8] sm:$0xff] %v1696
    %1753 = vst [vmem:[#allocation2 + $0xd0] sm:$0xff] %v1697
    %1754 = vst [vmem:[#allocation2 + $0xd8] sm:$0xff] %v1698
    %1755 = vst [vmem:[#allocation2 + $0xe0] sm:$0xff] %v1711
    %1756 = vst [vmem:[#allocation2 + $0xe8] sm:$0xff] %v1712
    %1757 = vst [vmem:[#allocation2 + $0xf0] sm:$0xff] %v1713
    %1758 = vst [vmem:[#allocation2 + $0xf8] sm:$0xff] %v1714
    %1759 = vst [vmem:[#allocation2 + $0x100] sm:$0xff] %v1727
    %1760 = vst [vmem:[#allocation2 + $0x108] sm:$0xff] %v1728
    %1761 = vst [vmem:[#allocation2 + $0x110] sm:$0xff] %v1729
    %1762 = vst [vmem:[#allocation2 + $0x118] sm:$0xff] %v1730
    %v1763 = vld [vmem:[#allocation7] sm:$0xff]
    %v1764 = vld [vmem:[#allocation7 + $0x8] sm:$0xff]
    %v1765 = vld [vmem:[#allocation7 + $0x10] sm:$0xff]
    %v1766 = vld [vmem:[#allocation7 + $0x18] sm:$0xff]
    %v1767 = vld [vmem:[#allocation7 + $0x20] sm:$0xff]
    %v1768 = vld [vmem:[#allocation7 + $0x28] sm:$0xff]
    %v1769 = vld [vmem:[#allocation7 + $0x30] sm:$0xff]
    %v1770 = vld [vmem:[#allocation7 + $0x38] sm:$0xff]
    %v1771 = vld [vmem:[#allocation7 + $0x40] sm:$0xff]
    %v1772 = vld [vmem:[#allocation7 + $0x48] sm:$0xff]
    %v1773 = vld [vmem:[#allocation7 + $0x50] sm:$0xff]
    %v1774 = vld [vmem:[#allocation7 + $0x58] sm:$0xff]
    %v1775 = vld [vmem:[#allocation2] sm:$0xff]
    %v1776 = vld [vmem:[#allocation2 + $0x8] sm:$0xff]
    %v1777 = vld [vmem:[#allocation2 + $0x10] sm:$0xff]
    %v1778 = vld [vmem:[#allocation2 + $0x18] sm:$0xff]
    %v1779 = vld [vmem:[#allocation2 + $0x20] sm:$0xff]
    %v1780 = vld [vmem:[#allocation2 + $0x28] sm:$0xff]
    %v1781 = vld [vmem:[#allocation2 + $0x30] sm:$0xff]
    %v1782 = vld [vmem:[#allocation2 + $0x38] sm:$0xff]
    %v1783 = vld [vmem:[#allocation2 + $0x40] sm:$0xff]
    %v1784 = vld [vmem:[#allocation2 + $0x48] sm:$0xff]
    %v1785 = vld [vmem:[#allocation2 + $0x50] sm:$0xff]
    %v1786 = vld [vmem:[#allocation2 + $0x58] sm:$0xff]
    %v1787 = vld [vmem:[#allocation2 + $0x60] sm:$0xff]
    %v1788 = vld [vmem:[#allocation2 + $0x68] sm:$0xff]
    %v1789 = vld [vmem:[#allocation2 + $0x70] sm:$0xff]
    %v1790 = vld [vmem:[#allocation2 + $0x78] sm:$0xff]
    %v1791 = vld [vmem:[#allocation2 + $0x80] sm:$0xff]
    %v1792 = vld [vmem:[#allocation2 + $0x88] sm:$0xff]
    %v1793 = vld [vmem:[#allocation2 + $0x90] sm:$0xff]
    %v1794 = vld [vmem:[#allocation2 + $0x98] sm:$0xff]
    %v1795 = vld [vmem:[#allocation2 + $0xa0] sm:$0xff]
    %v1796 = vld [vmem:[#allocation2 + $0xa8] sm:$0xff]
    %v1797 = vld [vmem:[#allocation2 + $0xb0] sm:$0xff]
    %v1798 = vld [vmem:[#allocation2 + $0xb8] sm:$0xff]
    %v1799 = vld [vmem:[#allocation2 + $0xc0] sm:$0xff]
    %v1800 = vld [vmem:[#allocation2 + $0xc8] sm:$0xff]
    %v1801 = vld [vmem:[#allocation2 + $0xd0] sm:$0xff]
    %v1802 = vld [vmem:[#allocation2 + $0xd8] sm:$0xff]
    %v1803 = vld [vmem:[#allocation2 + $0xe0] sm:$0xff]
    %v1804 = vld [vmem:[#allocation2 + $0xe8] sm:$0xff]
    %v1805 = vld [vmem:[#allocation2 + $0xf0] sm:$0xff]
    %v1806 = vld [vmem:[#allocation2 + $0xf8] sm:$0xff]
    %v1807 = vld [vmem:[#allocation2 + $0x100] sm:$0xff]
    %v1808 = vld [vmem:[#allocation2 + $0x108] sm:$0xff]
    %v1809 = vld [vmem:[#allocation2 + $0x110] sm:$0xff]
    %v1810 = vld [vmem:[#allocation2 + $0x118] sm:$0xff]
    %vm1811 = vcmask 261120
    %v1813 = vsel %vm1811, %v1765, 0
    %v1816 = vsel %vm1811, %v1768, 0
    %v1819 = vsel %vm1811, %v1771, 0
    %v1822 = vsel %vm1811, %v1774, 0
    %1824 = vmatprep.subr.mxu0 0.0
    %1825 = vmatpush1.msra.mxu0 %v1775
    %1826 = vmatprep.subr.mxu0 0.0
    %1827 = vmatpush1.msra.mxu0 %v1776
    %1828 = vmatprep.subr.mxu0 0.0
    %1829 = vmatpush1.msra.mxu0 %v1777
    %1830 = vmatprep.subr.mxu0 0.0
    %1831 = vmatpush1.msra.mxu0 %v1778
    %1832 = vmatprep.subr.mxu0 0.0
    %1833 = vmatpush1.msra.mxu0 %v1779
    %1834 = vmatprep.subr.mxu0 0.0
    %1835 = vmatpush1.msra.mxu0 %v1780
    %1836 = vmatprep.subr.mxu0 0.0
    %1837 = vmatpush1.msra.mxu0 %v1781
    %1838 = vmatprep.subr.mxu0 0.0
    %1839 = vmatpush1.msra.mxu0 %v1782
    %1840 = vmatprep.subr.mxu0 0.0
    %1841 = vmatpush1.msra.mxu0 %v1783
    %1842 = vmatprep.subr.mxu0 0.0
    %1843 = vmatpush1.msra.mxu0 %v1784
    %1844 = vmatprep.subr.mxu0 0.0
    %1845 = vmatpush1.msra.mxu0 %v1785
    %1846 = vmatprep.subr.mxu0 0.0
    %1847 = vmatpush1.msra.mxu0 %v1786
    %1848 = vmatprep.subr.mxu0 0.0
    %1849 = vmatpush1.msra.mxu0 %v1787
    %1850 = vmatprep.subr.mxu0 0.0
    %1851 = vmatpush1.msra.mxu0 %v1788
    %1852 = vmatprep.subr.mxu0 0.0
    %1853 = vmatpush1.msra.mxu0 %v1789
    %1854 = vmatprep.subr.mxu0 0.0
    %1855 = vmatpush1.msra.mxu0 %v1790
    %1856 = vmatprep.subr.mxu0 0.0
    %1857 = vmatpush1.msra.mxu0 %v1791
    %1858 = vmatprep.subr.mxu0 0.0
    %1859 = vmatpush1.msra.mxu0 %v1792
    %1860 = vmatprep.subr.mxu0 0.0
    %1861 = vmatpush1.msra.mxu0 %v1793
    %1862 = vmatprep.subr.mxu0 0.0
    %1863 = vmatpush1.msra.mxu0 %v1794
    %1864 = vmatprep.subr.mxu0 0.0
    %1865 = vmatpush1.msra.mxu0 %v1795
    %1866 = vmatprep.subr.mxu0 0.0
    %1867 = vmatpush1.msra.mxu0 %v1796
    %1868 = vmatprep.subr.mxu0 0.0
    %1869 = vmatpush1.msra.mxu0 %v1797
    %1870 = vmatprep.subr.mxu0 0.0
    %1871 = vmatpush1.msra.mxu0 %v1798
    %1872 = vmatprep.subr.mxu0 0.0
    %1873 = vmatpush1.msra.mxu0 %v1799
    %1874 = vmatprep.subr.mxu0 0.0
    %1875 = vmatpush1.msra.mxu0 %v1800
    %1876 = vmatprep.subr.mxu0 0.0
    %1877 = vmatpush1.msra.mxu0 %v1801
    %1878 = vmatprep.subr.mxu0 0.0
    %1879 = vmatpush1.msra.mxu0 %v1802
    %1880 = vmatprep.subr.mxu0 0.0
    %1881 = vmatpush1.msra.mxu0 %v1803
    %1882 = vmatprep.subr.mxu0 0.0
    %1883 = vmatpush1.msra.mxu0 %v1804
    %1884 = vmatprep.subr.mxu0 0.0
    %1885 = vmatpush1.msra.mxu0 %v1805
    %1886 = vmatprep.subr.mxu0 0.0
    %1887 = vmatpush1.msra.mxu0 %v1806
    %1888 = vmatprep.mubr.f32.mxu0 %v1764
    %1889 = vmatmul.mubr.f32.gmra.mrb[0].mxu0 %v1763
    %v1890 = vpop.f32.mrb[0].mxu0
    %v1891 = vadd.f32 0.0, %v1890
    %v1892 = vpop.f32.mrb[0].mxu0
    %1893 = vmatprep.mubr.f32.mxu0 %v1767
    %1894 = vmatmul.mubr.f32.gmra.mrb[0].mxu0 %v1766
    %v1895 = vpop.f32.mrb[0].mxu0
    %v1896 = vadd.f32 0.0, %v1895
    %v1897 = vpop.f32.mrb[0].mxu0
    %1898 = vmatprep.mubr.f32.mxu0 %v1770
    %1899 = vmatmul.mubr.f32.gmra.mrb[0].mxu0 %v1769
    %v1900 = vpop.f32.mrb[0].mxu0
    %v1901 = vadd.f32 0.0, %v1900
    %v1902 = vpop.f32.mrb[0].mxu0
    %1903 = vmatprep.mubr.f32.mxu0 %v1773
    %1904 = vmatmul.mubr.f32.gmra.mrb[0].mxu0 %v1772
    %v1905 = vpop.f32.mrb[0].mxu0
    %v1906 = vadd.f32 0.0, %v1905
    %v1907 = vpop.f32.mrb[0].mxu0
    %1908 = vdwg.mxu0
    %1909 = vmatprep.subr.mxu0 0.0
    %1910 = vmatpush1.msra.mxu0 %v1807
    %1911 = vmatprep.subr.mxu0 0.0
    %1912 = vmatpush1.msra.mxu0 %v1808
    %1913 = vmatprep.subr.mxu0 0.0
    %1914 = vmatpush1.msra.mxu0 %v1809
    %1915 = vmatprep.subr.mxu0 0.0
    %1916 = vmatpush1.msra.mxu0 %v1810
    %1917 = vmatprep.subr.mxu0 0.0
    %1918 = vmatpush1.msra.mxu0 0.0
    %1919 = vmatprep.subr.mxu0 0.0
    %1920 = vmatpush1.msra.mxu0 0.0
    %1921 = vmatprep.subr.mxu0 0.0
    %1922 = vmatpush1.msra.mxu0 0.0
    %1923 = vmatprep.subr.mxu0 0.0
    %1924 = vmatpush1.msra.mxu0 0.0
    %1925 = vmatprep.subr.mxu0 0.0
    %1926 = vmatpush1.msra.mxu0 0.0
    %1927 = vmatprep.subr.mxu0 0.0
    %1928 = vmatpush1.msra.mxu0 0.0
    %1929 = vmatprep.subr.mxu0 0.0
    %1930 = vmatpush1.msra.mxu0 0.0
    %1931 = vmatprep.subr.mxu0 0.0
    %1932 = vmatpush1.msra.mxu0 0.0
    %1933 = vmatprep.subr.mxu0 0.0
    %1934 = vmatpush1.msra.mxu0 0.0
    %1935 = vmatprep.subr.mxu0 0.0
    %1936 = vmatpush1.msra.mxu0 0.0
    %1937 = vmatprep.subr.mxu0 0.0
    %1938 = vmatpush1.msra.mxu0 0.0
    %1939 = vmatprep.subr.mxu0 0.0
    %1940 = vmatpush1.msra.mxu0 0.0
    %1941 = vmatprep.subr.mxu0 0.0
    %1942 = vmatpush1.msra.mxu0 0.0
    %1943 = vmatprep.subr.mxu0 0.0
    %1944 = vmatpush1.msra.mxu0 0.0
    %1945 = vmatprep.subr.mxu0 0.0
    %1946 = vmatpush1.msra.mxu0 0.0
    %1947 = vmatprep.subr.mxu0 0.0
    %1948 = vmatpush1.msra.mxu0 0.0
    %1949 = vmatprep.subr.mxu0 0.0
    %1950 = vmatpush1.msra.mxu0 0.0
    %1951 = vmatprep.subr.mxu0 0.0
    %1952 = vmatpush1.msra.mxu0 0.0
    %1953 = vmatprep.subr.mxu0 0.0
    %1954 = vmatpush1.msra.mxu0 0.0
    %1955 = vmatprep.subr.mxu0 0.0
    %1956 = vmatpush1.msra.mxu0 0.0
    %1957 = vmatprep.subr.mxu0 0.0
    %1958 = vmatpush1.msra.mxu0 0.0
    %1959 = vmatprep.subr.mxu0 0.0
    %1960 = vmatpush1.msra.mxu0 0.0
    %1961 = vmatprep.subr.mxu0 0.0
    %1962 = vmatpush1.msra.mxu0 0.0
    %1963 = vmatprep.subr.mxu0 0.0
    %1964 = vmatpush1.msra.mxu0 0.0
    %1965 = vmatprep.subr.mxu0 0.0
    %1966 = vmatpush1.msra.mxu0 0.0
    %1967 = vmatprep.subr.mxu0 0.0
    %1968 = vmatpush1.msra.mxu0 0.0
    %1969 = vmatprep.subr.mxu0 0.0
    %1970 = vmatpush1.msra.mxu0 0.0
    %1971 = vmatprep.subr.mxu0 0.0
    %1972 = vmatpush1.msra.mxu0 0.0
    %1973 = vmatprep.mubr.f32.mxu0 0.0
    %1974 = vmatmul.mubr.f32.gmra.mrb[0].mxu0 %v1813
    %v1975 = vpop.f32.mrb[0].mxu0
    %v1976 = vadd.f32 %v1891, %v1975
    %v1977 = vpop.f32.mrb[0].mxu0
    %1978 = vmatprep.mubr.f32.mxu0 0.0
    %1979 = vmatmul.mubr.f32.gmra.mrb[0].mxu0 %v1816
    %v1980 = vpop.f32.mrb[0].mxu0
    %v1981 = vadd.f32 %v1896, %v1980
    %v1982 = vpop.f32.mrb[0].mxu0
    %1983 = vmatprep.mubr.f32.mxu0 0.0
    %1984 = vmatmul.mubr.f32.gmra.mrb[0].mxu0 %v1819
    %v1985 = vpop.f32.mrb[0].mxu0
    %v1986 = vadd.f32 %v1901, %v1985
    %v1987 = vpop.f32.mrb[0].mxu0
    %1988 = vmatprep.mubr.f32.mxu0 0.0
    %1989 = vmatmul.mubr.f32.gmra.mrb[0].mxu0 %v1822
    %v1990 = vpop.f32.mrb[0].mxu0
    %v1991 = vadd.f32 %v1906, %v1990
    %v1992 = vpop.f32.mrb[0].mxu0
    %1993 = vdwg.mxu0
    %v1994 = vxor.u32 %v1976, 2147483648
    %v1995 = vxor.u32 %v1981, 2147483648
    %v1996 = vxor.u32 %v1986, 2147483648
    %v1997 = vxor.u32 %v1991, 2147483648
    %v1998 = vmul.f32 %v1994, 1.442695
    %v1999 = vpow.pop %v1998
    %v2000 = vmul.f32 %v1995, 1.442695
    %v2001 = vpow.pop %v2000
    %v2002 = vmul.f32 %v1996, 1.442695
    %v2003 = vpow.pop %v2002
    %v2004 = vmul.f32 %v1997, 1.442695
    %v2005 = vpow.pop %v2004
    %v2006 = vadd.f32 %v1999, 1.0
    %v2007 = vadd.f32 %v2001, 1.0
    %v2008 = vadd.f32 %v2003, 1.0
    %v2009 = vadd.f32 %v2005, 1.0
    %v2010 = vrcp.pop %v2006
    %v2011 = vmul.f32 1.0, %v2010
    %v2012 = vrcp.pop %v2007
    %v2013 = vmul.f32 1.0, %v2012
    %v2014 = vrcp.pop %v2008
    %v2015 = vmul.f32 1.0, %v2014
    %v2016 = vrcp.pop %v2009
    %v2017 = vmul.f32 1.0, %v2016
    %v2018 = vmul.f32 %v1976, %v2011
    %v2019 = vmul.f32 %v1981, %v2013
    %v2020 = vmul.f32 %v1986, %v2015
    %v2021 = vmul.f32 %v1991, %v2017
    %2022 = vst [vmem:[#allocation2] sm:$0xff] %v2018
    %2023 = vst [vmem:[#allocation2 + $0x8] sm:$0xff] %v2019
    %2024 = vst [vmem:[#allocation2 + $0x10] sm:$0xff] %v2020
    %2025 = vst [vmem:[#allocation2 + $0x18] sm:$0xff] %v2021
    %vm2026 = vcmp.ge.f32.partialorder %v1976, -2.2
    %vm2027 = vcmp.ge.f32.partialorder %v1981, -2.2
    %vm2028 = vcmp.ge.f32.partialorder %v1986, -2.2
    %vm2029 = vcmp.ge.f32.partialorder %v1991, -2.2
    %v2030 = vsel %vm2026, 1, 0
    %v2031 = vsel %vm2027, 1, 0
    %v2032 = vsel %vm2028, 1, 0
    %v2033 = vsel %vm2029, 1, 0
    %v2034 = vcvt.s32.f32 %v2030
    %v2035 = vcvt.s32.f32 %v2031
    %v2036 = vcvt.s32.f32 %v2032
    %v2037 = vcvt.s32.f32 %v2033
    %vm2038 = vcmp.ge.f32.partialorder %v1976, -1.8
    %vm2039 = vcmp.ge.f32.partialorder %v1981, -1.8
    %vm2040 = vcmp.ge.f32.partialorder %v1986, -1.8
    %vm2041 = vcmp.ge.f32.partialorder %v1991, -1.8
    %v2042 = vsel %vm2038, 1, 0
    %v2043 = vsel %vm2039, 1, 0
    %v2044 = vsel %vm2040, 1, 0
    %v2045 = vsel %vm2041, 1, 0
    %v2046 = vcvt.s32.f32 %v2042
    %v2047 = vcvt.s32.f32 %v2043
    %v2048 = vcvt.s32.f32 %v2044
    %v2049 = vcvt.s32.f32 %v2045
    %vm2050 = vcmp.ge.f32.partialorder %v1976, -1.4
    %vm2051 = vcmp.ge.f32.partialorder %v1981, -1.4
    %vm2052 = vcmp.ge.f32.partialorder %v1986, -1.4
    %vm2053 = vcmp.ge.f32.partialorder %v1991, -1.4
    %v2054 = vsel %vm2050, 1, 0
    %v2055 = vsel %vm2051, 1, 0
    %v2056 = vsel %vm2052, 1, 0
    %v2057 = vsel %vm2053, 1, 0
    %v2058 = vcvt.s32.f32 %v2054
    %v2059 = vcvt.s32.f32 %v2055
    %v2060 = vcvt.s32.f32 %v2056
    %v2061 = vcvt.s32.f32 %v2057
    %vm2062 = vcmp.ge.f32.partialorder %v1976, -1.0
    %vm2063 = vcmp.ge.f32.partialorder %v1981, -1.0
    %vm2064 = vcmp.ge.f32.partialorder %v1986, -1.0
    %vm2065 = vcmp.ge.f32.partialorder %v1991, -1.0
    %v2066 = vsel %vm2062, 1, 0
    %v2067 = vsel %vm2063, 1, 0
    %v2068 = vsel %vm2064, 1, 0
    %v2069 = vsel %vm2065, 1, 0
    %v2070 = vcvt.s32.f32 %v2066
    %v2071 = vcvt.s32.f32 %v2067
    %v2072 = vcvt.s32.f32 %v2068
    %v2073 = vcvt.s32.f32 %v2069
    %vm2074 = vcmp.ge.f32.partialorder %v1976, -0.6
    %vm2075 = vcmp.ge.f32.partialorder %v1981, -0.6
    %vm2076 = vcmp.ge.f32.partialorder %v1986, -0.6
    %vm2077 = vcmp.ge.f32.partialorder %v1991, -0.6
    %v2078 = vsel %vm2074, 1, 0
    %v2079 = vsel %vm2075, 1, 0
    %v2080 = vsel %vm2076, 1, 0
    %v2081 = vsel %vm2077, 1, 0
    %v2082 = vcvt.s32.f32 %v2078
    %v2083 = vcvt.s32.f32 %v2079
    %v2084 = vcvt.s32.f32 %v2080
    %v2085 = vcvt.s32.f32 %v2081
    %vm2086 = vcmp.ge.f32.partialorder %v1976, -0.2
    %vm2087 = vcmp.ge.f32.partialorder %v1981, -0.2
    %vm2088 = vcmp.ge.f32.partialorder %v1986, -0.2
    %vm2089 = vcmp.ge.f32.partialorder %v1991, -0.2
    %v2090 = vsel %vm2086, 1, 0
    %v2091 = vsel %vm2087, 1, 0
    %v2092 = vsel %vm2088, 1, 0
    %v2093 = vsel %vm2089, 1, 0
    %v2094 = vcvt.s32.f32 %v2090
    %v2095 = vcvt.s32.f32 %v2091
    %v2096 = vcvt.s32.f32 %v2092
    %v2097 = vcvt.s32.f32 %v2093
    %vm2098 = vcmp.ge.f32.partialorder %v1976, 0.2
    %vm2099 = vcmp.ge.f32.partialorder %v1981, 0.2
    %vm2100 = vcmp.ge.f32.partialorder %v1986, 0.2
    %vm2101 = vcmp.ge.f32.partialorder %v1991, 0.2
    %v2102 = vsel %vm2098, 1, 0
    %v2103 = vsel %vm2099, 1, 0
    %v2104 = vsel %vm2100, 1, 0
    %v2105 = vsel %vm2101, 1, 0
    %v2106 = vcvt.s32.f32 %v2102
    %v2107 = vcvt.s32.f32 %v2103
    %v2108 = vcvt.s32.f32 %v2104
    %v2109 = vcvt.s32.f32 %v2105
    %vm2110 = vcmp.ge.f32.partialorder %v1976, 0.6
    %vm2111 = vcmp.ge.f32.partialorder %v1981, 0.6
    %vm2112 = vcmp.ge.f32.partialorder %v1986, 0.6
    %vm2113 = vcmp.ge.f32.partialorder %v1991, 0.6
    %v2114 = vsel %vm2110, 1, 0
    %v2115 = vsel %vm2111, 1, 0
    %v2116 = vsel %vm2112, 1, 0
    %v2117 = vsel %vm2113, 1, 0
    %v2118 = vcvt.s32.f32 %v2114
    %v2119 = vcvt.s32.f32 %v2115
    %v2120 = vcvt.s32.f32 %v2116
    %v2121 = vcvt.s32.f32 %v2117
    %vm2122 = vcmp.ge.f32.partialorder %v1976, 1.0
    %vm2123 = vcmp.ge.f32.partialorder %v1981, 1.0
    %vm2124 = vcmp.ge.f32.partialorder %v1986, 1.0
    %vm2125 = vcmp.ge.f32.partialorder %v1991, 1.0
    %v2126 = vsel %vm2122, 1, 0
    %v2127 = vsel %vm2123, 1, 0
    %v2128 = vsel %vm2124, 1, 0
    %v2129 = vsel %vm2125, 1, 0
    %v2130 = vcvt.s32.f32 %v2126
    %v2131 = vcvt.s32.f32 %v2127
    %v2132 = vcvt.s32.f32 %v2128
    %v2133 = vcvt.s32.f32 %v2129
    %vm2134 = vcmp.ge.f32.partialorder %v1976, 1.4
    %vm2135 = vcmp.ge.f32.partialorder %v1981, 1.4
    %vm2136 = vcmp.ge.f32.partialorder %v1986, 1.4
    %vm2137 = vcmp.ge.f32.partialorder %v1991, 1.4
    %v2138 = vsel %vm2134, 1, 0
    %v2139 = vsel %vm2135, 1, 0
    %v2140 = vsel %vm2136, 1, 0
    %v2141 = vsel %vm2137, 1, 0
    %v2142 = vcvt.s32.f32 %v2138
    %v2143 = vcvt.s32.f32 %v2139
    %v2144 = vcvt.s32.f32 %v2140
    %v2145 = vcvt.s32.f32 %v2141
    %vm2146 = vcmp.ge.f32.partialorder %v1976, 1.8
    %vm2147 = vcmp.ge.f32.partialorder %v1981, 1.8
    %vm2148 = vcmp.ge.f32.partialorder %v1986, 1.8
    %vm2149 = vcmp.ge.f32.partialorder %v1991, 1.8
    %v2150 = vsel %vm2146, 1, 0
    %v2151 = vsel %vm2147, 1, 0
    %v2152 = vsel %vm2148, 1, 0
    %v2153 = vsel %vm2149, 1, 0
    %v2154 = vcvt.s32.f32 %v2150
    %v2155 = vcvt.s32.f32 %v2151
    %v2156 = vcvt.s32.f32 %v2152
    %v2157 = vcvt.s32.f32 %v2153
    %vm2158 = vcmp.ge.f32.partialorder %v1976, 2.2
    %vm2159 = vcmp.ge.f32.partialorder %v1981, 2.2
    %vm2160 = vcmp.ge.f32.partialorder %v1986, 2.2
    %vm2161 = vcmp.ge.f32.partialorder %v1991, 2.2
    %v2162 = vsel %vm2158, 1, 0
    %v2163 = vsel %vm2159, 1, 0
    %v2164 = vsel %vm2160, 1, 0
    %v2165 = vsel %vm2161, 1, 0
    %v2166 = vcvt.s32.f32 %v2162
    %v2167 = vcvt.s32.f32 %v2163
    %v2168 = vcvt.s32.f32 %v2164
    %v2169 = vcvt.s32.f32 %v2165
    %v2170 = vsub.f32 %v2034, %v2046
    %v2171 = vsub.f32 %v2035, %v2047
    %v2172 = vsub.f32 %v2036, %v2048
    %v2173 = vsub.f32 %v2037, %v2049
    %v2174 = vsub.f32 %v2046, %v2058
    %v2175 = vsub.f32 %v2047, %v2059
    %v2176 = vsub.f32 %v2048, %v2060
    %v2177 = vsub.f32 %v2049, %v2061
    %v2178 = vsub.f32 %v2058, %v2070
    %v2179 = vsub.f32 %v2059, %v2071
    %v2180 = vsub.f32 %v2060, %v2072
    %v2181 = vsub.f32 %v2061, %v2073
    %v2182 = vsub.f32 %v2070, %v2082
    %v2183 = vsub.f32 %v2071, %v2083
    %v2184 = vsub.f32 %v2072, %v2084
    %v2185 = vsub.f32 %v2073, %v2085
    %v2186 = vsub.f32 %v2082, %v2094
    %v2187 = vsub.f32 %v2083, %v2095
    %v2188 = vsub.f32 %v2084, %v2096
    %v2189 = vsub.f32 %v2085, %v2097
    %v2190 = vsub.f32 %v2094, %v2106
    %v2191 = vsub.f32 %v2095, %v2107
    %v2192 = vsub.f32 %v2096, %v2108
    %v2193 = vsub.f32 %v2097, %v2109
    %v2194 = vsub.f32 %v2106, %v2118
    %v2195 = vsub.f32 %v2107, %v2119
    %v2196 = vsub.f32 %v2108, %v2120
    %v2197 = vsub.f32 %v2109, %v2121
    %v2198 = vsub.f32 %v2118, %v2130
    %v2199 = vsub.f32 %v2119, %v2131
    %v2200 = vsub.f32 %v2120, %v2132
    %v2201 = vsub.f32 %v2121, %v2133
    %v2202 = vsub.f32 %v2130, %v2142
    %v2203 = vsub.f32 %v2131, %v2143
    %v2204 = vsub.f32 %v2132, %v2144
    %v2205 = vsub.f32 %v2133, %v2145
    %v2206 = vsub.f32 %v2142, %v2154
    %v2207 = vsub.f32 %v2143, %v2155
    %v2208 = vsub.f32 %v2144, %v2156
    %v2209 = vsub.f32 %v2145, %v2157
    %v2210 = vsub.f32 %v2154, %v2166
    %v2211 = vsub.f32 %v2155, %v2167
    %v2212 = vsub.f32 %v2156, %v2168
    %v2213 = vsub.f32 %v2157, %v2169
    %v2214 = vsub.f32 %v1976, -2.2
    %v2215 = vsub.f32 %v1981, -2.2
    %v2216 = vsub.f32 %v1986, -2.2
    %v2217 = vsub.f32 %v1991, -2.2
    %v2218 = vmul.f32 %v2214, 2.5
    %v2219 = vmul.f32 %v2215, 2.5
    %v2220 = vmul.f32 %v2216, 2.5
    %v2221 = vmul.f32 %v2217, 2.5
    %v2222 = vsub.f32 %v1976, -1.8
    %v2223 = vsub.f32 %v1981, -1.8
    %v2224 = vsub.f32 %v1986, -1.8
    %v2225 = vsub.f32 %v1991, -1.8
    %v2226 = vmul.f32 %v2222, 2.5
    %v2227 = vmul.f32 %v2223, 2.5
    %v2228 = vmul.f32 %v2224, 2.5
    %v2229 = vmul.f32 %v2225, 2.5
    %v2230 = vsub.f32 %v1976, -1.4
    %v2231 = vsub.f32 %v1981, -1.4
    %v2232 = vsub.f32 %v1986, -1.4
    %v2233 = vsub.f32 %v1991, -1.4
    %v2234 = vmul.f32 %v2230, 2.5
    %v2235 = vmul.f32 %v2231, 2.5
    %v2236 = vmul.f32 %v2232, 2.5
    %v2237 = vmul.f32 %v2233, 2.5
    %v2238 = vsub.f32 %v1976, -1.0
    %v2239 = vsub.f32 %v1981, -1.0
    %v2240 = vsub.f32 %v1986, -1.0
    %v2241 = vsub.f32 %v1991, -1.0
    %v2242 = vmul.f32 %v2238, 2.5
    %v2243 = vmul.f32 %v2239, 2.5
    %v2244 = vmul.f32 %v2240, 2.5
    %v2245 = vmul.f32 %v2241, 2.5
    %v2246 = vsub.f32 %v1976, -0.6
    %v2247 = vsub.f32 %v1981, -0.6
    %v2248 = vsub.f32 %v1986, -0.6
    %v2249 = vsub.f32 %v1991, -0.6
    %v2250 = vmul.f32 %v2246, 2.5
    %v2251 = vmul.f32 %v2247, 2.5
    %v2252 = vmul.f32 %v2248, 2.5
    %v2253 = vmul.f32 %v2249, 2.5
    %v2254 = vsub.f32 %v1976, -0.2
    %v2255 = vsub.f32 %v1981, -0.2
    %v2256 = vsub.f32 %v1986, -0.2
    %v2257 = vsub.f32 %v1991, -0.2
    %v2258 = vmul.f32 %v2254, 2.5
    %v2259 = vmul.f32 %v2255, 2.5
    %v2260 = vmul.f32 %v2256, 2.5
    %v2261 = vmul.f32 %v2257, 2.5
    %v2262 = vsub.f32 %v1976, 0.2
    %v2263 = vsub.f32 %v1981, 0.2
    %v2264 = vsub.f32 %v1986, 0.2
    %v2265 = vsub.f32 %v1991, 0.2
    %v2266 = vmul.f32 %v2262, 2.5
    %v2267 = vmul.f32 %v2263, 2.5
    %v2268 = vmul.f32 %v2264, 2.5
    %v2269 = vmul.f32 %v2265, 2.5
    %v2270 = vsub.f32 %v1976, 0.6
    %v2271 = vsub.f32 %v1981, 0.6
    %v2272 = vsub.f32 %v1986, 0.6
    %v2273 = vsub.f32 %v1991, 0.6
    %v2274 = vmul.f32 %v2270, 2.5
    %v2275 = vmul.f32 %v2271, 2.5
    %v2276 = vmul.f32 %v2272, 2.5
    %v2277 = vmul.f32 %v2273, 2.5
    %v2278 = vsub.f32 %v1976, 1.0
    %v2279 = vsub.f32 %v1981, 1.0
    %v2280 = vsub.f32 %v1986, 1.0
    %v2281 = vsub.f32 %v1991, 1.0
    %v2282 = vmul.f32 %v2278, 2.5
    %v2283 = vmul.f32 %v2279, 2.5
    %v2284 = vmul.f32 %v2280, 2.5
    %v2285 = vmul.f32 %v2281, 2.5
    %v2286 = vsub.f32 %v1976, 1.4
    %v2287 = vsub.f32 %v1981, 1.4
    %v2288 = vsub.f32 %v1986, 1.4
    %v2289 = vsub.f32 %v1991, 1.4
    %v2290 = vmul.f32 %v2286, 2.5
    %v2291 = vmul.f32 %v2287, 2.5
    %v2292 = vmul.f32 %v2288, 2.5
    %v2293 = vmul.f32 %v2289, 2.5
    %v2294 = vsub.f32 %v1976, 1.8
    %v2295 = vsub.f32 %v1981, 1.8
    %v2296 = vsub.f32 %v1986, 1.8
    %v2297 = vsub.f32 %v1991, 1.8
    %v2298 = vmul.f32 %v2294, 2.5
    %v2299 = vmul.f32 %v2295, 2.5
    %v2300 = vmul.f32 %v2296, 2.5
    %v2301 = vmul.f32 %v2297, 2.5
    %v2302 = vmul.f32 %v2218, %v2170
    %v2303 = vmul.f32 %v2219, %v2171
    %v2304 = vmul.f32 %v2220, %v2172
    %v2305 = vmul.f32 %v2221, %v2173
    %v2306 = vsub.f32 1.0, %v2226
    %v2307 = vsub.f32 1.0, %v2227
    %v2308 = vsub.f32 1.0, %v2228
    %v2309 = vsub.f32 1.0, %v2229
    %v2310 = vmul.f32 %v2306, %v2174
    %v2311 = vmul.f32 %v2307, %v2175
    %v2312 = vmul.f32 %v2308, %v2176
    %v2313 = vmul.f32 %v2309, %v2177
    %v2314 = vadd.f32 %v2302, %v2310
    %v2315 = vadd.f32 %v2303, %v2311
    %v2316 = vadd.f32 %v2304, %v2312
    %v2317 = vadd.f32 %v2305, %v2313
    %v2318 = vmul.f32 %v2226, %v2174
    %v2319 = vmul.f32 %v2227, %v2175
    %v2320 = vmul.f32 %v2228, %v2176
    %v2321 = vmul.f32 %v2229, %v2177
    %v2322 = vsub.f32 1.0, %v2234
    %v2323 = vsub.f32 1.0, %v2235
    %v2324 = vsub.f32 1.0, %v2236
    %v2325 = vsub.f32 1.0, %v2237
    %v2326 = vmul.f32 %v2322, %v2178
    %v2327 = vmul.f32 %v2323, %v2179
    %v2328 = vmul.f32 %v2324, %v2180
    %v2329 = vmul.f32 %v2325, %v2181
    %v2330 = vadd.f32 %v2318, %v2326
    %v2331 = vadd.f32 %v2319, %v2327
    %v2332 = vadd.f32 %v2320, %v2328
    %v2333 = vadd.f32 %v2321, %v2329
    %v2334 = vmul.f32 %v2234, %v2178
    %v2335 = vmul.f32 %v2235, %v2179
    %v2336 = vmul.f32 %v2236, %v2180
    %v2337 = vmul.f32 %v2237, %v2181
    %v2338 = vsub.f32 1.0, %v2242
    %v2339 = vsub.f32 1.0, %v2243
    %v2340 = vsub.f32 1.0, %v2244
    %v2341 = vsub.f32 1.0, %v2245
    %v2342 = vmul.f32 %v2338, %v2182
    %v2343 = vmul.f32 %v2339, %v2183
    %v2344 = vmul.f32 %v2340, %v2184
    %v2345 = vmul.f32 %v2341, %v2185
    %v2346 = vadd.f32 %v2334, %v2342
    %v2347 = vadd.f32 %v2335, %v2343
    %v2348 = vadd.f32 %v2336, %v2344
    %v2349 = vadd.f32 %v2337, %v2345
    %v2350 = vmul.f32 %v2242, %v2182
    %v2351 = vmul.f32 %v2243, %v2183
    %v2352 = vmul.f32 %v2244, %v2184
    %v2353 = vmul.f32 %v2245, %v2185
    %v2354 = vsub.f32 1.0, %v2250
    %v2355 = vsub.f32 1.0, %v2251
    %v2356 = vsub.f32 1.0, %v2252
    %v2357 = vsub.f32 1.0, %v2253
    %v2358 = vmul.f32 %v2354, %v2186
    %v2359 = vmul.f32 %v2355, %v2187
    %v2360 = vmul.f32 %v2356, %v2188
    %v2361 = vmul.f32 %v2357, %v2189
    %v2362 = vadd.f32 %v2350, %v2358
    %v2363 = vadd.f32 %v2351, %v2359
    %v2364 = vadd.f32 %v2352, %v2360
    %v2365 = vadd.f32 %v2353, %v2361
    %v2366 = vmul.f32 %v2250, %v2186
    %v2367 = vmul.f32 %v2251, %v2187
    %v2368 = vmul.f32 %v2252, %v2188
    %v2369 = vmul.f32 %v2253, %v2189
    %v2370 = vsub.f32 1.0, %v2258
    %v2371 = vsub.f32 1.0, %v2259
    %v2372 = vsub.f32 1.0, %v2260
    %v2373 = vsub.f32 1.0, %v2261
    %v2374 = vmul.f32 %v2370, %v2190
    %v2375 = vmul.f32 %v2371, %v2191
    %v2376 = vmul.f32 %v2372, %v2192
    %v2377 = vmul.f32 %v2373, %v2193
    %v2378 = vadd.f32 %v2366, %v2374
    %v2379 = vadd.f32 %v2367, %v2375
    %v2380 = vadd.f32 %v2368, %v2376
    %v2381 = vadd.f32 %v2369, %v2377
    %v2382 = vmul.f32 %v2258, %v2190
    %v2383 = vmul.f32 %v2259, %v2191
    %v2384 = vmul.f32 %v2260, %v2192
    %v2385 = vmul.f32 %v2261, %v2193
    %v2386 = vsub.f32 1.0, %v2266
    %v2387 = vsub.f32 1.0, %v2267
    %v2388 = vsub.f32 1.0, %v2268
    %v2389 = vsub.f32 1.0, %v2269
    %v2390 = vmul.f32 %v2386, %v2194
    %v2391 = vmul.f32 %v2387, %v2195
    %v2392 = vmul.f32 %v2388, %v2196
    %v2393 = vmul.f32 %v2389, %v2197
    %v2394 = vadd.f32 %v2382, %v2390
    %v2395 = vadd.f32 %v2383, %v2391
    %v2396 = vadd.f32 %v2384, %v2392
    %v2397 = vadd.f32 %v2385, %v2393
    %v2398 = vmul.f32 %v2266, %v2194
    %v2399 = vmul.f32 %v2267, %v2195
    %v2400 = vmul.f32 %v2268, %v2196
    %v2401 = vmul.f32 %v2269, %v2197
    %v2402 = vsub.f32 1.0, %v2274
    %v2403 = vsub.f32 1.0, %v2275
    %v2404 = vsub.f32 1.0, %v2276
    %v2405 = vsub.f32 1.0, %v2277
    %v2406 = vmul.f32 %v2402, %v2198
    %v2407 = vmul.f32 %v2403, %v2199
    %v2408 = vmul.f32 %v2404, %v2200
    %v2409 = vmul.f32 %v2405, %v2201
    %v2410 = vadd.f32 %v2398, %v2406
    %v2411 = vadd.f32 %v2399, %v2407
    %v2412 = vadd.f32 %v2400, %v2408
    %v2413 = vadd.f32 %v2401, %v2409
    %v2414 = vmul.f32 %v2274, %v2198
    %v2415 = vmul.f32 %v2275, %v2199
    %v2416 = vmul.f32 %v2276, %v2200
    %v2417 = vmul.f32 %v2277, %v2201
    %v2418 = vsub.f32 1.0, %v2282
    %v2419 = vsub.f32 1.0, %v2283
    %v2420 = vsub.f32 1.0, %v2284
    %v2421 = vsub.f32 1.0, %v2285
    %v2422 = vmul.f32 %v2418, %v2202
    %v2423 = vmul.f32 %v2419, %v2203
    %v2424 = vmul.f32 %v2420, %v2204
    %v2425 = vmul.f32 %v2421, %v2205
    %v2426 = vadd.f32 %v2414, %v2422
    %v2427 = vadd.f32 %v2415, %v2423
    %v2428 = vadd.f32 %v2416, %v2424
    %v2429 = vadd.f32 %v2417, %v2425
    %v2430 = vmul.f32 %v2282, %v2202
    %v2431 = vmul.f32 %v2283, %v2203
    %v2432 = vmul.f32 %v2284, %v2204
    %v2433 = vmul.f32 %v2285, %v2205
    %v2434 = vsub.f32 1.0, %v2290
    %v2435 = vsub.f32 1.0, %v2291
    %v2436 = vsub.f32 1.0, %v2292
    %v2437 = vsub.f32 1.0, %v2293
    %v2438 = vmul.f32 %v2434, %v2206
    %v2439 = vmul.f32 %v2435, %v2207
    %v2440 = vmul.f32 %v2436, %v2208
    %v2441 = vmul.f32 %v2437, %v2209
    %v2442 = vadd.f32 %v2430, %v2438
    %v2443 = vadd.f32 %v2431, %v2439
    %v2444 = vadd.f32 %v2432, %v2440
    %v2445 = vadd.f32 %v2433, %v2441
    %v2446 = vmul.f32 %v2290, %v2206
    %v2447 = vmul.f32 %v2291, %v2207
    %v2448 = vmul.f32 %v2292, %v2208
    %v2449 = vmul.f32 %v2293, %v2209
    %v2450 = vsub.f32 1.0, %v2298
    %v2451 = vsub.f32 1.0, %v2299
    %v2452 = vsub.f32 1.0, %v2300
    %v2453 = vsub.f32 1.0, %v2301
    %v2454 = vmul.f32 %v2450, %v2210
    %v2455 = vmul.f32 %v2451, %v2211
    %v2456 = vmul.f32 %v2452, %v2212
    %v2457 = vmul.f32 %v2453, %v2213
    %v2458 = vadd.f32 %v2446, %v2454
    %v2459 = vadd.f32 %v2447, %v2455
    %v2460 = vadd.f32 %v2448, %v2456
    %v2461 = vadd.f32 %v2449, %v2457
    %v2462 = vmul.f32 %v2214, 1.25
    %v2463 = vmul.f32 %v2215, 1.25
    %v2464 = vmul.f32 %v2216, 1.25
    %v2465 = vmul.f32 %v2217, 1.25
    %v2466 = vmul.f32 %v2222, 1.25
    %v2467 = vmul.f32 %v2223, 1.25
    %v2468 = vmul.f32 %v2224, 1.25
    %v2469 = vmul.f32 %v2225, 1.25
    %v2470 = vmul.f32 %v2230, 1.25
    %v2471 = vmul.f32 %v2231, 1.25
    %v2472 = vmul.f32 %v2232, 1.25
    %v2473 = vmul.f32 %v2233, 1.25
    %v2474 = vmul.f32 %v2238, 1.25
    %v2475 = vmul.f32 %v2239, 1.25
    %v2476 = vmul.f32 %v2240, 1.25
    %v2477 = vmul.f32 %v2241, 1.25
    %v2478 = vmul.f32 %v2246, 1.25
    %v2479 = vmul.f32 %v2247, 1.25
    %v2480 = vmul.f32 %v2248, 1.25
    %v2481 = vmul.f32 %v2249, 1.25
    %v2482 = vmul.f32 %v2254, 1.25
    %v2483 = vmul.f32 %v2255, 1.25
    %v2484 = vmul.f32 %v2256, 1.25
    %v2485 = vmul.f32 %v2257, 1.25
    %v2486 = vmul.f32 %v2262, 1.25
    %v2487 = vmul.f32 %v2263, 1.25
    %v2488 = vmul.f32 %v2264, 1.25
    %v2489 = vmul.f32 %v2265, 1.25
    %v2490 = vmul.f32 %v2270, 1.25
    %v2491 = vmul.f32 %v2271, 1.25
    %v2492 = vmul.f32 %v2272, 1.25
    %v2493 = vmul.f32 %v2273, 1.25
    %v2494 = vmul.f32 %v2278, 1.25
    %v2495 = vmul.f32 %v2279, 1.25
    %v2496 = vmul.f32 %v2280, 1.25
    %v2497 = vmul.f32 %v2281, 1.25
    %v2498 = vmul.f32 %v2286, 1.25
    %v2499 = vmul.f32 %v2287, 1.25
    %v2500 = vmul.f32 %v2288, 1.25
    %v2501 = vmul.f32 %v2289, 1.25
    %v2502 = vmul.f32 %v2462, %v2314
    %v2503 = vmul.f32 %v2463, %v2315
    %v2504 = vmul.f32 %v2464, %v2316
    %v2505 = vmul.f32 %v2465, %v2317
    %v2506 = vsub.f32 1.0, %v2466
    %v2507 = vsub.f32 1.0, %v2467
    %v2508 = vsub.f32 1.0, %v2468
    %v2509 = vsub.f32 1.0, %v2469
    %v2510 = vmul.f32 %v2506, %v2330
    %v2511 = vmul.f32 %v2507, %v2331
    %v2512 = vmul.f32 %v2508, %v2332
    %v2513 = vmul.f32 %v2509, %v2333
    %v2514 = vadd.f32 %v2502, %v2510
    %v2515 = vadd.f32 %v2503, %v2511
    %v2516 = vadd.f32 %v2504, %v2512
    %v2517 = vadd.f32 %v2505, %v2513
    %v2518 = vmul.f32 %v2466, %v2330
    %v2519 = vmul.f32 %v2467, %v2331
    %v2520 = vmul.f32 %v2468, %v2332
    %v2521 = vmul.f32 %v2469, %v2333
    %v2522 = vsub.f32 1.0, %v2470
    %v2523 = vsub.f32 1.0, %v2471
    %v2524 = vsub.f32 1.0, %v2472
    %v2525 = vsub.f32 1.0, %v2473
    %v2526 = vmul.f32 %v2522, %v2346
    %v2527 = vmul.f32 %v2523, %v2347
    %v2528 = vmul.f32 %v2524, %v2348
    %v2529 = vmul.f32 %v2525, %v2349
    %v2530 = vadd.f32 %v2518, %v2526
    %v2531 = vadd.f32 %v2519, %v2527
    %v2532 = vadd.f32 %v2520, %v2528
    %v2533 = vadd.f32 %v2521, %v2529
    %v2534 = vmul.f32 %v2470, %v2346
    %v2535 = vmul.f32 %v2471, %v2347
    %v2536 = vmul.f32 %v2472, %v2348
    %v2537 = vmul.f32 %v2473, %v2349
    %v2538 = vsub.f32 1.0, %v2474
    %v2539 = vsub.f32 1.0, %v2475
    %v2540 = vsub.f32 1.0, %v2476
    %v2541 = vsub.f32 1.0, %v2477
    %v2542 = vmul.f32 %v2538, %v2362
    %v2543 = vmul.f32 %v2539, %v2363
    %v2544 = vmul.f32 %v2540, %v2364
    %v2545 = vmul.f32 %v2541, %v2365
    %v2546 = vadd.f32 %v2534, %v2542
    %v2547 = vadd.f32 %v2535, %v2543
    %v2548 = vadd.f32 %v2536, %v2544
    %v2549 = vadd.f32 %v2537, %v2545
    %v2550 = vmul.f32 %v2474, %v2362
    %v2551 = vmul.f32 %v2475, %v2363
    %v2552 = vmul.f32 %v2476, %v2364
    %v2553 = vmul.f32 %v2477, %v2365
    %v2554 = vsub.f32 1.0, %v2478
    %v2555 = vsub.f32 1.0, %v2479
    %v2556 = vsub.f32 1.0, %v2480
    %v2557 = vsub.f32 1.0, %v2481
    %v2558 = vmul.f32 %v2554, %v2378
    %v2559 = vmul.f32 %v2555, %v2379
    %v2560 = vmul.f32 %v2556, %v2380
    %v2561 = vmul.f32 %v2557, %v2381
    %v2562 = vadd.f32 %v2550, %v2558
    %v2563 = vadd.f32 %v2551, %v2559
    %v2564 = vadd.f32 %v2552, %v2560
    %v2565 = vadd.f32 %v2553, %v2561
    %v2566 = vmul.f32 %v2478, %v2378
    %v2567 = vmul.f32 %v2479, %v2379
    %v2568 = vmul.f32 %v2480, %v2380
    %v2569 = vmul.f32 %v2481, %v2381
    %v2570 = vsub.f32 1.0, %v2482
    %v2571 = vsub.f32 1.0, %v2483
    %v2572 = vsub.f32 1.0, %v2484
    %v2573 = vsub.f32 1.0, %v2485
    %v2574 = vmul.f32 %v2570, %v2394
    %v2575 = vmul.f32 %v2571, %v2395
    %v2576 = vmul.f32 %v2572, %v2396
    %v2577 = vmul.f32 %v2573, %v2397
    %v2578 = vadd.f32 %v2566, %v2574
    %v2579 = vadd.f32 %v2567, %v2575
    %v2580 = vadd.f32 %v2568, %v2576
    %v2581 = vadd.f32 %v2569, %v2577
    %v2582 = vmul.f32 %v2482, %v2394
    %v2583 = vmul.f32 %v2483, %v2395
    %v2584 = vmul.f32 %v2484, %v2396
    %v2585 = vmul.f32 %v2485, %v2397
    %v2586 = vsub.f32 1.0, %v2486
    %v2587 = vsub.f32 1.0, %v2487
    %v2588 = vsub.f32 1.0, %v2488
    %v2589 = vsub.f32 1.0, %v2489
    %v2590 = vmul.f32 %v2586, %v2410
    %v2591 = vmul.f32 %v2587, %v2411
    %v2592 = vmul.f32 %v2588, %v2412
    %v2593 = vmul.f32 %v2589, %v2413
    %v2594 = vadd.f32 %v2582, %v2590
    %v2595 = vadd.f32 %v2583, %v2591
    %v2596 = vadd.f32 %v2584, %v2592
    %v2597 = vadd.f32 %v2585, %v2593
    %v2598 = vmul.f32 %v2486, %v2410
    %v2599 = vmul.f32 %v2487, %v2411
    %v2600 = vmul.f32 %v2488, %v2412
    %v2601 = vmul.f32 %v2489, %v2413
    %v2602 = vsub.f32 1.0, %v2490
    %v2603 = vsub.f32 1.0, %v2491
    %v2604 = vsub.f32 1.0, %v2492
    %v2605 = vsub.f32 1.0, %v2493
    %v2606 = vmul.f32 %v2602, %v2426
    %v2607 = vmul.f32 %v2603, %v2427
    %v2608 = vmul.f32 %v2604, %v2428
    %v2609 = vmul.f32 %v2605, %v2429
    %v2610 = vadd.f32 %v2598, %v2606
    %v2611 = vadd.f32 %v2599, %v2607
    %v2612 = vadd.f32 %v2600, %v2608
    %v2613 = vadd.f32 %v2601, %v2609
    %v2614 = vmul.f32 %v2490, %v2426
    %v2615 = vmul.f32 %v2491, %v2427
    %v2616 = vmul.f32 %v2492, %v2428
    %v2617 = vmul.f32 %v2493, %v2429
    %v2618 = vsub.f32 1.0, %v2494
    %v2619 = vsub.f32 1.0, %v2495
    %v2620 = vsub.f32 1.0, %v2496
    %v2621 = vsub.f32 1.0, %v2497
    %v2622 = vmul.f32 %v2618, %v2442
    %v2623 = vmul.f32 %v2619, %v2443
    %v2624 = vmul.f32 %v2620, %v2444
    %v2625 = vmul.f32 %v2621, %v2445
    %v2626 = vadd.f32 %v2614, %v2622
    %v2627 = vadd.f32 %v2615, %v2623
    %v2628 = vadd.f32 %v2616, %v2624
    %v2629 = vadd.f32 %v2617, %v2625
    %v2630 = vmul.f32 %v2494, %v2442
    %v2631 = vmul.f32 %v2495, %v2443
    %v2632 = vmul.f32 %v2496, %v2444
    %v2633 = vmul.f32 %v2497, %v2445
    %v2634 = vsub.f32 1.0, %v2498
    %v2635 = vsub.f32 1.0, %v2499
    %v2636 = vsub.f32 1.0, %v2500
    %v2637 = vsub.f32 1.0, %v2501
    %v2638 = vmul.f32 %v2634, %v2458
    %v2639 = vmul.f32 %v2635, %v2459
    %v2640 = vmul.f32 %v2636, %v2460
    %v2641 = vmul.f32 %v2637, %v2461
    %v2642 = vadd.f32 %v2630, %v2638
    %v2643 = vadd.f32 %v2631, %v2639
    %v2644 = vadd.f32 %v2632, %v2640
    %v2645 = vadd.f32 %v2633, %v2641
    %v2646 = vmul.f32 %v2214, 0.8333333
    %v2647 = vmul.f32 %v2215, 0.8333333
    %v2648 = vmul.f32 %v2216, 0.8333333
    %v2649 = vmul.f32 %v2217, 0.8333333
    %v2650 = vmul.f32 %v2222, 0.8333333
    %v2651 = vmul.f32 %v2223, 0.8333333
    %v2652 = vmul.f32 %v2224, 0.8333333
    %v2653 = vmul.f32 %v2225, 0.8333333
    %v2654 = vmul.f32 %v2230, 0.8333333
    %v2655 = vmul.f32 %v2231, 0.8333333
    %v2656 = vmul.f32 %v2232, 0.8333333
    %v2657 = vmul.f32 %v2233, 0.8333333
    %v2658 = vmul.f32 %v2238, 0.8333333
    %v2659 = vmul.f32 %v2239, 0.8333333
    %v2660 = vmul.f32 %v2240, 0.8333333
    %v2661 = vmul.f32 %v2241, 0.8333333
    %v2662 = vmul.f32 %v2246, 0.8333333
    %v2663 = vmul.f32 %v2247, 0.8333333
    %v2664 = vmul.f32 %v2248, 0.8333333
    %v2665 = vmul.f32 %v2249, 0.8333333
    %v2666 = vmul.f32 %v2254, 0.8333333
    %v2667 = vmul.f32 %v2255, 0.8333333
    %v2668 = vmul.f32 %v2256, 0.8333333
    %v2669 = vmul.f32 %v2257, 0.8333333
    %v2670 = vmul.f32 %v2262, 0.8333333
    %v2671 = vmul.f32 %v2263, 0.8333333
    %v2672 = vmul.f32 %v2264, 0.8333333
    %v2673 = vmul.f32 %v2265, 0.8333333
    %v2674 = vmul.f32 %v2270, 0.8333333
    %v2675 = vmul.f32 %v2271, 0.8333333
    %v2676 = vmul.f32 %v2272, 0.8333333
    %v2677 = vmul.f32 %v2273, 0.8333333
    %v2678 = vmul.f32 %v2278, 0.8333333
    %v2679 = vmul.f32 %v2279, 0.8333333
    %v2680 = vmul.f32 %v2280, 0.8333333
    %v2681 = vmul.f32 %v2281, 0.8333333
    %v2682 = vmul.f32 %v2646, %v2514
    %v2683 = vmul.f32 %v2647, %v2515
    %v2684 = vmul.f32 %v2648, %v2516
    %v2685 = vmul.f32 %v2649, %v2517
    %v2686 = vsub.f32 1.0, %v2650
    %v2687 = vsub.f32 1.0, %v2651
    %v2688 = vsub.f32 1.0, %v2652
    %v2689 = vsub.f32 1.0, %v2653
    %v2690 = vmul.f32 %v2686, %v2530
    %v2691 = vmul.f32 %v2687, %v2531
    %v2692 = vmul.f32 %v2688, %v2532
    %v2693 = vmul.f32 %v2689, %v2533
    %v2694 = vadd.f32 %v2682, %v2690
    %v2695 = vadd.f32 %v2683, %v2691
    %v2696 = vadd.f32 %v2684, %v2692
    %v2697 = vadd.f32 %v2685, %v2693
    %v2698 = vmul.f32 %v2650, %v2530
    %v2699 = vmul.f32 %v2651, %v2531
    %v2700 = vmul.f32 %v2652, %v2532
    %v2701 = vmul.f32 %v2653, %v2533
    %v2702 = vsub.f32 1.0, %v2654
    %v2703 = vsub.f32 1.0, %v2655
    %v2704 = vsub.f32 1.0, %v2656
    %v2705 = vsub.f32 1.0, %v2657
    %v2706 = vmul.f32 %v2702, %v2546
    %v2707 = vmul.f32 %v2703, %v2547
    %v2708 = vmul.f32 %v2704, %v2548
    %v2709 = vmul.f32 %v2705, %v2549
    %v2710 = vadd.f32 %v2698, %v2706
    %v2711 = vadd.f32 %v2699, %v2707
    %v2712 = vadd.f32 %v2700, %v2708
    %v2713 = vadd.f32 %v2701, %v2709
    %v2714 = vmul.f32 %v2654, %v2546
    %v2715 = vmul.f32 %v2655, %v2547
    %v2716 = vmul.f32 %v2656, %v2548
    %v2717 = vmul.f32 %v2657, %v2549
    %v2718 = vsub.f32 1.0, %v2658
    %v2719 = vsub.f32 1.0, %v2659
    %v2720 = vsub.f32 1.0, %v2660
    %v2721 = vsub.f32 1.0, %v2661
    %v2722 = vmul.f32 %v2718, %v2562
    %v2723 = vmul.f32 %v2719, %v2563
    %v2724 = vmul.f32 %v2720, %v2564
    %v2725 = vmul.f32 %v2721, %v2565
    %v2726 = vadd.f32 %v2714, %v2722
    %v2727 = vadd.f32 %v2715, %v2723
    %v2728 = vadd.f32 %v2716, %v2724
    %v2729 = vadd.f32 %v2717, %v2725
    %v2730 = vmul.f32 %v2658, %v2562
    %v2731 = vmul.f32 %v2659, %v2563
    %v2732 = vmul.f32 %v2660, %v2564
    %v2733 = vmul.f32 %v2661, %v2565
    %v2734 = vsub.f32 1.0, %v2662
    %v2735 = vsub.f32 1.0, %v2663
    %v2736 = vsub.f32 1.0, %v2664
    %v2737 = vsub.f32 1.0, %v2665
    %v2738 = vmul.f32 %v2734, %v2578
    %v2739 = vmul.f32 %v2735, %v2579
    %v2740 = vmul.f32 %v2736, %v2580
    %v2741 = vmul.f32 %v2737, %v2581
    %v2742 = vadd.f32 %v2730, %v2738
    %v2743 = vadd.f32 %v2731, %v2739
    %v2744 = vadd.f32 %v2732, %v2740
    %v2745 = vadd.f32 %v2733, %v2741
    %v2746 = vmul.f32 %v2662, %v2578
    %v2747 = vmul.f32 %v2663, %v2579
    %v2748 = vmul.f32 %v2664, %v2580
    %v2749 = vmul.f32 %v2665, %v2581
    %v2750 = vsub.f32 1.0, %v2666
    %v2751 = vsub.f32 1.0, %v2667
    %v2752 = vsub.f32 1.0, %v2668
    %v2753 = vsub.f32 1.0, %v2669
    %v2754 = vmul.f32 %v2750, %v2594
    %v2755 = vmul.f32 %v2751, %v2595
    %v2756 = vmul.f32 %v2752, %v2596
    %v2757 = vmul.f32 %v2753, %v2597
    %v2758 = vadd.f32 %v2746, %v2754
    %v2759 = vadd.f32 %v2747, %v2755
    %v2760 = vadd.f32 %v2748, %v2756
    %v2761 = vadd.f32 %v2749, %v2757
    %v2762 = vmul.f32 %v2666, %v2594
    %v2763 = vmul.f32 %v2667, %v2595
    %v2764 = vmul.f32 %v2668, %v2596
    %v2765 = vmul.f32 %v2669, %v2597
    %v2766 = vsub.f32 1.0, %v2670
    %v2767 = vsub.f32 1.0, %v2671
    %v2768 = vsub.f32 1.0, %v2672
    %v2769 = vsub.f32 1.0, %v2673
    %v2770 = vmul.f32 %v2766, %v2610
    %v2771 = vmul.f32 %v2767, %v2611
    %v2772 = vmul.f32 %v2768, %v2612
    %v2773 = vmul.f32 %v2769, %v2613
    %v2774 = vadd.f32 %v2762, %v2770
    %v2775 = vadd.f32 %v2763, %v2771
    %v2776 = vadd.f32 %v2764, %v2772
    %v2777 = vadd.f32 %v2765, %v2773
    %v2778 = vmul.f32 %v2670, %v2610
    %v2779 = vmul.f32 %v2671, %v2611
    %v2780 = vmul.f32 %v2672, %v2612
    %v2781 = vmul.f32 %v2673, %v2613
    %v2782 = vsub.f32 1.0, %v2674
    %v2783 = vsub.f32 1.0, %v2675
    %v2784 = vsub.f32 1.0, %v2676
    %v2785 = vsub.f32 1.0, %v2677
    %v2786 = vmul.f32 %v2782, %v2626
    %v2787 = vmul.f32 %v2783, %v2627
    %v2788 = vmul.f32 %v2784, %v2628
    %v2789 = vmul.f32 %v2785, %v2629
    %v2790 = vadd.f32 %v2778, %v2786
    %v2791 = vadd.f32 %v2779, %v2787
    %v2792 = vadd.f32 %v2780, %v2788
    %v2793 = vadd.f32 %v2781, %v2789
    %v2794 = vmul.f32 %v2674, %v2626
    %v2795 = vmul.f32 %v2675, %v2627
    %v2796 = vmul.f32 %v2676, %v2628
    %v2797 = vmul.f32 %v2677, %v2629
    %v2798 = vsub.f32 1.0, %v2678
    %v2799 = vsub.f32 1.0, %v2679
    %v2800 = vsub.f32 1.0, %v2680
    %v2801 = vsub.f32 1.0, %v2681
    %v2802 = vmul.f32 %v2798, %v2642
    %v2803 = vmul.f32 %v2799, %v2643
    %v2804 = vmul.f32 %v2800, %v2644
    %v2805 = vmul.f32 %v2801, %v2645
    %v2806 = vadd.f32 %v2794, %v2802
    %v2807 = vadd.f32 %v2795, %v2803
    %v2808 = vadd.f32 %v2796, %v2804
    %v2809 = vadd.f32 %v2797, %v2805
    %2810 = vst [vmem:[#allocation2 + $0x20] sm:$0xff] %v2694
    %2811 = vst [vmem:[#allocation2 + $0x28] sm:$0xff] %v2695
    %2812 = vst [vmem:[#allocation2 + $0x30] sm:$0xff] %v2696
    %2813 = vst [vmem:[#allocation2 + $0x38] sm:$0xff] %v2697
    %2814 = vst [vmem:[#allocation2 + $0x40] sm:$0xff] %v2710
    %2815 = vst [vmem:[#allocation2 + $0x48] sm:$0xff] %v2711
    %2816 = vst [vmem:[#allocation2 + $0x50] sm:$0xff] %v2712
    %2817 = vst [vmem:[#allocation2 + $0x58] sm:$0xff] %v2713
    %2818 = vst [vmem:[#allocation2 + $0x60] sm:$0xff] %v2726
    %2819 = vst [vmem:[#allocation2 + $0x68] sm:$0xff] %v2727
    %2820 = vst [vmem:[#allocation2 + $0x70] sm:$0xff] %v2728
    %2821 = vst [vmem:[#allocation2 + $0x78] sm:$0xff] %v2729
    %2822 = vst [vmem:[#allocation2 + $0x80] sm:$0xff] %v2742
    %2823 = vst [vmem:[#allocation2 + $0x88] sm:$0xff] %v2743
    %2824 = vst [vmem:[#allocation2 + $0x90] sm:$0xff] %v2744
    %2825 = vst [vmem:[#allocation2 + $0x98] sm:$0xff] %v2745
    %2826 = vst [vmem:[#allocation2 + $0xa0] sm:$0xff] %v2758
    %2827 = vst [vmem:[#allocation2 + $0xa8] sm:$0xff] %v2759
    %2828 = vst [vmem:[#allocation2 + $0xb0] sm:$0xff] %v2760
    %2829 = vst [vmem:[#allocation2 + $0xb8] sm:$0xff] %v2761
    %2830 = vst [vmem:[#allocation2 + $0xc0] sm:$0xff] %v2774
    %2831 = vst [vmem:[#allocation2 + $0xc8] sm:$0xff] %v2775
    %2832 = vst [vmem:[#allocation2 + $0xd0] sm:$0xff] %v2776
    %2833 = vst [vmem:[#allocation2 + $0xd8] sm:$0xff] %v2777
    %2834 = vst [vmem:[#allocation2 + $0xe0] sm:$0xff] %v2790
    %2835 = vst [vmem:[#allocation2 + $0xe8] sm:$0xff] %v2791
    %2836 = vst [vmem:[#allocation2 + $0xf0] sm:$0xff] %v2792
    %2837 = vst [vmem:[#allocation2 + $0xf8] sm:$0xff] %v2793
    %2838 = vst [vmem:[#allocation2 + $0x100] sm:$0xff] %v2806
    %2839 = vst [vmem:[#allocation2 + $0x108] sm:$0xff] %v2807
    %2840 = vst [vmem:[#allocation2 + $0x110] sm:$0xff] %v2808
    %2841 = vst [vmem:[#allocation2 + $0x118] sm:$0xff] %v2809
    %v2842 = vld [vmem:[%s4] sm:$0x77]
    %v2843 = vld [vmem:[%s4 + $0x8] sm:$0x7]
    %v2844 = vld [vmem:[#allocation2] sm:$0xff]
    %v2845 = vld [vmem:[#allocation2 + $0x8] sm:$0xff]
    %v2846 = vld [vmem:[#allocation2 + $0x10] sm:$0xff]
    %v2847 = vld [vmem:[#allocation2 + $0x18] sm:$0xff]
    %v2848 = vld [vmem:[#allocation2 + $0x20] sm:$0xff]
    %v2849 = vld [vmem:[#allocation2 + $0x28] sm:$0xff]
    %v2850 = vld [vmem:[#allocation2 + $0x30] sm:$0xff]
    %v2851 = vld [vmem:[#allocation2 + $0x38] sm:$0xff]
    %v2852 = vld [vmem:[#allocation2 + $0x40] sm:$0xff]
    %v2853 = vld [vmem:[#allocation2 + $0x48] sm:$0xff]
    %v2854 = vld [vmem:[#allocation2 + $0x50] sm:$0xff]
    %v2855 = vld [vmem:[#allocation2 + $0x58] sm:$0xff]
    %v2856 = vld [vmem:[#allocation2 + $0x60] sm:$0xff]
    %v2857 = vld [vmem:[#allocation2 + $0x68] sm:$0xff]
    %v2858 = vld [vmem:[#allocation2 + $0x70] sm:$0xff]
    %v2859 = vld [vmem:[#allocation2 + $0x78] sm:$0xff]
    %v2860 = vld [vmem:[#allocation2 + $0x80] sm:$0xff]
    %v2861 = vld [vmem:[#allocation2 + $0x88] sm:$0xff]
    %v2862 = vld [vmem:[#allocation2 + $0x90] sm:$0xff]
    %v2863 = vld [vmem:[#allocation2 + $0x98] sm:$0xff]
    %v2864 = vld [vmem:[#allocation2 + $0xa0] sm:$0xff]
    %v2865 = vld [vmem:[#allocation2 + $0xa8] sm:$0xff]
    %v2866 = vld [vmem:[#allocation2 + $0xb0] sm:$0xff]
    %v2867 = vld [vmem:[#allocation2 + $0xb8] sm:$0xff]
    %v2868 = vld [vmem:[#allocation2 + $0xc0] sm:$0xff]
    %v2869 = vld [vmem:[#allocation2 + $0xc8] sm:$0xff]
    %v2870 = vld [vmem:[#allocation2 + $0xd0] sm:$0xff]
    %v2871 = vld [vmem:[#allocation2 + $0xd8] sm:$0xff]
    %v2872 = vld [vmem:[#allocation2 + $0xe0] sm:$0xff]
    %v2873 = vld [vmem:[#allocation2 + $0xe8] sm:$0xff]
    %v2874 = vld [vmem:[#allocation2 + $0xf0] sm:$0xff]
    %v2875 = vld [vmem:[#allocation2 + $0xf8] sm:$0xff]
    %v2876 = vld [vmem:[#allocation2 + $0x100] sm:$0xff]
    %v2877 = vld [vmem:[#allocation2 + $0x108] sm:$0xff]
    %v2878 = vld [vmem:[#allocation2 + $0x110] sm:$0xff]
    %v2879 = vld [vmem:[#allocation2 + $0x118] sm:$0xff]
    %v2882 = vcombine.high %v2842, %v2842
    %v2884 = vsel %vm1811, %v2843, 0
    %2886 = vmatprep.subr.mxu0 0.0
    %2887 = vmatpush1.msra.mxu0 %v2844
    %2888 = vmatprep.subr.mxu0 0.0
    %2889 = vmatpush1.msra.mxu0 %v2845
    %2890 = vmatprep.subr.mxu0 0.0
    %2891 = vmatpush1.msra.mxu0 %v2846
    %2892 = vmatprep.subr.mxu0 0.0
    %2893 = vmatpush1.msra.mxu0 %v2847
    %2894 = vmatprep.subr.mxu0 0.0
    %2895 = vmatpush1.msra.mxu0 %v2848
    %2896 = vmatprep.subr.mxu0 0.0
    %2897 = vmatpush1.msra.mxu0 %v2849
    %2898 = vmatprep.subr.mxu0 0.0
    %2899 = vmatpush1.msra.mxu0 %v2850
    %2900 = vmatprep.subr.mxu0 0.0
    %2901 = vmatpush1.msra.mxu0 %v2851
    %2902 = vmatprep.subr.mxu0 0.0
    %2903 = vmatpush1.msra.mxu0 %v2852
    %2904 = vmatprep.subr.mxu0 0.0
    %2905 = vmatpush1.msra.mxu0 %v2853
    %2906 = vmatprep.subr.mxu0 0.0
    %2907 = vmatpush1.msra.mxu0 %v2854
    %2908 = vmatprep.subr.mxu0 0.0
    %2909 = vmatpush1.msra.mxu0 %v2855
    %2910 = vmatprep.subr.mxu0 0.0
    %2911 = vmatpush1.msra.mxu0 %v2856
    %2912 = vmatprep.subr.mxu0 0.0
    %2913 = vmatpush1.msra.mxu0 %v2857
    %2914 = vmatprep.subr.mxu0 0.0
    %2915 = vmatpush1.msra.mxu0 %v2858
    %2916 = vmatprep.subr.mxu0 0.0
    %2917 = vmatpush1.msra.mxu0 %v2859
    %2918 = vmatprep.subr.mxu0 0.0
    %2919 = vmatpush1.msra.mxu0 %v2860
    %2920 = vmatprep.subr.mxu0 0.0
    %2921 = vmatpush1.msra.mxu0 %v2861
    %2922 = vmatprep.subr.mxu0 0.0
    %2923 = vmatpush1.msra.mxu0 %v2862
    %2924 = vmatprep.subr.mxu0 0.0
    %2925 = vmatpush1.msra.mxu0 %v2863
    %2926 = vmatprep.subr.mxu0 0.0
    %2927 = vmatpush1.msra.mxu0 %v2864
    %2928 = vmatprep.subr.mxu0 0.0
    %2929 = vmatpush1.msra.mxu0 %v2865
    %2930 = vmatprep.subr.mxu0 0.0
    %2931 = vmatpush1.msra.mxu0 %v2866
    %2932 = vmatprep.subr.mxu0 0.0
    %2933 = vmatpush1.msra.mxu0 %v2867
    %2934 = vmatprep.subr.mxu0 0.0
    %2935 = vmatpush1.msra.mxu0 %v2868
    %2936 = vmatprep.subr.mxu0 0.0
    %2937 = vmatpush1.msra.mxu0 %v2869
    %2938 = vmatprep.subr.mxu0 0.0
    %2939 = vmatpush1.msra.mxu0 %v2870
    %2940 = vmatprep.subr.mxu0 0.0
    %2941 = vmatpush1.msra.mxu0 %v2871
    %2942 = vmatprep.subr.mxu0 0.0
    %2943 = vmatpush1.msra.mxu0 %v2872
    %2944 = vmatprep.subr.mxu0 0.0
    %2945 = vmatpush1.msra.mxu0 %v2873
    %2946 = vmatprep.subr.mxu0 0.0
    %2947 = vmatpush1.msra.mxu0 %v2874
    %2948 = vmatprep.subr.mxu0 0.0
    %2949 = vmatpush1.msra.mxu0 %v2875
    %2950 = vmatprep.mubr.f32.mxu0 %v2882
    %2951 = vmatmul.mubr.f32.gmra.mrb[0].mxu0 %v2842
    %v2952 = vpop.f32.mrb[0].mxu0
    %v2953 = vadd.f32 0.0, %v2952
    %v2954 = vpop.f32.mrb[0].mxu0
    %2955 = vdwg.mxu0
    %2956 = vmatprep.subr.mxu0 0.0
    %2957 = vmatpush1.msra.mxu0 %v2876
    %2958 = vmatprep.subr.mxu0 0.0
    %2959 = vmatpush1.msra.mxu0 %v2877
    %2960 = vmatprep.subr.mxu0 0.0
    %2961 = vmatpush1.msra.mxu0 %v2878
    %2962 = vmatprep.subr.mxu0 0.0
    %2963 = vmatpush1.msra.mxu0 %v2879
    %2964 = vmatprep.subr.mxu0 0.0
    %2965 = vmatpush1.msra.mxu0 0.0
    %2966 = vmatprep.subr.mxu0 0.0
    %2967 = vmatpush1.msra.mxu0 0.0
    %2968 = vmatprep.subr.mxu0 0.0
    %2969 = vmatpush1.msra.mxu0 0.0
    %2970 = vmatprep.subr.mxu0 0.0
    %2971 = vmatpush1.msra.mxu0 0.0
    %2972 = vmatprep.subr.mxu0 0.0
    %2973 = vmatpush1.msra.mxu0 0.0
    %2974 = vmatprep.subr.mxu0 0.0
    %2975 = vmatpush1.msra.mxu0 0.0
    %2976 = vmatprep.subr.mxu0 0.0
    %2977 = vmatpush1.msra.mxu0 0.0
    %2978 = vmatprep.subr.mxu0 0.0
    %2979 = vmatpush1.msra.mxu0 0.0
    %2980 = vmatprep.subr.mxu0 0.0
    %2981 = vmatpush1.msra.mxu0 0.0
    %2982 = vmatprep.subr.mxu0 0.0
    %2983 = vmatpush1.msra.mxu0 0.0
    %2984 = vmatprep.subr.mxu0 0.0
    %2985 = vmatpush1.msra.mxu0 0.0
    %2986 = vmatprep.subr.mxu0 0.0
    %2987 = vmatpush1.msra.mxu0 0.0
    %2988 = vmatprep.subr.mxu0 0.0
    %2989 = vmatpush1.msra.mxu0 0.0
    %2990 = vmatprep.subr.mxu0 0.0
    %2991 = vmatpush1.msra.mxu0 0.0
    %2992 = vmatprep.subr.mxu0 0.0
    %2993 = vmatpush1.msra.mxu0 0.0
    %2994 = vmatprep.subr.mxu0 0.0
    %2995 = vmatpush1.msra.mxu0 0.0
    %2996 = vmatprep.subr.mxu0 0.0
    %2997 = vmatpush1.msra.mxu0 0.0
    %2998 = vmatprep.subr.mxu0 0.0
    %2999 = vmatpush1.msra.mxu0 0.0
    %3000 = vmatprep.subr.mxu0 0.0
    %3001 = vmatpush1.msra.mxu0 0.0
    %3002 = vmatprep.subr.mxu0 0.0
    %3003 = vmatpush1.msra.mxu0 0.0
    %3004 = vmatprep.subr.mxu0 0.0
    %3005 = vmatpush1.msra.mxu0 0.0
    %3006 = vmatprep.subr.mxu0 0.0
    %3007 = vmatpush1.msra.mxu0 0.0
    %3008 = vmatprep.subr.mxu0 0.0
    %3009 = vmatpush1.msra.mxu0 0.0
    %3010 = vmatprep.subr.mxu0 0.0
    %3011 = vmatpush1.msra.mxu0 0.0
    %3012 = vmatprep.subr.mxu0 0.0
    %3013 = vmatpush1.msra.mxu0 0.0
    %3014 = vmatprep.subr.mxu0 0.0
    %3015 = vmatpush1.msra.mxu0 0.0
    %3016 = vmatprep.subr.mxu0 0.0
    %3017 = vmatpush1.msra.mxu0 0.0
    %3018 = vmatprep.subr.mxu0 0.0
    %3019 = vmatpush1.msra.mxu0 0.0
    %3020 = vmatprep.mubr.f32.mxu0 0.0
    %3021 = vmatmul.mubr.f32.gmra.mrb[0].mxu0 %v2884
    %v3022 = vpop.f32.mrb[0].mxu0
    %v3023 = vadd.f32 %v2953, %v3022
    %v3024 = vpop.f32.mrb[0].mxu0
    %3025 = vdwg.mxu0
    %3026 = vst [vmem:[%s5] sm:$0x7] %v3023
    // Predicated region
    $region34: #{kan_actor_critic_forward.1} parent=1 // pred_check
      _
    $region35: #{kan_actor_critic_forward.1} parent=1 // pred_check_branch
      %3028 = sbr.rel (0) target = $region37
    $region36: #{kan_actor_critic_forward.1} parent=1 // pred_region
      _
    $region37: #{kan_actor_critic_forward.1} parent=1 // pred_fallthru
      _
    // Predicated region
    $region38: #{kan_actor_critic_forward.1} parent=1 // pred_check
      _
    $region39: #{kan_actor_critic_forward.1} parent=1 // pred_check_branch
      %3030 = sbr.rel (0) target = $region41
    $region40: #{kan_actor_critic_forward.1} parent=1 // pred_region
      _
    $region41: #{kan_actor_critic_forward.1} parent=1 // pred_fallthru
      _
    %3031 = vsyncpa [#allocation4], 1
    %3032 = vsyncpa [#allocation6], 1

</llo_original>
